<compile_context>
chip_gen: v5e
topology: v5e:2x2
jax: 0.10.0
libtpu: 0.0.40
codegen_flags: <defaults>
</compile_context>

<pallas_src>
import functools
import numpy as np
import jax
import jax.numpy as jnp
from jax import lax
from jax.experimental import pallas as pl
from jax.experimental.pallas import tpu as pltpu

INPUT_SIZE = 75          # 25 joints * 3 coords
HIDDEN = 128
NUM_LAYERS = 2
NUM_CLASSES = 3


def _lstm_kernel(x_ref, w_ih0_ref, w_hh0_ref, b0_ref,
                 w_ih1_ref, w_hh1_ref, b1_ref, fc_w_ref, fc_b_ref,
                 out_ref,
                 xp_ref,
                 *, seq_len, hidden, batch_pad, unroll):
    H = hidden
    B_pad = batch_pad
    mm_dtype = w_hh0_ref.dtype  # matmul operand dtype (bf16 by default, f32 optional)

    # ---- Phase 1: hoisted layer-0 input projection for ALL timesteps at once ----
    # (T*B_pad, IN_pad) @ (IN_pad, 4H) -> full-M MXU matmul, off the recurrent critical path.
    xp_ref[...] = (jnp.dot(x_ref[...], w_ih0_ref[...],
                           preferred_element_type=jnp.float32) + b0_ref[...])

    # Layer-1 bias pre-broadcast to (B_pad, 4H) in the wrapper; load once.
    b1v = b1_ref[...]

    def sig(x):
        # sigmoid as a single EUP tanh (no divide on the serial per-step chain)
        return 0.5 * jnp.tanh(0.5 * x) + 0.5

    def gates_to_hc(g, c_prev):
        # PyTorch gate order along the 4H axis: [i, f, g, o]
        i = sig(g[:, 0 * H:1 * H])
        f = sig(g[:, 1 * H:2 * H])
        gg = jnp.tanh(g[:, 2 * H:3 * H])
        o = sig(g[:, 3 * H:4 * H])
        c_new = f * c_prev + i * gg
        h_new = o * jnp.tanh(c_new)
        return h_new, c_new

    # TODO(synk): if the bundle dump shows the loop re-pushing w_hh0/w_ih1/w_hh1 into the MXU
    #   every iteration, pin the loop-invariant RHS across the T loop with
    #   pltpu.matmul_push_rhs / matmul_acc_lhs / matmul_pop.
    def step(t, carry):
        h0, c0, h1, c1 = carry
        # Both recurrent dots depend only on previous-step state: issue them first so they
        # overlap with the layer-0 gate nonlinearities on the EUP.
        r1 = jnp.dot(h1.astype(mm_dtype), w_hh1_ref[...],
                     preferred_element_type=jnp.float32)
        r0 = jnp.dot(h0.astype(mm_dtype), w_hh0_ref[...],
                     preferred_element_type=jnp.float32)
        off = pl.multiple_of(t * B_pad, B_pad)
        g0 = xp_ref[pl.ds(off, B_pad), :] + r0
        h0n, c0n = gates_to_hc(g0, c0)
        # layer 1: K=128 dot on the fresh h0n plus the already-issued r1
        g1 = (jnp.dot(h0n.astype(mm_dtype), w_ih1_ref[...],
                      preferred_element_type=jnp.float32) + r1 + b1v)
        h1n, c1n = gates_to_hc(g1, c1)
        return (h0n, c0n, h1n, c1n)

    # ---- Phase 2: recurrence; h/c carried as vreg values (no VMEM round-trips) ----
    zeros = jnp.zeros((B_pad, H), jnp.float32)
    _, _, h1, _ = lax.fori_loop(0, seq_len, step, (zeros, zeros, zeros, zeros),
                                unroll=unroll)

    # fc on the last timestep's layer-2 hidden state.
    out_ref[...] = (jnp.dot(h1.astype(fc_w_ref.dtype), fc_w_ref[...],
                            preferred_element_type=jnp.float32) + fc_b_ref[...])


def init_params(key):
    """Deterministic params in PyTorch layout: weight_* (4H, in), bias_* (4H,)."""
    k = 1.0 / np.sqrt(HIDDEN)
    keys = jax.random.split(key, 10)
    u = lambda kk, shape: jax.random.uniform(kk, shape, jnp.float32, -k, k)
    return {
        "weight_ih_l0": u(keys[0], (4 * HIDDEN, INPUT_SIZE)),
        "weight_hh_l0": u(keys[1], (4 * HIDDEN, HIDDEN)),
        "bias_ih_l0":   u(keys[2], (4 * HIDDEN,)),
        "bias_hh_l0":   u(keys[3], (4 * HIDDEN,)),
        "weight_ih_l1": u(keys[4], (4 * HIDDEN, HIDDEN)),
        "weight_hh_l1": u(keys[5], (4 * HIDDEN, HIDDEN)),
        "bias_ih_l1":   u(keys[6], (4 * HIDDEN,)),
        "bias_hh_l1":   u(keys[7], (4 * HIDDEN,)),
        "fc_weight":    u(keys[8], (NUM_CLASSES, HIDDEN)),
        "fc_bias":      u(keys[9], (NUM_CLASSES,)),
    }


def skeleton_lstm_forward(x, params, matmul_dtype=jnp.bfloat16):
    """x: (batch, seq_len, joints, coords) float32 -> (batch, num_classes) float32.

    matmul_dtype: dtype of MXU operands (weights / x / h). Accumulation and gate math
    stay float32. Use jnp.float32 for bit-tight comparison against the reference.
    """
    B, T, J, C = x.shape
    feat = J * C
    assert feat == INPUT_SIZE
    x2 = x.reshape(B, T, feat).astype(jnp.float32)

    B_pad = max(8, ((B + 7) // 8) * 8)   # sublane multiple; fills MXU rows if batch > 8
    IN_pad = 128
    C_pad = 128
    G = 4 * HIDDEN
    mmdt = jnp.dtype(matmul_dtype)

    # time-major, zero-padded input, pre-flattened to (T*B_pad, IN_pad) for the hoisted matmul
    x_tm = jnp.transpose(x2, (1, 0, 2))                       # (T, B, feat)
    x_pad = jnp.zeros((T, B_pad, IN_pad), mmdt)
    x_pad = x_pad.at[:, :B, :feat].set(x_tm.astype(mmdt))
    x_flat = x_pad.reshape(T * B_pad, IN_pad)
    # TODO(synk): for long T, DMA the unpadded (T, B, 75) input and pad to 128 lanes inside a
    #   T-chunked pipeline instead of materializing this padded HBM copy in the wrapper.

    # layer 0 weights pre-transposed to (in, out); b0 = b_ih + b_hh (identical math)
    w_ih0 = jnp.zeros((IN_pad, G), jnp.float32)
    w_ih0 = w_ih0.at[:feat, :].set(params["weight_ih_l0"].T)
    w_ih0 = w_ih0.astype(mmdt)
    w_hh0 = params["weight_hh_l0"].T.astype(mmdt)
    b0 = (params["bias_ih_l0"] + params["bias_hh_l0"]).reshape(1, G)      # f32

    # layer 1: two separate K=128 weights (un-fused); bias pre-broadcast once
    w_ih1 = params["weight_ih_l1"].T.astype(mmdt)
    w_hh1 = params["weight_hh_l1"].T.astype(mmdt)
    b1 = jnp.tile((params["bias_ih_l1"] + params["bias_hh_l1"]).reshape(1, G),
                  (B_pad, 1))                                             # f32

    fc_w = jnp.zeros((HIDDEN, C_pad), jnp.float32)
    fc_w = fc_w.at[:, :NUM_CLASSES].set(params["fc_weight"].T)
    fc_w = fc_w.astype(mmdt)
    fc_b = jnp.zeros((1, C_pad), jnp.float32)
    fc_b = fc_b.at[:, :NUM_CLASSES].set(params["fc_bias"].reshape(1, -1))

    # short loops fully unrolled; longer loops unrolled x8 (live state is tiny -> no spills,
    # lets LLO overlap layer-1(t) with layer-0(t+1)).
    unroll = T if T <= 8 else 8

    # VMEM residency: x + xp scratch + weights/biases + output. Size the scoped limit to that
    # (raises v5e's 16 MiB default), capped at v7x's 64 MiB physical VMEM.
    vmem_needed = (T * B_pad * IN_pad * mmdt.itemsize                     # x
                   + T * B_pad * G * 4                                    # xp scratch (f32)
                   + (IN_pad * G + 3 * HIDDEN * G + HIDDEN * C_pad) * mmdt.itemsize
                   + (G + B_pad * G + C_pad) * 4                          # biases
                   + B_pad * C_pad * 4)                                   # output
    vmem_limit = min(64 << 20, max(32 << 20, int(1.25 * vmem_needed) + (2 << 20)))
    # TODO(synk): when vmem_needed approaches the cap (very long T), switch to T-chunk streaming
    #   (grid axis over T-chunks or pltpu.emit_pipeline) with h/c carried in persistent scratch
    #   instead of whole-sequence VMEM residency.
    # TODO(synk): for real batches >> 8, add a batch-block grid axis with
    #   dimension_semantics=("parallel",) so v7x's second TensorCore takes half the batch.

    kernel = functools.partial(_lstm_kernel, seq_len=T, hidden=HIDDEN,
                               batch_pad=B_pad, unroll=unroll)
    vmem = pl.BlockSpec(memory_space=pltpu.MemorySpace.VMEM)
    out_pad = pl.pallas_call(
        kernel,
        out_shape=jax.ShapeDtypeStruct((B_pad, C_pad), jnp.float32),
        in_specs=[vmem] * 9,
        out_specs=vmem,
        scratch_shapes=[pltpu.VMEM((T * B_pad, G), jnp.float32)],
        compiler_params=pltpu.CompilerParams(vmem_limit_bytes=vmem_limit),
    )(x_flat, w_ih0, w_hh0, b0, w_ih1, w_hh1, b1, fc_w, fc_b)

    return out_pad[:B, :NUM_CLASSES]


def skeleton_lstm_ref(x, params):
    """Pure-JAX reference matching torch.nn.LSTM (batch_first, 2 layers) + Linear."""
    B, T, J, C = x.shape
    xs = x.reshape(B, T, J * C).astype(jnp.float32)

    def cell(x_t, h, c, w_ih, w_hh, b_ih, b_hh):
        gates = x_t @ w_ih.T + b_ih + h @ w_hh.T + b_hh
        i, f, g, o = jnp.split(gates, 4, axis=-1)
        i, f, o = jax.nn.sigmoid(i), jax.nn.sigmoid(f), jax.nn.sigmoid(o)
        g = jnp.tanh(g)
        c_new = f * c + i * g
        h_new = o * jnp.tanh(c_new)
        return h_new, c_new

    h0 = jnp.zeros((B, HIDDEN), jnp.float32)
    c0 = jnp.zeros((B, HIDDEN), jnp.float32)
    h1 = jnp.zeros((B, HIDDEN), jnp.float32)
    c1 = jnp.zeros((B, HIDDEN), jnp.float32)
    for t in range(T):
        h0, c0 = cell(xs[:, t], h0, c0,
                      params["weight_ih_l0"], params["weight_hh_l0"],
                      params["bias_ih_l0"], params["bias_hh_l0"])
        h1, c1 = cell(h0, h1, c1,
                      params["weight_ih_l1"], params["weight_hh_l1"],
                      params["bias_ih_l1"], params["bias_hh_l1"])
    return h1 @ params["fc_weight"].T + params["fc_bias"]


if __name__ == "__main__":
    key = jax.random.PRNGKey(0)
    x = jax.random.normal(key, (2, 8, 25, 3), jnp.float32)   # (B, T, joints, coords)
    params = init_params(jax.random.PRNGKey(1))

    ref = skeleton_lstm_ref(x, params)

    # f32 MXU-operand path: tight check of the kernel structure / math.
    out_f32 = jax.block_until_ready(
        skeleton_lstm_forward(x, params, matmul_dtype=jnp.float32))
    np.testing.assert_allclose(np.asarray(out_f32), np.asarray(ref),
                               rtol=1e-3, atol=1e-3)

    # Default bf16 MXU-operand path (perf config); accumulation & gate math stay f32.
    out_bf16 = jax.block_until_ready(skeleton_lstm_forward(x, params))
    np.testing.assert_allclose(np.asarray(out_bf16), np.asarray(ref),
                               rtol=5e-2, atol=5e-2)

    print("KERNEL_OK")
</pallas_src>

<mosaic_0001>
module attributes {stable_mosaic.version = 11 : i64} {
  func.func @_lstm_kernel(%arg0: memref<64x128xf32, #tpu.memory_space<vmem>>, %arg1: memref<128x512xf32, #tpu.memory_space<vmem>>, %arg2: memref<128x512xf32, #tpu.memory_space<vmem>>, %arg3: memref<1x512xf32, #tpu.memory_space<vmem>>, %arg4: memref<128x512xf32, #tpu.memory_space<vmem>>, %arg5: memref<128x512xf32, #tpu.memory_space<vmem>>, %arg6: memref<8x512xf32, #tpu.memory_space<vmem>>, %arg7: memref<128x128xf32, #tpu.memory_space<vmem>>, %arg8: memref<1x128xf32, #tpu.memory_space<vmem>>, %arg9: memref<8x128xf32, #tpu.memory_space<vmem>>, %arg10: memref<64x512xf32, #tpu.memory_space<vmem>>) attributes {dimension_semantics = [], scalar_prefetch = 0 : i64, scratch_operands = 1 : i64, tpu.core_type = #tpu.core_type<tc>} {
    %c0 = arith.constant 0 : index
    %c0_0 = arith.constant 0 : index
    %0 = vector.load %arg0[%c0, %c0_0] : memref<64x128xf32, #tpu.memory_space<vmem>>, vector<64x128xf32>
    %c0_1 = arith.constant 0 : index
    %c0_2 = arith.constant 0 : index
    %1 = vector.load %arg1[%c0_1, %c0_2] : memref<128x512xf32, #tpu.memory_space<vmem>>, vector<128x512xf32>
    %cst = arith.constant dense<0.000000e+00> : vector<64x512xf32>
    %2 = tpu.matmul %0, %1, %cst {dimension_numbers = #tpu.dot_dimension_numbers<[1], [0], [0], [1], [0, 0, 1, 1], [], []>} : vector<64x128xf32>, vector<128x512xf32>, vector<64x512xf32> -> vector<64x512xf32>
    %c0_3 = arith.constant 0 : index
    %c0_4 = arith.constant 0 : index
    %3 = vector.load %arg3[%c0_3, %c0_4] : memref<1x512xf32, #tpu.memory_space<vmem>>, vector<1x512xf32>
    %4 = vector.broadcast %3 : vector<1x512xf32> to vector<64x512xf32>
    %5 = arith.addf %2, %4 : vector<64x512xf32>
    %c0_5 = arith.constant 0 : index
    %c0_6 = arith.constant 0 : index
    %6 = vector.load %arg10[%c0_5, %c0_6] : memref<64x512xf32, #tpu.memory_space<vmem>>, vector<64x512xf32>
    tpu.vector_store %arg10[%c0_5, %c0_6], %5 {strides = array<i32>} : memref<64x512xf32, #tpu.memory_space<vmem>>, vector<64x512xf32>,
    %c0_7 = arith.constant 0 : index
    %c0_8 = arith.constant 0 : index
    %7 = vector.load %arg6[%c0_7, %c0_8] : memref<8x512xf32, #tpu.memory_space<vmem>>, vector<8x512xf32>
    %cst_9 = arith.constant 0.000000e+00 : f32
    %8 = vector.broadcast %cst_9 : f32 to vector<8x128xf32>
    %c0_i32 = arith.constant 0 : i32
    %c0_10 = arith.constant 0 : index
    %c0_11 = arith.constant 0 : index
    %9 = vector.load %arg5[%c0_10, %c0_11] : memref<128x512xf32, #tpu.memory_space<vmem>>, vector<128x512xf32>
    %cst_12 = arith.constant dense<0.000000e+00> : vector<8x512xf32>
    %10 = tpu.matmul %8, %9, %cst_12 {dimension_numbers = #tpu.dot_dimension_numbers<[1], [0], [0], [1], [0, 0, 1, 1], [], []>} : vector<8x128xf32>, vector<128x512xf32>, vector<8x512xf32> -> vector<8x512xf32>
    %c0_13 = arith.constant 0 : index
    %c0_14 = arith.constant 0 : index
    %11 = vector.load %arg2[%c0_13, %c0_14] : memref<128x512xf32, #tpu.memory_space<vmem>>, vector<128x512xf32>
    %cst_15 = arith.constant dense<0.000000e+00> : vector<8x512xf32>
    %12 = tpu.matmul %8, %11, %cst_15 {dimension_numbers = #tpu.dot_dimension_numbers<[1], [0], [0], [1], [0, 0, 1, 1], [], []>} : vector<8x128xf32>, vector<128x512xf32>, vector<8x512xf32> -> vector<8x512xf32>
    %c8_i32 = arith.constant 8 : i32
    %13 = arith.muli %c0_i32, %c8_i32 : i32
    %14 = tpu.assume_multiple %13, 8 : i32
    %15 = arith.index_cast %14 : i32 to index
    %c0_16 = arith.constant 0 : index
    %16 = vector.load %arg10[%15, %c0_16] : memref<64x512xf32, #tpu.memory_space<vmem>>, vector<8x512xf32>
    %17 = arith.addf %16, %12 : vector<8x512xf32>
    %18 = vector.extract_strided_slice %17 {offsets = [0, 0], sizes = [8, 128], strides = [1, 1]} : vector<8x512xf32> to vector<8x128xf32>
    %cst_17 = arith.constant 5.000000e-01 : f32
    %19 = vector.broadcast %cst_17 : f32 to vector<8x128xf32>
    %20 = arith.mulf %19, %18 : vector<8x128xf32>
    %21 = math.tanh %20 : vector<8x128xf32>
    %cst_18 = arith.constant 5.000000e-01 : f32
    %22 = vector.broadcast %cst_18 : f32 to vector<8x128xf32>
    %23 = arith.mulf %22, %21 : vector<8x128xf32>
    %cst_19 = arith.constant 5.000000e-01 : f32
    %24 = vector.broadcast %cst_19 : f32 to vector<8x128xf32>
    %25 = arith.addf %23, %24 : vector<8x128xf32>
    %26 = vector.extract_strided_slice %17 {offsets = [0, 128], sizes = [8, 128], strides = [1, 1]} : vector<8x512xf32> to vector<8x128xf32>
    %cst_20 = arith.constant 5.000000e-01 : f32
    %27 = vector.broadcast %cst_20 : f32 to vector<8x128xf32>
    %28 = arith.mulf %27, %26 : vector<8x128xf32>
    %29 = math.tanh %28 : vector<8x128xf32>
    %cst_21 = arith.constant 5.000000e-01 : f32
    %30 = vector.broadcast %cst_21 : f32 to vector<8x128xf32>
    %31 = arith.mulf %30, %29 : vector<8x128xf32>
    %cst_22 = arith.constant 5.000000e-01 : f32
    %32 = vector.broadcast %cst_22 : f32 to vector<8x128xf32>
    %33 = arith.addf %31, %32 : vector<8x128xf32>
    %34 = vector.extract_strided_slice %17 {offsets = [0, 256], sizes = [8, 128], strides = [1, 1]} : vector<8x512xf32> to vector<8x128xf32>
    %35 = math.tanh %34 : vector<8x128xf32>
    %36 = vector.extract_strided_slice %17 {offsets = [0, 384], sizes = [8, 128], strides = [1, 1]} : vector<8x512xf32> to vector<8x128xf32>
    %cst_23 = arith.constant 5.000000e-01 : f32
    %37 = vector.broadcast %cst_23 : f32 to vector<8x128xf32>
    %38 = arith.mulf %37, %36 : vector<8x128xf32>
    %39 = math.tanh %38 : vector<8x128xf32>
    %cst_24 = arith.constant 5.000000e-01 : f32
    %40 = vector.broadcast %cst_24 : f32 to vector<8x128xf32>
    %41 = arith.mulf %40, %39 : vector<8x128xf32>
    %cst_25 = arith.constant 5.000000e-01 : f32
    %42 = vector.broadcast %cst_25 : f32 to vector<8x128xf32>
    %43 = arith.addf %41, %42 : vector<8x128xf32>
    %44 = arith.mulf %33, %8 : vector<8x128xf32>
    %45 = arith.mulf %25, %35 : vector<8x128xf32>
    %46 = arith.addf %44, %45 : vector<8x128xf32>
    %47 = math.tanh %46 : vector<8x128xf32>
    %48 = arith.mulf %43, %47 : vector<8x128xf32>
    %c0_26 = arith.constant 0 : index
    %c0_27 = arith.constant 0 : index
    %49 = vector.load %arg4[%c0_26, %c0_27] : memref<128x512xf32, #tpu.memory_space<vmem>>, vector<128x512xf32>
    %cst_28 = arith.constant dense<0.000000e+00> : vector<8x512xf32>
    %50 = tpu.matmul %48, %49, %cst_28 {dimension_numbers = #tpu.dot_dimension_numbers<[1], [0], [0], [1], [0, 0, 1, 1], [], []>} : vector<8x128xf32>, vector<128x512xf32>, vector<8x512xf32> -> vector<8x512xf32>
    %51 = arith.addf %50, %10 : vector<8x512xf32>
    %52 = arith.addf %51, %7 : vector<8x512xf32>
    %53 = vector.extract_strided_slice %52 {offsets = [0, 0], sizes = [8, 128], strides = [1, 1]} : vector<8x512xf32> to vector<8x128xf32>
    %cst_29 = arith.constant 5.000000e-01 : f32
    %54 = vector.broadcast %cst_29 : f32 to vector<8x128xf32>
    %55 = arith.mulf %54, %53 : vector<8x128xf32>
    %56 = math.tanh %55 : vector<8x128xf32>
    %cst_30 = arith.constant 5.000000e-01 : f32
    %57 = vector.broadcast %cst_30 : f32 to vector<8x128xf32>
    %58 = arith.mulf %57, %56 : vector<8x128xf32>
    %cst_31 = arith.constant 5.000000e-01 : f32
    %59 = vector.broadcast %cst_31 : f32 to vector<8x128xf32>
    %60 = arith.addf %58, %59 : vector<8x128xf32>
    %61 = vector.extract_strided_slice %52 {offsets = [0, 128], sizes = [8, 128], strides = [1, 1]} : vector<8x512xf32> to vector<8x128xf32>
    %cst_32 = arith.constant 5.000000e-01 : f32
    %62 = vector.broadcast %cst_32 : f32 to vector<8x128xf32>
    %63 = arith.mulf %62, %61 : vector<8x128xf32>
    %64 = math.tanh %63 : vector<8x128xf32>
    %cst_33 = arith.constant 5.000000e-01 : f32
    %65 = vector.broadcast %cst_33 : f32 to vector<8x128xf32>
    %66 = arith.mulf %65, %64 : vector<8x128xf32>
    %cst_34 = arith.constant 5.000000e-01 : f32
    %67 = vector.broadcast %cst_34 : f32 to vector<8x128xf32>
    %68 = arith.addf %66, %67 : vector<8x128xf32>
    %69 = vector.extract_strided_slice %52 {offsets = [0, 256], sizes = [8, 128], strides = [1, 1]} : vector<8x512xf32> to vector<8x128xf32>
    %70 = math.tanh %69 : vector<8x128xf32>
    %71 = vector.extract_strided_slice %52 {offsets = [0, 384], sizes = [8, 128], strides = [1, 1]} : vector<8x512xf32> to vector<8x128xf32>
    %cst_35 = arith.constant 5.000000e-01 : f32
    %72 = vector.broadcast %cst_35 : f32 to vector<8x128xf32>
    %73 = arith.mulf %72, %71 : vector<8x128xf32>
    %74 = math.tanh %73 : vector<8x128xf32>
    %cst_36 = arith.constant 5.000000e-01 : f32
    %75 = vector.broadcast %cst_36 : f32 to vector<8x128xf32>
    %76 = arith.mulf %75, %74 : vector<8x128xf32>
    %cst_37 = arith.constant 5.000000e-01 : f32
    %77 = vector.broadcast %cst_37 : f32 to vector<8x128xf32>
    %78 = arith.addf %76, %77 : vector<8x128xf32>
    %79 = arith.mulf %68, %8 : vector<8x128xf32>
    %80 = arith.mulf %60, %70 : vector<8x128xf32>
    %81 = arith.addf %79, %80 : vector<8x128xf32>
    %82 = math.tanh %81 : vector<8x128xf32>
    %83 = arith.mulf %78, %82 : vector<8x128xf32>
    %c1_i32 = arith.constant 1 : i32
    %c0_38 = arith.constant 0 : index
    %c0_39 = arith.constant 0 : index
    %84 = vector.load %arg5[%c0_38, %c0_39] : memref<128x512xf32, #tpu.memory_space<vmem>>, vector<128x512xf32>
    %cst_40 = arith.constant dense<0.000000e+00> : vector<8x512xf32>
    %85 = tpu.matmul %83, %84, %cst_40 {dimension_numbers = #tpu.dot_dimension_numbers<[1], [0], [0], [1], [0, 0, 1, 1], [], []>} : vector<8x128xf32>, vector<128x512xf32>, vector<8x512xf32> -> vector<8x512xf32>
    %c0_41 = arith.constant 0 : index
    %c0_42 = arith.constant 0 : index
    %86 = vector.load %arg2[%c0_41, %c0_42] : memref<128x512xf32, #tpu.memory_space<vmem>>, vector<128x512xf32>
    %cst_43 = arith.constant dense<0.000000e+00> : vector<8x512xf32>
    %87 = tpu.matmul %48, %86, %cst_43 {dimension_numbers = #tpu.dot_dimension_numbers<[1], [0], [0], [1], [0, 0, 1, 1], [], []>} : vector<8x128xf32>, vector<128x512xf32>, vector<8x512xf32> -> vector<8x512xf32>
    %c8_i32_44 = arith.constant 8 : i32
    %88 = arith.muli %c1_i32, %c8_i32_44 : i32
    %89 = tpu.assume_multiple %88, 8 : i32
    %90 = arith.index_cast %89 : i32 to index
    %c0_45 = arith.constant 0 : index
    %91 = vector.load %arg10[%90, %c0_45] : memref<64x512xf32, #tpu.memory_space<vmem>>, vector<8x512xf32>
    %92 = arith.addf %91, %87 : vector<8x512xf32>
    %93 = vector.extract_strided_slice %92 {offsets = [0, 0], sizes = [8, 128], strides = [1, 1]} : vector<8x512xf32> to vector<8x128xf32>
    %cst_46 = arith.constant 5.000000e-01 : f32
    %94 = vector.broadcast %cst_46 : f32 to vector<8x128xf32>
    %95 = arith.mulf %94, %93 : vector<8x128xf32>
    %96 = math.tanh %95 : vector<8x128xf32>
    %cst_47 = arith.constant 5.000000e-01 : f32
    %97 = vector.broadcast %cst_47 : f32 to vector<8x128xf32>
    %98 = arith.mulf %97, %96 : vector<8x128xf32>
    %cst_48 = arith.constant 5.000000e-01 : f32
    %99 = vector.broadcast %cst_48 : f32 to vector<8x128xf32>
    %100 = arith.addf %98, %99 : vector<8x128xf32>
    %101 = vector.extract_strided_slice %92 {offsets = [0, 128], sizes = [8, 128], strides = [1, 1]} : vector<8x512xf32> to vector<8x128xf32>
    %cst_49 = arith.constant 5.000000e-01 : f32
    %102 = vector.broadcast %cst_49 : f32 to vector<8x128xf32>
    %103 = arith.mulf %102, %101 : vector<8x128xf32>
    %104 = math.tanh %103 : vector<8x128xf32>
    %cst_50 = arith.constant 5.000000e-01 : f32
    %105 = vector.broadcast %cst_50 : f32 to vector<8x128xf32>
    %106 = arith.mulf %105, %104 : vector<8x128xf32>
    %cst_51 = arith.constant 5.000000e-01 : f32
    %107 = vector.broadcast %cst_51 : f32 to vector<8x128xf32>
    %108 = arith.addf %106, %107 : vector<8x128xf32>
    %109 = vector.extract_strided_slice %92 {offsets = [0, 256], sizes = [8, 128], strides = [1, 1]} : vector<8x512xf32> to vector<8x128xf32>
    %110 = math.tanh %109 : vector<8x128xf32>
    %111 = vector.extract_strided_slice %92 {offsets = [0, 384], sizes = [8, 128], strides = [1, 1]} : vector<8x512xf32> to vector<8x128xf32>
    %cst_52 = arith.constant 5.000000e-01 : f32
    %112 = vector.broadcast %cst_52 : f32 to vector<8x128xf32>
    %113 = arith.mulf %112, %111 : vector<8x128xf32>
    %114 = math.tanh %113 : vector<8x128xf32>
    %cst_53 = arith.constant 5.000000e-01 : f32
    %115 = vector.broadcast %cst_53 : f32 to vector<8x128xf32>
    %116 = arith.mulf %115, %114 : vector<8x128xf32>
    %cst_54 = arith.constant 5.000000e-01 : f32
    %117 = vector.broadcast %cst_54 : f32 to vector<8x128xf32>
    %118 = arith.addf %116, %117 : vector<8x128xf32>
    %119 = arith.mulf %108, %46 : vector<8x128xf32>
    %120 = arith.mulf %100, %110 : vector<8x128xf32>
    %121 = arith.addf %119, %120 : vector<8x128xf32>
    %122 = math.tanh %121 : vector<8x128xf32>
    %123 = arith.mulf %118, %122 : vector<8x128xf32>
    %c0_55 = arith.constant 0 : index
    %c0_56 = arith.constant 0 : index
    %124 = vector.load %arg4[%c0_55, %c0_56] : memref<128x512xf32, #tpu.memory_space<vmem>>, vector<128x512xf32>
    %cst_57 = arith.constant dense<0.000000e+00> : vector<8x512xf32>
    %125 = tpu.matmul %123, %124, %cst_57 {dimension_numbers = #tpu.dot_dimension_numbers<[1], [0], [0], [1], [0, 0, 1, 1], [], []>} : vector<8x128xf32>, vector<128x512xf32>, vector<8x512xf32> -> vector<8x512xf32>
    %126 = arith.addf %125, %85 : vector<8x512xf32>
    %127 = arith.addf %126, %7 : vector<8x512xf32>
    %128 = vector.extract_strided_slice %127 {offsets = [0, 0], sizes = [8, 128], strides = [1, 1]} : vector<8x512xf32> to vector<8x128xf32>
    %cst_58 = arith.constant 5.000000e-01 : f32
    %129 = vector.broadcast %cst_58 : f32 to vector<8x128xf32>
    %130 = arith.mulf %129, %128 : vector<8x128xf32>
    %131 = math.tanh %130 : vector<8x128xf32>
    %cst_59 = arith.constant 5.000000e-01 : f32
    %132 = vector.broadcast %cst_59 : f32 to vector<8x128xf32>
    %133 = arith.mulf %132, %131 : vector<8x128xf32>
    %cst_60 = arith.constant 5.000000e-01 : f32
    %134 = vector.broadcast %cst_60 : f32 to vector<8x128xf32>
    %135 = arith.addf %133, %134 : vector<8x128xf32>
    %136 = vector.extract_strided_slice %127 {offsets = [0, 128], sizes = [8, 128], strides = [1, 1]} : vector<8x512xf32> to vector<8x128xf32>
    %cst_61 = arith.constant 5.000000e-01 : f32
    %137 = vector.broadcast %cst_61 : f32 to vector<8x128xf32>
    %138 = arith.mulf %137, %136 : vector<8x128xf32>
    %139 = math.tanh %138 : vector<8x128xf32>
    %cst_62 = arith.constant 5.000000e-01 : f32
    %140 = vector.broadcast %cst_62 : f32 to vector<8x128xf32>
    %141 = arith.mulf %140, %139 : vector<8x128xf32>
    %cst_63 = arith.constant 5.000000e-01 : f32
    %142 = vector.broadcast %cst_63 : f32 to vector<8x128xf32>
    %143 = arith.addf %141, %142 : vector<8x128xf32>
    %144 = vector.extract_strided_slice %127 {offsets = [0, 256], sizes = [8, 128], strides = [1, 1]} : vector<8x512xf32> to vector<8x128xf32>
    %145 = math.tanh %144 : vector<8x128xf32>
    %146 = vector.extract_strided_slice %127 {offsets = [0, 384], sizes = [8, 128], strides = [1, 1]} : vector<8x512xf32> to vector<8x128xf32>
    %cst_64 = arith.constant 5.000000e-01 : f32
    %147 = vector.broadcast %cst_64 : f32 to vector<8x128xf32>
    %148 = arith.mulf %147, %146 : vector<8x128xf32>
    %149 = math.tanh %148 : vector<8x128xf32>
    %cst_65 = arith.constant 5.000000e-01 : f32
    %150 = vector.broadcast %cst_65 : f32 to vector<8x128xf32>
    %151 = arith.mulf %150, %149 : vector<8x128xf32>
    %cst_66 = arith.constant 5.000000e-01 : f32
    %152 = vector.broadcast %cst_66 : f32 to vector<8x128xf32>
    %153 = arith.addf %151, %152 : vector<8x128xf32>
    %154 = arith.mulf %143, %81 : vector<8x128xf32>
    %155 = arith.mulf %135, %145 : vector<8x128xf32>
    %156 = arith.addf %154, %155 : vector<8x128xf32>
    %157 = math.tanh %156 : vector<8x128xf32>
    %158 = arith.mulf %153, %157 : vector<8x128xf32>
    %c2_i32 = arith.constant 2 : i32
    %c0_67 = arith.constant 0 : index
    %c0_68 = arith.constant 0 : index
    %159 = vector.load %arg5[%c0_67, %c0_68] : memref<128x512xf32, #tpu.memory_space<vmem>>, vector<128x512xf32>
    %cst_69 = arith.constant dense<0.000000e+00> : vector<8x512xf32>
    %160 = tpu.matmul %158, %159, %cst_69 {dimension_numbers = #tpu.dot_dimension_numbers<[1], [0], [0], [1], [0, 0, 1, 1], [], []>} : vector<8x128xf32>, vector<128x512xf32>, vector<8x512xf32> -> vector<8x512xf32>
    %c0_70 = arith.constant 0 : index
    %c0_71 = arith.constant 0 : index
    %161 = vector.load %arg2[%c0_70, %c0_71] : memref<128x512xf32, #tpu.memory_space<vmem>>, vector<128x512xf32>
    %cst_72 = arith.constant dense<0.000000e+00> : vector<8x512xf32>
    %162 = tpu.matmul %123, %161, %cst_72 {dimension_numbers = #tpu.dot_dimension_numbers<[1], [0], [0], [1], [0, 0, 1, 1], [], []>} : vector<8x128xf32>, vector<128x512xf32>, vector<8x512xf32> -> vector<8x512xf32>
    %c8_i32_73 = arith.constant 8 : i32
    %163 = arith.muli %c2_i32, %c8_i32_73 : i32
    %164 = tpu.assume_multiple %163, 8 : i32
    %165 = arith.index_cast %164 : i32 to index
    %c0_74 = arith.constant 0 : index
    %166 = vector.load %arg10[%165, %c0_74] : memref<64x512xf32, #tpu.memory_space<vmem>>, vector<8x512xf32>
    %167 = arith.addf %166, %162 : vector<8x512xf32>
    %168 = vector.extract_strided_slice %167 {offsets = [0, 0], sizes = [8, 128], strides = [1, 1]} : vector<8x512xf32> to vector<8x128xf32>
    %cst_75 = arith.constant 5.000000e-01 : f32
    %169 = vector.broadcast %cst_75 : f32 to vector<8x128xf32>
    %170 = arith.mulf %169, %168 : vector<8x128xf32>
    %171 = math.tanh %170 : vector<8x128xf32>
    %cst_76 = arith.constant 5.000000e-01 : f32
    %172 = vector.broadcast %cst_76 : f32 to vector<8x128xf32>
    %173 = arith.mulf %172, %171 : vector<8x128xf32>
    %cst_77 = arith.constant 5.000000e-01 : f32
    %174 = vector.broadcast %cst_77 : f32 to vector<8x128xf32>
    %175 = arith.addf %173, %174 : vector<8x128xf32>
    %176 = vector.extract_strided_slice %167 {offsets = [0, 128], sizes = [8, 128], strides = [1, 1]} : vector<8x512xf32> to vector<8x128xf32>
    %cst_78 = arith.constant 5.000000e-01 : f32
    %177 = vector.broadcast %cst_78 : f32 to vector<8x128xf32>
    %178 = arith.mulf %177, %176 : vector<8x128xf32>
    %179 = math.tanh %178 : vector<8x128xf32>
    %cst_79 = arith.constant 5.000000e-01 : f32
    %180 = vector.broadcast %cst_79 : f32 to vector<8x128xf32>
    %181 = arith.mulf %180, %179 : vector<8x128xf32>
    %cst_80 = arith.constant 5.000000e-01 : f32
    %182 = vector.broadcast %cst_80 : f32 to vector<8x128xf32>
    %183 = arith.addf %181, %182 : vector<8x128xf32>
    %184 = vector.extract_strided_slice %167 {offsets = [0, 256], sizes = [8, 128], strides = [1, 1]} : vector<8x512xf32> to vector<8x128xf32>
    %185 = math.tanh %184 : vector<8x128xf32>
    %186 = vector.extract_strided_slice %167 {offsets = [0, 384], sizes = [8, 128], strides = [1, 1]} : vector<8x512xf32> to vector<8x128xf32>
    %cst_81 = arith.constant 5.000000e-01 : f32
    %187 = vector.broadcast %cst_81 : f32 to vector<8x128xf32>
    %188 = arith.mulf %187, %186 : vector<8x128xf32>
    %189 = math.tanh %188 : vector<8x128xf32>
    %cst_82 = arith.constant 5.000000e-01 : f32
    %190 = vector.broadcast %cst_82 : f32 to vector<8x128xf32>
    %191 = arith.mulf %190, %189 : vector<8x128xf32>
    %cst_83 = arith.constant 5.000000e-01 : f32
    %192 = vector.broadcast %cst_83 : f32 to vector<8x128xf32>
    %193 = arith.addf %191, %192 : vector<8x128xf32>
    %194 = arith.mulf %183, %121 : vector<8x128xf32>
    %195 = arith.mulf %175, %185 : vector<8x128xf32>
    %196 = arith.addf %194, %195 : vector<8x128xf32>
    %197 = math.tanh %196 : vector<8x128xf32>
    %198 = arith.mulf %193, %197 : vector<8x128xf32>
    %c0_84 = arith.constant 0 : index
    %c0_85 = arith.constant 0 : index
    %199 = vector.load %arg4[%c0_84, %c0_85] : memref<128x512xf32, #tpu.memory_space<vmem>>, vector<128x512xf32>
    %cst_86 = arith.constant dense<0.000000e+00> : vector<8x512xf32>
    %200 = tpu.matmul %198, %199, %cst_86 {dimension_numbers = #tpu.dot_dimension_numbers<[1], [0], [0], [1], [0, 0, 1, 1], [], []>} : vector<8x128xf32>, vector<128x512xf32>, vector<8x512xf32> -> vector<8x512xf32>
    %201 = arith.addf %200, %160 : vector<8x512xf32>
    %202 = arith.addf %201, %7 : vector<8x512xf32>
    %203 = vector.extract_strided_slice %202 {offsets = [0, 0], sizes = [8, 128], strides = [1, 1]} : vector<8x512xf32> to vector<8x128xf32>
    %cst_87 = arith.constant 5.000000e-01 : f32
    %204 = vector.broadcast %cst_87 : f32 to vector<8x128xf32>
    %205 = arith.mulf %204, %203 : vector<8x128xf32>
    %206 = math.tanh %205 : vector<8x128xf32>
    %cst_88 = arith.constant 5.000000e-01 : f32
    %207 = vector.broadcast %cst_88 : f32 to vector<8x128xf32>
    %208 = arith.mulf %207, %206 : vector<8x128xf32>
    %cst_89 = arith.constant 5.000000e-01 : f32
    %209 = vector.broadcast %cst_89 : f32 to vector<8x128xf32>
    %210 = arith.addf %208, %209 : vector<8x128xf32>
    %211 = vector.extract_strided_slice %202 {offsets = [0, 128], sizes = [8, 128], strides = [1, 1]} : vector<8x512xf32> to vector<8x128xf32>
    %cst_90 = arith.constant 5.000000e-01 : f32
    %212 = vector.broadcast %cst_90 : f32 to vector<8x128xf32>
    %213 = arith.mulf %212, %211 : vector<8x128xf32>
    %214 = math.tanh %213 : vector<8x128xf32>
    %cst_91 = arith.constant 5.000000e-01 : f32
    %215 = vector.broadcast %cst_91 : f32 to vector<8x128xf32>
    %216 = arith.mulf %215, %214 : vector<8x128xf32>
    %cst_92 = arith.constant 5.000000e-01 : f32
    %217 = vector.broadcast %cst_92 : f32 to vector<8x128xf32>
    %218 = arith.addf %216, %217 : vector<8x128xf32>
    %219 = vector.extract_strided_slice %202 {offsets = [0, 256], sizes = [8, 128], strides = [1, 1]} : vector<8x512xf32> to vector<8x128xf32>
    %220 = math.tanh %219 : vector<8x128xf32>
    %221 = vector.extract_strided_slice %202 {offsets = [0, 384], sizes = [8, 128], strides = [1, 1]} : vector<8x512xf32> to vector<8x128xf32>
    %cst_93 = arith.constant 5.000000e-01 : f32
    %222 = vector.broadcast %cst_93 : f32 to vector<8x128xf32>
    %223 = arith.mulf %222, %221 : vector<8x128xf32>
    %224 = math.tanh %223 : vector<8x128xf32>
    %cst_94 = arith.constant 5.000000e-01 : f32
    %225 = vector.broadcast %cst_94 : f32 to vector<8x128xf32>
    %226 = arith.mulf %225, %224 : vector<8x128xf32>
    %cst_95 = arith.constant 5.000000e-01 : f32
    %227 = vector.broadcast %cst_95 : f32 to vector<8x128xf32>
    %228 = arith.addf %226, %227 : vector<8x128xf32>
    %229 = arith.mulf %218, %156 : vector<8x128xf32>
    %230 = arith.mulf %210, %220 : vector<8x128xf32>
    %231 = arith.addf %229, %230 : vector<8x128xf32>
    %232 = math.tanh %231 : vector<8x128xf32>
    %233 = arith.mulf %228, %232 : vector<8x128xf32>
    %c3_i32 = arith.constant 3 : i32
    %c0_96 = arith.constant 0 : index
    %c0_97 = arith.constant 0 : index
    %234 = vector.load %arg5[%c0_96, %c0_97] : memref<128x512xf32, #tpu.memory_space<vmem>>, vector<128x512xf32>
    %cst_98 = arith.constant dense<0.000000e+00> : vector<8x512xf32>
    %235 = tpu.matmul %233, %234, %cst_98 {dimension_numbers = #tpu.dot_dimension_numbers<[1], [0], [0], [1], [0, 0, 1, 1], [], []>} : vector<8x128xf32>, vector<128x512xf32>, vector<8x512xf32> -> vector<8x512xf32>
    %c0_99 = arith.constant 0 : index
    %c0_100 = arith.constant 0 : index
    %236 = vector.load %arg2[%c0_99, %c0_100] : memref<128x512xf32, #tpu.memory_space<vmem>>, vector<128x512xf32>
    %cst_101 = arith.constant dense<0.000000e+00> : vector<8x512xf32>
    %237 = tpu.matmul %198, %236, %cst_101 {dimension_numbers = #tpu.dot_dimension_numbers<[1], [0], [0], [1], [0, 0, 1, 1], [], []>} : vector<8x128xf32>, vector<128x512xf32>, vector<8x512xf32> -> vector<8x512xf32>
    %c8_i32_102 = arith.constant 8 : i32
    %238 = arith.muli %c3_i32, %c8_i32_102 : i32
    %239 = tpu.assume_multiple %238, 8 : i32
    %240 = arith.index_cast %239 : i32 to index
    %c0_103 = arith.constant 0 : index
    %241 = vector.load %arg10[%240, %c0_103] : memref<64x512xf32, #tpu.memory_space<vmem>>, vector<8x512xf32>
    %242 = arith.addf %241, %237 : vector<8x512xf32>
    %243 = vector.extract_strided_slice %242 {offsets = [0, 0], sizes = [8, 128], strides = [1, 1]} : vector<8x512xf32> to vector<8x128xf32>
    %cst_104 = arith.constant 5.000000e-01 : f32
    %244 = vector.broadcast %cst_104 : f32 to vector<8x128xf32>
    %245 = arith.mulf %244, %243 : vector<8x128xf32>
    %246 = math.tanh %245 : vector<8x128xf32>
    %cst_105 = arith.constant 5.000000e-01 : f32
    %247 = vector.broadcast %cst_105 : f32 to vector<8x128xf32>
    %248 = arith.mulf %247, %246 : vector<8x128xf32>
    %cst_106 = arith.constant 5.000000e-01 : f32
    %249 = vector.broadcast %cst_106 : f32 to vector<8x128xf32>
    %250 = arith.addf %248, %249 : vector<8x128xf32>
    %251 = vector.extract_strided_slice %242 {offsets = [0, 128], sizes = [8, 128], strides = [1, 1]} : vector<8x512xf32> to vector<8x128xf32>
    %cst_107 = arith.constant 5.000000e-01 : f32
    %252 = vector.broadcast %cst_107 : f32 to vector<8x128xf32>
    %253 = arith.mulf %252, %251 : vector<8x128xf32>
    %254 = math.tanh %253 : vector<8x128xf32>
    %cst_108 = arith.constant 5.000000e-01 : f32
    %255 = vector.broadcast %cst_108 : f32 to vector<8x128xf32>
    %256 = arith.mulf %255, %254 : vector<8x128xf32>
    %cst_109 = arith.constant 5.000000e-01 : f32
    %257 = vector.broadcast %cst_109 : f32 to vector<8x128xf32>
    %258 = arith.addf %256, %257 : vector<8x128xf32>
    %259 = vector.extract_strided_slice %242 {offsets = [0, 256], sizes = [8, 128], strides = [1, 1]} : vector<8x512xf32> to vector<8x128xf32>
    %260 = math.tanh %259 : vector<8x128xf32>
    %261 = vector.extract_strided_slice %242 {offsets = [0, 384], sizes = [8, 128], strides = [1, 1]} : vector<8x512xf32> to vector<8x128xf32>
    %cst_110 = arith.constant 5.000000e-01 : f32
    %262 = vector.broadcast %cst_110 : f32 to vector<8x128xf32>
    %263 = arith.mulf %262, %261 : vector<8x128xf32>
    %264 = math.tanh %263 : vector<8x128xf32>
    %cst_111 = arith.constant 5.000000e-01 : f32
    %265 = vector.broadcast %cst_111 : f32 to vector<8x128xf32>
    %266 = arith.mulf %265, %264 : vector<8x128xf32>
    %cst_112 = arith.constant 5.000000e-01 : f32
    %267 = vector.broadcast %cst_112 : f32 to vector<8x128xf32>
    %268 = arith.addf %266, %267 : vector<8x128xf32>
    %269 = arith.mulf %258, %196 : vector<8x128xf32>
    %270 = arith.mulf %250, %260 : vector<8x128xf32>
    %271 = arith.addf %269, %270 : vector<8x128xf32>
    %272 = math.tanh %271 : vector<8x128xf32>
    %273 = arith.mulf %268, %272 : vector<8x128xf32>
    %c0_113 = arith.constant 0 : index
    %c0_114 = arith.constant 0 : index
    %274 = vector.load %arg4[%c0_113, %c0_114] : memref<128x512xf32, #tpu.memory_space<vmem>>, vector<128x512xf32>
    %cst_115 = arith.constant dense<0.000000e+00> : vector<8x512xf32>
    %275 = tpu.matmul %273, %274, %cst_115 {dimension_numbers = #tpu.dot_dimension_numbers<[1], [0], [0], [1], [0, 0, 1, 1], [], []>} : vector<8x128xf32>, vector<128x512xf32>, vector<8x512xf32> -> vector<8x512xf32>
    %276 = arith.addf %275, %235 : vector<8x512xf32>
    %277 = arith.addf %276, %7 : vector<8x512xf32>
    %278 = vector.extract_strided_slice %277 {offsets = [0, 0], sizes = [8, 128], strides = [1, 1]} : vector<8x512xf32> to vector<8x128xf32>
    %cst_116 = arith.constant 5.000000e-01 : f32
    %279 = vector.broadcast %cst_116 : f32 to vector<8x128xf32>
    %280 = arith.mulf %279, %278 : vector<8x128xf32>
    %281 = math.tanh %280 : vector<8x128xf32>
    %cst_117 = arith.constant 5.000000e-01 : f32
    %282 = vector.broadcast %cst_117 : f32 to vector<8x128xf32>
    %283 = arith.mulf %282, %281 : vector<8x128xf32>
    %cst_118 = arith.constant 5.000000e-01 : f32
    %284 = vector.broadcast %cst_118 : f32 to vector<8x128xf32>
    %285 = arith.addf %283, %284 : vector<8x128xf32>
    %286 = vector.extract_strided_slice %277 {offsets = [0, 128], sizes = [8, 128], strides = [1, 1]} : vector<8x512xf32> to vector<8x128xf32>
    %cst_119 = arith.constant 5.000000e-01 : f32
    %287 = vector.broadcast %cst_119 : f32 to vector<8x128xf32>
    %288 = arith.mulf %287, %286 : vector<8x128xf32>
    %289 = math.tanh %288 : vector<8x128xf32>
    %cst_120 = arith.constant 5.000000e-01 : f32
    %290 = vector.broadcast %cst_120 : f32 to vector<8x128xf32>
    %291 = arith.mulf %290, %289 : vector<8x128xf32>
    %cst_121 = arith.constant 5.000000e-01 : f32
    %292 = vector.broadcast %cst_121 : f32 to vector<8x128xf32>
    %293 = arith.addf %291, %292 : vector<8x128xf32>
    %294 = vector.extract_strided_slice %277 {offsets = [0, 256], sizes = [8, 128], strides = [1, 1]} : vector<8x512xf32> to vector<8x128xf32>
    %295 = math.tanh %294 : vector<8x128xf32>
    %296 = vector.extract_strided_slice %277 {offsets = [0, 384], sizes = [8, 128], strides = [1, 1]} : vector<8x512xf32> to vector<8x128xf32>
    %cst_122 = arith.constant 5.000000e-01 : f32
    %297 = vector.broadcast %cst_122 : f32 to vector<8x128xf32>
    %298 = arith.mulf %297, %296 : vector<8x128xf32>
    %299 = math.tanh %298 : vector<8x128xf32>
    %cst_123 = arith.constant 5.000000e-01 : f32
    %300 = vector.broadcast %cst_123 : f32 to vector<8x128xf32>
    %301 = arith.mulf %300, %299 : vector<8x128xf32>
    %cst_124 = arith.constant 5.000000e-01 : f32
    %302 = vector.broadcast %cst_124 : f32 to vector<8x128xf32>
    %303 = arith.addf %301, %302 : vector<8x128xf32>
    %304 = arith.mulf %293, %231 : vector<8x128xf32>
    %305 = arith.mulf %285, %295 : vector<8x128xf32>
    %306 = arith.addf %304, %305 : vector<8x128xf32>
    %307 = math.tanh %306 : vector<8x128xf32>
    %308 = arith.mulf %303, %307 : vector<8x128xf32>
    %c4_i32 = arith.constant 4 : i32
    %c0_125 = arith.constant 0 : index
    %c0_126 = arith.constant 0 : index
    %309 = vector.load %arg5[%c0_125, %c0_126] : memref<128x512xf32, #tpu.memory_space<vmem>>, vector<128x512xf32>
    %cst_127 = arith.constant dense<0.000000e+00> : vector<8x512xf32>
    %310 = tpu.matmul %308, %309, %cst_127 {dimension_numbers = #tpu.dot_dimension_numbers<[1], [0], [0], [1], [0, 0, 1, 1], [], []>} : vector<8x128xf32>, vector<128x512xf32>, vector<8x512xf32> -> vector<8x512xf32>
    %c0_128 = arith.constant 0 : index
    %c0_129 = arith.constant 0 : index
    %311 = vector.load %arg2[%c0_128, %c0_129] : memref<128x512xf32, #tpu.memory_space<vmem>>, vector<128x512xf32>
    %cst_130 = arith.constant dense<0.000000e+00> : vector<8x512xf32>
    %312 = tpu.matmul %273, %311, %cst_130 {dimension_numbers = #tpu.dot_dimension_numbers<[1], [0], [0], [1], [0, 0, 1, 1], [], []>} : vector<8x128xf32>, vector<128x512xf32>, vector<8x512xf32> -> vector<8x512xf32>
    %c8_i32_131 = arith.constant 8 : i32
    %313 = arith.muli %c4_i32, %c8_i32_131 : i32
    %314 = tpu.assume_multiple %313, 8 : i32
    %315 = arith.index_cast %314 : i32 to index
    %c0_132 = arith.constant 0 : index
    %316 = vector.load %arg10[%315, %c0_132] : memref<64x512xf32, #tpu.memory_space<vmem>>, vector<8x512xf32>
    %317 = arith.addf %316, %312 : vector<8x512xf32>
    %318 = vector.extract_strided_slice %317 {offsets = [0, 0], sizes = [8, 128], strides = [1, 1]} : vector<8x512xf32> to vector<8x128xf32>
    %cst_133 = arith.constant 5.000000e-01 : f32
    %319 = vector.broadcast %cst_133 : f32 to vector<8x128xf32>
    %320 = arith.mulf %319, %318 : vector<8x128xf32>
    %321 = math.tanh %320 : vector<8x128xf32>
    %cst_134 = arith.constant 5.000000e-01 : f32
    %322 = vector.broadcast %cst_134 : f32 to vector<8x128xf32>
    %323 = arith.mulf %322, %321 : vector<8x128xf32>
    %cst_135 = arith.constant 5.000000e-01 : f32
    %324 = vector.broadcast %cst_135 : f32 to vector<8x128xf32>
    %325 = arith.addf %323, %324 : vector<8x128xf32>
    %326 = vector.extract_strided_slice %317 {offsets = [0, 128], sizes = [8, 128], strides = [1, 1]} : vector<8x512xf32> to vector<8x128xf32>
    %cst_136 = arith.constant 5.000000e-01 : f32
    %327 = vector.broadcast %cst_136 : f32 to vector<8x128xf32>
    %328 = arith.mulf %327, %326 : vector<8x128xf32>
    %329 = math.tanh %328 : vector<8x128xf32>
    %cst_137 = arith.constant 5.000000e-01 : f32
    %330 = vector.broadcast %cst_137 : f32 to vector<8x128xf32>
    %331 = arith.mulf %330, %329 : vector<8x128xf32>
    %cst_138 = arith.constant 5.000000e-01 : f32
    %332 = vector.broadcast %cst_138 : f32 to vector<8x128xf32>
    %333 = arith.addf %331, %332 : vector<8x128xf32>
    %334 = vector.extract_strided_slice %317 {offsets = [0, 256], sizes = [8, 128], strides = [1, 1]} : vector<8x512xf32> to vector<8x128xf32>
    %335 = math.tanh %334 : vector<8x128xf32>
    %336 = vector.extract_strided_slice %317 {offsets = [0, 384], sizes = [8, 128], strides = [1, 1]} : vector<8x512xf32> to vector<8x128xf32>
    %cst_139 = arith.constant 5.000000e-01 : f32
    %337 = vector.broadcast %cst_139 : f32 to vector<8x128xf32>
    %338 = arith.mulf %337, %336 : vector<8x128xf32>
    %339 = math.tanh %338 : vector<8x128xf32>
    %cst_140 = arith.constant 5.000000e-01 : f32
    %340 = vector.broadcast %cst_140 : f32 to vector<8x128xf32>
    %341 = arith.mulf %340, %339 : vector<8x128xf32>
    %cst_141 = arith.constant 5.000000e-01 : f32
    %342 = vector.broadcast %cst_141 : f32 to vector<8x128xf32>
    %343 = arith.addf %341, %342 : vector<8x128xf32>
    %344 = arith.mulf %333, %271 : vector<8x128xf32>
    %345 = arith.mulf %325, %335 : vector<8x128xf32>
    %346 = arith.addf %344, %345 : vector<8x128xf32>
    %347 = math.tanh %346 : vector<8x128xf32>
    %348 = arith.mulf %343, %347 : vector<8x128xf32>
    %c0_142 = arith.constant 0 : index
    %c0_143 = arith.constant 0 : index
    %349 = vector.load %arg4[%c0_142, %c0_143] : memref<128x512xf32, #tpu.memory_space<vmem>>, vector<128x512xf32>
    %cst_144 = arith.constant dense<0.000000e+00> : vector<8x512xf32>
    %350 = tpu.matmul %348, %349, %cst_144 {dimension_numbers = #tpu.dot_dimension_numbers<[1], [0], [0], [1], [0, 0, 1, 1], [], []>} : vector<8x128xf32>, vector<128x512xf32>, vector<8x512xf32> -> vector<8x512xf32>
    %351 = arith.addf %350, %310 : vector<8x512xf32>
    %352 = arith.addf %351, %7 : vector<8x512xf32>
    %353 = vector.extract_strided_slice %352 {offsets = [0, 0], sizes = [8, 128], strides = [1, 1]} : vector<8x512xf32> to vector<8x128xf32>
    %cst_145 = arith.constant 5.000000e-01 : f32
    %354 = vector.broadcast %cst_145 : f32 to vector<8x128xf32>
    %355 = arith.mulf %354, %353 : vector<8x128xf32>
    %356 = math.tanh %355 : vector<8x128xf32>
    %cst_146 = arith.constant 5.000000e-01 : f32
    %357 = vector.broadcast %cst_146 : f32 to vector<8x128xf32>
    %358 = arith.mulf %357, %356 : vector<8x128xf32>
    %cst_147 = arith.constant 5.000000e-01 : f32
    %359 = vector.broadcast %cst_147 : f32 to vector<8x128xf32>
    %360 = arith.addf %358, %359 : vector<8x128xf32>
    %361 = vector.extract_strided_slice %352 {offsets = [0, 128], sizes = [8, 128], strides = [1, 1]} : vector<8x512xf32> to vector<8x128xf32>
    %cst_148 = arith.constant 5.000000e-01 : f32
    %362 = vector.broadcast %cst_148 : f32 to vector<8x128xf32>
    %363 = arith.mulf %362, %361 : vector<8x128xf32>
    %364 = math.tanh %363 : vector<8x128xf32>
    %cst_149 = arith.constant 5.000000e-01 : f32
    %365 = vector.broadcast %cst_149 : f32 to vector<8x128xf32>
    %366 = arith.mulf %365, %364 : vector<8x128xf32>
    %cst_150 = arith.constant 5.000000e-01 : f32
    %367 = vector.broadcast %cst_150 : f32 to vector<8x128xf32>
    %368 = arith.addf %366, %367 : vector<8x128xf32>
    %369 = vector.extract_strided_slice %352 {offsets = [0, 256], sizes = [8, 128], strides = [1, 1]} : vector<8x512xf32> to vector<8x128xf32>
    %370 = math.tanh %369 : vector<8x128xf32>
    %371 = vector.extract_strided_slice %352 {offsets = [0, 384], sizes = [8, 128], strides = [1, 1]} : vector<8x512xf32> to vector<8x128xf32>
    %cst_151 = arith.constant 5.000000e-01 : f32
    %372 = vector.broadcast %cst_151 : f32 to vector<8x128xf32>
    %373 = arith.mulf %372, %371 : vector<8x128xf32>
    %374 = math.tanh %373 : vector<8x128xf32>
    %cst_152 = arith.constant 5.000000e-01 : f32
    %375 = vector.broadcast %cst_152 : f32 to vector<8x128xf32>
    %376 = arith.mulf %375, %374 : vector<8x128xf32>
    %cst_153 = arith.constant 5.000000e-01 : f32
    %377 = vector.broadcast %cst_153 : f32 to vector<8x128xf32>
    %378 = arith.addf %376, %377 : vector<8x128xf32>
    %379 = arith.mulf %368, %306 : vector<8x128xf32>
    %380 = arith.mulf %360, %370 : vector<8x128xf32>
    %381 = arith.addf %379, %380 : vector<8x128xf32>
    %382 = math.tanh %381 : vector<8x128xf32>
    %383 = arith.mulf %378, %382 : vector<8x128xf32>
    %c5_i32 = arith.constant 5 : i32
    %c0_154 = arith.constant 0 : index
    %c0_155 = arith.constant 0 : index
    %384 = vector.load %arg5[%c0_154, %c0_155] : memref<128x512xf32, #tpu.memory_space<vmem>>, vector<128x512xf32>
    %cst_156 = arith.constant dense<0.000000e+00> : vector<8x512xf32>
    %385 = tpu.matmul %383, %384, %cst_156 {dimension_numbers = #tpu.dot_dimension_numbers<[1], [0], [0], [1], [0, 0, 1, 1], [], []>} : vector<8x128xf32>, vector<128x512xf32>, vector<8x512xf32> -> vector<8x512xf32>
    %c0_157 = arith.constant 0 : index
    %c0_158 = arith.constant 0 : index
    %386 = vector.load %arg2[%c0_157, %c0_158] : memref<128x512xf32, #tpu.memory_space<vmem>>, vector<128x512xf32>
    %cst_159 = arith.constant dense<0.000000e+00> : vector<8x512xf32>
    %387 = tpu.matmul %348, %386, %cst_159 {dimension_numbers = #tpu.dot_dimension_numbers<[1], [0], [0], [1], [0, 0, 1, 1], [], []>} : vector<8x128xf32>, vector<128x512xf32>, vector<8x512xf32> -> vector<8x512xf32>
    %c8_i32_160 = arith.constant 8 : i32
    %388 = arith.muli %c5_i32, %c8_i32_160 : i32
    %389 = tpu.assume_multiple %388, 8 : i32
    %390 = arith.index_cast %389 : i32 to index
    %c0_161 = arith.constant 0 : index
    %391 = vector.load %arg10[%390, %c0_161] : memref<64x512xf32, #tpu.memory_space<vmem>>, vector<8x512xf32>
    %392 = arith.addf %391, %387 : vector<8x512xf32>
    %393 = vector.extract_strided_slice %392 {offsets = [0, 0], sizes = [8, 128], strides = [1, 1]} : vector<8x512xf32> to vector<8x128xf32>
    %cst_162 = arith.constant 5.000000e-01 : f32
    %394 = vector.broadcast %cst_162 : f32 to vector<8x128xf32>
    %395 = arith.mulf %394, %393 : vector<8x128xf32>
    %396 = math.tanh %395 : vector<8x128xf32>
    %cst_163 = arith.constant 5.000000e-01 : f32
    %397 = vector.broadcast %cst_163 : f32 to vector<8x128xf32>
    %398 = arith.mulf %397, %396 : vector<8x128xf32>
    %cst_164 = arith.constant 5.000000e-01 : f32
    %399 = vector.broadcast %cst_164 : f32 to vector<8x128xf32>
    %400 = arith.addf %398, %399 : vector<8x128xf32>
    %401 = vector.extract_strided_slice %392 {offsets = [0, 128], sizes = [8, 128], strides = [1, 1]} : vector<8x512xf32> to vector<8x128xf32>
    %cst_165 = arith.constant 5.000000e-01 : f32
    %402 = vector.broadcast %cst_165 : f32 to vector<8x128xf32>
    %403 = arith.mulf %402, %401 : vector<8x128xf32>
    %404 = math.tanh %403 : vector<8x128xf32>
    %cst_166 = arith.constant 5.000000e-01 : f32
    %405 = vector.broadcast %cst_166 : f32 to vector<8x128xf32>
    %406 = arith.mulf %405, %404 : vector<8x128xf32>
    %cst_167 = arith.constant 5.000000e-01 : f32
    %407 = vector.broadcast %cst_167 : f32 to vector<8x128xf32>
    %408 = arith.addf %406, %407 : vector<8x128xf32>
    %409 = vector.extract_strided_slice %392 {offsets = [0, 256], sizes = [8, 128], strides = [1, 1]} : vector<8x512xf32> to vector<8x128xf32>
    %410 = math.tanh %409 : vector<8x128xf32>
    %411 = vector.extract_strided_slice %392 {offsets = [0, 384], sizes = [8, 128], strides = [1, 1]} : vector<8x512xf32> to vector<8x128xf32>
    %cst_168 = arith.constant 5.000000e-01 : f32
    %412 = vector.broadcast %cst_168 : f32 to vector<8x128xf32>
    %413 = arith.mulf %412, %411 : vector<8x128xf32>
    %414 = math.tanh %413 : vector<8x128xf32>
    %cst_169 = arith.constant 5.000000e-01 : f32
    %415 = vector.broadcast %cst_169 : f32 to vector<8x128xf32>
    %416 = arith.mulf %415, %414 : vector<8x128xf32>
    %cst_170 = arith.constant 5.000000e-01 : f32
    %417 = vector.broadcast %cst_170 : f32 to vector<8x128xf32>
    %418 = arith.addf %416, %417 : vector<8x128xf32>
    %419 = arith.mulf %408, %346 : vector<8x128xf32>
    %420 = arith.mulf %400, %410 : vector<8x128xf32>
    %421 = arith.addf %419, %420 : vector<8x128xf32>
    %422 = math.tanh %421 : vector<8x128xf32>
    %423 = arith.mulf %418, %422 : vector<8x128xf32>
    %c0_171 = arith.constant 0 : index
    %c0_172 = arith.constant 0 : index
    %424 = vector.load %arg4[%c0_171, %c0_172] : memref<128x512xf32, #tpu.memory_space<vmem>>, vector<128x512xf32>
    %cst_173 = arith.constant dense<0.000000e+00> : vector<8x512xf32>
    %425 = tpu.matmul %423, %424, %cst_173 {dimension_numbers = #tpu.dot_dimension_numbers<[1], [0], [0], [1], [0, 0, 1, 1], [], []>} : vector<8x128xf32>, vector<128x512xf32>, vector<8x512xf32> -> vector<8x512xf32>
    %426 = arith.addf %425, %385 : vector<8x512xf32>
    %427 = arith.addf %426, %7 : vector<8x512xf32>
    %428 = vector.extract_strided_slice %427 {offsets = [0, 0], sizes = [8, 128], strides = [1, 1]} : vector<8x512xf32> to vector<8x128xf32>
    %cst_174 = arith.constant 5.000000e-01 : f32
    %429 = vector.broadcast %cst_174 : f32 to vector<8x128xf32>
    %430 = arith.mulf %429, %428 : vector<8x128xf32>
    %431 = math.tanh %430 : vector<8x128xf32>
    %cst_175 = arith.constant 5.000000e-01 : f32
    %432 = vector.broadcast %cst_175 : f32 to vector<8x128xf32>
    %433 = arith.mulf %432, %431 : vector<8x128xf32>
    %cst_176 = arith.constant 5.000000e-01 : f32
    %434 = vector.broadcast %cst_176 : f32 to vector<8x128xf32>
    %435 = arith.addf %433, %434 : vector<8x128xf32>
    %436 = vector.extract_strided_slice %427 {offsets = [0, 128], sizes = [8, 128], strides = [1, 1]} : vector<8x512xf32> to vector<8x128xf32>
    %cst_177 = arith.constant 5.000000e-01 : f32
    %437 = vector.broadcast %cst_177 : f32 to vector<8x128xf32>
    %438 = arith.mulf %437, %436 : vector<8x128xf32>
    %439 = math.tanh %438 : vector<8x128xf32>
    %cst_178 = arith.constant 5.000000e-01 : f32
    %440 = vector.broadcast %cst_178 : f32 to vector<8x128xf32>
    %441 = arith.mulf %440, %439 : vector<8x128xf32>
    %cst_179 = arith.constant 5.000000e-01 : f32
    %442 = vector.broadcast %cst_179 : f32 to vector<8x128xf32>
    %443 = arith.addf %441, %442 : vector<8x128xf32>
    %444 = vector.extract_strided_slice %427 {offsets = [0, 256], sizes = [8, 128], strides = [1, 1]} : vector<8x512xf32> to vector<8x128xf32>
    %445 = math.tanh %444 : vector<8x128xf32>
    %446 = vector.extract_strided_slice %427 {offsets = [0, 384], sizes = [8, 128], strides = [1, 1]} : vector<8x512xf32> to vector<8x128xf32>
    %cst_180 = arith.constant 5.000000e-01 : f32
    %447 = vector.broadcast %cst_180 : f32 to vector<8x128xf32>
    %448 = arith.mulf %447, %446 : vector<8x128xf32>
    %449 = math.tanh %448 : vector<8x128xf32>
    %cst_181 = arith.constant 5.000000e-01 : f32
    %450 = vector.broadcast %cst_181 : f32 to vector<8x128xf32>
    %451 = arith.mulf %450, %449 : vector<8x128xf32>
    %cst_182 = arith.constant 5.000000e-01 : f32
    %452 = vector.broadcast %cst_182 : f32 to vector<8x128xf32>
    %453 = arith.addf %451, %452 : vector<8x128xf32>
    %454 = arith.mulf %443, %381 : vector<8x128xf32>
    %455 = arith.mulf %435, %445 : vector<8x128xf32>
    %456 = arith.addf %454, %455 : vector<8x128xf32>
    %457 = math.tanh %456 : vector<8x128xf32>
    %458 = arith.mulf %453, %457 : vector<8x128xf32>
    %c6_i32 = arith.constant 6 : i32
    %c0_183 = arith.constant 0 : index
    %c0_184 = arith.constant 0 : index
    %459 = vector.load %arg5[%c0_183, %c0_184] : memref<128x512xf32, #tpu.memory_space<vmem>>, vector<128x512xf32>
    %cst_185 = arith.constant dense<0.000000e+00> : vector<8x512xf32>
    %460 = tpu.matmul %458, %459, %cst_185 {dimension_numbers = #tpu.dot_dimension_numbers<[1], [0], [0], [1], [0, 0, 1, 1], [], []>} : vector<8x128xf32>, vector<128x512xf32>, vector<8x512xf32> -> vector<8x512xf32>
    %c0_186 = arith.constant 0 : index
    %c0_187 = arith.constant 0 : index
    %461 = vector.load %arg2[%c0_186, %c0_187] : memref<128x512xf32, #tpu.memory_space<vmem>>, vector<128x512xf32>
    %cst_188 = arith.constant dense<0.000000e+00> : vector<8x512xf32>
    %462 = tpu.matmul %423, %461, %cst_188 {dimension_numbers = #tpu.dot_dimension_numbers<[1], [0], [0], [1], [0, 0, 1, 1], [], []>} : vector<8x128xf32>, vector<128x512xf32>, vector<8x512xf32> -> vector<8x512xf32>
    %c8_i32_189 = arith.constant 8 : i32
    %463 = arith.muli %c6_i32, %c8_i32_189 : i32
    %464 = tpu.assume_multiple %463, 8 : i32
    %465 = arith.index_cast %464 : i32 to index
    %c0_190 = arith.constant 0 : index
    %466 = vector.load %arg10[%465, %c0_190] : memref<64x512xf32, #tpu.memory_space<vmem>>, vector<8x512xf32>
    %467 = arith.addf %466, %462 : vector<8x512xf32>
    %468 = vector.extract_strided_slice %467 {offsets = [0, 0], sizes = [8, 128], strides = [1, 1]} : vector<8x512xf32> to vector<8x128xf32>
    %cst_191 = arith.constant 5.000000e-01 : f32
    %469 = vector.broadcast %cst_191 : f32 to vector<8x128xf32>
    %470 = arith.mulf %469, %468 : vector<8x128xf32>
    %471 = math.tanh %470 : vector<8x128xf32>
    %cst_192 = arith.constant 5.000000e-01 : f32
    %472 = vector.broadcast %cst_192 : f32 to vector<8x128xf32>
    %473 = arith.mulf %472, %471 : vector<8x128xf32>
    %cst_193 = arith.constant 5.000000e-01 : f32
    %474 = vector.broadcast %cst_193 : f32 to vector<8x128xf32>
    %475 = arith.addf %473, %474 : vector<8x128xf32>
    %476 = vector.extract_strided_slice %467 {offsets = [0, 128], sizes = [8, 128], strides = [1, 1]} : vector<8x512xf32> to vector<8x128xf32>
    %cst_194 = arith.constant 5.000000e-01 : f32
    %477 = vector.broadcast %cst_194 : f32 to vector<8x128xf32>
    %478 = arith.mulf %477, %476 : vector<8x128xf32>
    %479 = math.tanh %478 : vector<8x128xf32>
    %cst_195 = arith.constant 5.000000e-01 : f32
    %480 = vector.broadcast %cst_195 : f32 to vector<8x128xf32>
    %481 = arith.mulf %480, %479 : vector<8x128xf32>
    %cst_196 = arith.constant 5.000000e-01 : f32
    %482 = vector.broadcast %cst_196 : f32 to vector<8x128xf32>
    %483 = arith.addf %481, %482 : vector<8x128xf32>
    %484 = vector.extract_strided_slice %467 {offsets = [0, 256], sizes = [8, 128], strides = [1, 1]} : vector<8x512xf32> to vector<8x128xf32>
    %485 = math.tanh %484 : vector<8x128xf32>
    %486 = vector.extract_strided_slice %467 {offsets = [0, 384], sizes = [8, 128], strides = [1, 1]} : vector<8x512xf32> to vector<8x128xf32>
    %cst_197 = arith.constant 5.000000e-01 : f32
    %487 = vector.broadcast %cst_197 : f32 to vector<8x128xf32>
    %488 = arith.mulf %487, %486 : vector<8x128xf32>
    %489 = math.tanh %488 : vector<8x128xf32>
    %cst_198 = arith.constant 5.000000e-01 : f32
    %490 = vector.broadcast %cst_198 : f32 to vector<8x128xf32>
    %491 = arith.mulf %490, %489 : vector<8x128xf32>
    %cst_199 = arith.constant 5.000000e-01 : f32
    %492 = vector.broadcast %cst_199 : f32 to vector<8x128xf32>
    %493 = arith.addf %491, %492 : vector<8x128xf32>
    %494 = arith.mulf %483, %421 : vector<8x128xf32>
    %495 = arith.mulf %475, %485 : vector<8x128xf32>
    %496 = arith.addf %494, %495 : vector<8x128xf32>
    %497 = math.tanh %496 : vector<8x128xf32>
    %498 = arith.mulf %493, %497 : vector<8x128xf32>
    %c0_200 = arith.constant 0 : index
    %c0_201 = arith.constant 0 : index
    %499 = vector.load %arg4[%c0_200, %c0_201] : memref<128x512xf32, #tpu.memory_space<vmem>>, vector<128x512xf32>
    %cst_202 = arith.constant dense<0.000000e+00> : vector<8x512xf32>
    %500 = tpu.matmul %498, %499, %cst_202 {dimension_numbers = #tpu.dot_dimension_numbers<[1], [0], [0], [1], [0, 0, 1, 1], [], []>} : vector<8x128xf32>, vector<128x512xf32>, vector<8x512xf32> -> vector<8x512xf32>
    %501 = arith.addf %500, %460 : vector<8x512xf32>
    %502 = arith.addf %501, %7 : vector<8x512xf32>
    %503 = vector.extract_strided_slice %502 {offsets = [0, 0], sizes = [8, 128], strides = [1, 1]} : vector<8x512xf32> to vector<8x128xf32>
    %cst_203 = arith.constant 5.000000e-01 : f32
    %504 = vector.broadcast %cst_203 : f32 to vector<8x128xf32>
    %505 = arith.mulf %504, %503 : vector<8x128xf32>
    %506 = math.tanh %505 : vector<8x128xf32>
    %cst_204 = arith.constant 5.000000e-01 : f32
    %507 = vector.broadcast %cst_204 : f32 to vector<8x128xf32>
    %508 = arith.mulf %507, %506 : vector<8x128xf32>
    %cst_205 = arith.constant 5.000000e-01 : f32
    %509 = vector.broadcast %cst_205 : f32 to vector<8x128xf32>
    %510 = arith.addf %508, %509 : vector<8x128xf32>
    %511 = vector.extract_strided_slice %502 {offsets = [0, 128], sizes = [8, 128], strides = [1, 1]} : vector<8x512xf32> to vector<8x128xf32>
    %cst_206 = arith.constant 5.000000e-01 : f32
    %512 = vector.broadcast %cst_206 : f32 to vector<8x128xf32>
    %513 = arith.mulf %512, %511 : vector<8x128xf32>
    %514 = math.tanh %513 : vector<8x128xf32>
    %cst_207 = arith.constant 5.000000e-01 : f32
    %515 = vector.broadcast %cst_207 : f32 to vector<8x128xf32>
    %516 = arith.mulf %515, %514 : vector<8x128xf32>
    %cst_208 = arith.constant 5.000000e-01 : f32
    %517 = vector.broadcast %cst_208 : f32 to vector<8x128xf32>
    %518 = arith.addf %516, %517 : vector<8x128xf32>
    %519 = vector.extract_strided_slice %502 {offsets = [0, 256], sizes = [8, 128], strides = [1, 1]} : vector<8x512xf32> to vector<8x128xf32>
    %520 = math.tanh %519 : vector<8x128xf32>
    %521 = vector.extract_strided_slice %502 {offsets = [0, 384], sizes = [8, 128], strides = [1, 1]} : vector<8x512xf32> to vector<8x128xf32>
    %cst_209 = arith.constant 5.000000e-01 : f32
    %522 = vector.broadcast %cst_209 : f32 to vector<8x128xf32>
    %523 = arith.mulf %522, %521 : vector<8x128xf32>
    %524 = math.tanh %523 : vector<8x128xf32>
    %cst_210 = arith.constant 5.000000e-01 : f32
    %525 = vector.broadcast %cst_210 : f32 to vector<8x128xf32>
    %526 = arith.mulf %525, %524 : vector<8x128xf32>
    %cst_211 = arith.constant 5.000000e-01 : f32
    %527 = vector.broadcast %cst_211 : f32 to vector<8x128xf32>
    %528 = arith.addf %526, %527 : vector<8x128xf32>
    %529 = arith.mulf %518, %456 : vector<8x128xf32>
    %530 = arith.mulf %510, %520 : vector<8x128xf32>
    %531 = arith.addf %529, %530 : vector<8x128xf32>
    %532 = math.tanh %531 : vector<8x128xf32>
    %533 = arith.mulf %528, %532 : vector<8x128xf32>
    %c7_i32 = arith.constant 7 : i32
    %c0_212 = arith.constant 0 : index
    %c0_213 = arith.constant 0 : index
    %534 = vector.load %arg5[%c0_212, %c0_213] : memref<128x512xf32, #tpu.memory_space<vmem>>, vector<128x512xf32>
    %cst_214 = arith.constant dense<0.000000e+00> : vector<8x512xf32>
    %535 = tpu.matmul %533, %534, %cst_214 {dimension_numbers = #tpu.dot_dimension_numbers<[1], [0], [0], [1], [0, 0, 1, 1], [], []>} : vector<8x128xf32>, vector<128x512xf32>, vector<8x512xf32> -> vector<8x512xf32>
    %c0_215 = arith.constant 0 : index
    %c0_216 = arith.constant 0 : index
    %536 = vector.load %arg2[%c0_215, %c0_216] : memref<128x512xf32, #tpu.memory_space<vmem>>, vector<128x512xf32>
    %cst_217 = arith.constant dense<0.000000e+00> : vector<8x512xf32>
    %537 = tpu.matmul %498, %536, %cst_217 {dimension_numbers = #tpu.dot_dimension_numbers<[1], [0], [0], [1], [0, 0, 1, 1], [], []>} : vector<8x128xf32>, vector<128x512xf32>, vector<8x512xf32> -> vector<8x512xf32>
    %c8_i32_218 = arith.constant 8 : i32
    %538 = arith.muli %c7_i32, %c8_i32_218 : i32
    %539 = tpu.assume_multiple %538, 8 : i32
    %540 = arith.index_cast %539 : i32 to index
    %c0_219 = arith.constant 0 : index
    %541 = vector.load %arg10[%540, %c0_219] : memref<64x512xf32, #tpu.memory_space<vmem>>, vector<8x512xf32>
    %542 = arith.addf %541, %537 : vector<8x512xf32>
    %543 = vector.extract_strided_slice %542 {offsets = [0, 0], sizes = [8, 128], strides = [1, 1]} : vector<8x512xf32> to vector<8x128xf32>
    %cst_220 = arith.constant 5.000000e-01 : f32
    %544 = vector.broadcast %cst_220 : f32 to vector<8x128xf32>
    %545 = arith.mulf %544, %543 : vector<8x128xf32>
    %546 = math.tanh %545 : vector<8x128xf32>
    %cst_221 = arith.constant 5.000000e-01 : f32
    %547 = vector.broadcast %cst_221 : f32 to vector<8x128xf32>
    %548 = arith.mulf %547, %546 : vector<8x128xf32>
    %cst_222 = arith.constant 5.000000e-01 : f32
    %549 = vector.broadcast %cst_222 : f32 to vector<8x128xf32>
    %550 = arith.addf %548, %549 : vector<8x128xf32>
    %551 = vector.extract_strided_slice %542 {offsets = [0, 128], sizes = [8, 128], strides = [1, 1]} : vector<8x512xf32> to vector<8x128xf32>
    %cst_223 = arith.constant 5.000000e-01 : f32
    %552 = vector.broadcast %cst_223 : f32 to vector<8x128xf32>
    %553 = arith.mulf %552, %551 : vector<8x128xf32>
    %554 = math.tanh %553 : vector<8x128xf32>
    %cst_224 = arith.constant 5.000000e-01 : f32
    %555 = vector.broadcast %cst_224 : f32 to vector<8x128xf32>
    %556 = arith.mulf %555, %554 : vector<8x128xf32>
    %cst_225 = arith.constant 5.000000e-01 : f32
    %557 = vector.broadcast %cst_225 : f32 to vector<8x128xf32>
    %558 = arith.addf %556, %557 : vector<8x128xf32>
    %559 = vector.extract_strided_slice %542 {offsets = [0, 256], sizes = [8, 128], strides = [1, 1]} : vector<8x512xf32> to vector<8x128xf32>
    %560 = math.tanh %559 : vector<8x128xf32>
    %561 = vector.extract_strided_slice %542 {offsets = [0, 384], sizes = [8, 128], strides = [1, 1]} : vector<8x512xf32> to vector<8x128xf32>
    %cst_226 = arith.constant 5.000000e-01 : f32
    %562 = vector.broadcast %cst_226 : f32 to vector<8x128xf32>
    %563 = arith.mulf %562, %561 : vector<8x128xf32>
    %564 = math.tanh %563 : vector<8x128xf32>
    %cst_227 = arith.constant 5.000000e-01 : f32
    %565 = vector.broadcast %cst_227 : f32 to vector<8x128xf32>
    %566 = arith.mulf %565, %564 : vector<8x128xf32>
    %cst_228 = arith.constant 5.000000e-01 : f32
    %567 = vector.broadcast %cst_228 : f32 to vector<8x128xf32>
    %568 = arith.addf %566, %567 : vector<8x128xf32>
    %569 = arith.mulf %558, %496 : vector<8x128xf32>
    %570 = arith.mulf %550, %560 : vector<8x128xf32>
    %571 = arith.addf %569, %570 : vector<8x128xf32>
    %572 = math.tanh %571 : vector<8x128xf32>
    %573 = arith.mulf %568, %572 : vector<8x128xf32>
    %c0_229 = arith.constant 0 : index
    %c0_230 = arith.constant 0 : index
    %574 = vector.load %arg4[%c0_229, %c0_230] : memref<128x512xf32, #tpu.memory_space<vmem>>, vector<128x512xf32>
    %cst_231 = arith.constant dense<0.000000e+00> : vector<8x512xf32>
    %575 = tpu.matmul %573, %574, %cst_231 {dimension_numbers = #tpu.dot_dimension_numbers<[1], [0], [0], [1], [0, 0, 1, 1], [], []>} : vector<8x128xf32>, vector<128x512xf32>, vector<8x512xf32> -> vector<8x512xf32>
    %576 = arith.addf %575, %535 : vector<8x512xf32>
    %577 = arith.addf %576, %7 : vector<8x512xf32>
    %578 = vector.extract_strided_slice %577 {offsets = [0, 0], sizes = [8, 128], strides = [1, 1]} : vector<8x512xf32> to vector<8x128xf32>
    %cst_232 = arith.constant 5.000000e-01 : f32
    %579 = vector.broadcast %cst_232 : f32 to vector<8x128xf32>
    %580 = arith.mulf %579, %578 : vector<8x128xf32>
    %581 = math.tanh %580 : vector<8x128xf32>
    %cst_233 = arith.constant 5.000000e-01 : f32
    %582 = vector.broadcast %cst_233 : f32 to vector<8x128xf32>
    %583 = arith.mulf %582, %581 : vector<8x128xf32>
    %cst_234 = arith.constant 5.000000e-01 : f32
    %584 = vector.broadcast %cst_234 : f32 to vector<8x128xf32>
    %585 = arith.addf %583, %584 : vector<8x128xf32>
    %586 = vector.extract_strided_slice %577 {offsets = [0, 128], sizes = [8, 128], strides = [1, 1]} : vector<8x512xf32> to vector<8x128xf32>
    %cst_235 = arith.constant 5.000000e-01 : f32
    %587 = vector.broadcast %cst_235 : f32 to vector<8x128xf32>
    %588 = arith.mulf %587, %586 : vector<8x128xf32>
    %589 = math.tanh %588 : vector<8x128xf32>
    %cst_236 = arith.constant 5.000000e-01 : f32
    %590 = vector.broadcast %cst_236 : f32 to vector<8x128xf32>
    %591 = arith.mulf %590, %589 : vector<8x128xf32>
    %cst_237 = arith.constant 5.000000e-01 : f32
    %592 = vector.broadcast %cst_237 : f32 to vector<8x128xf32>
    %593 = arith.addf %591, %592 : vector<8x128xf32>
    %594 = vector.extract_strided_slice %577 {offsets = [0, 256], sizes = [8, 128], strides = [1, 1]} : vector<8x512xf32> to vector<8x128xf32>
    %595 = math.tanh %594 : vector<8x128xf32>
    %596 = vector.extract_strided_slice %577 {offsets = [0, 384], sizes = [8, 128], strides = [1, 1]} : vector<8x512xf32> to vector<8x128xf32>
    %cst_238 = arith.constant 5.000000e-01 : f32
    %597 = vector.broadcast %cst_238 : f32 to vector<8x128xf32>
    %598 = arith.mulf %597, %596 : vector<8x128xf32>
    %599 = math.tanh %598 : vector<8x128xf32>
    %cst_239 = arith.constant 5.000000e-01 : f32
    %600 = vector.broadcast %cst_239 : f32 to vector<8x128xf32>
    %601 = arith.mulf %600, %599 : vector<8x128xf32>
    %cst_240 = arith.constant 5.000000e-01 : f32
    %602 = vector.broadcast %cst_240 : f32 to vector<8x128xf32>
    %603 = arith.addf %601, %602 : vector<8x128xf32>
    %604 = arith.mulf %593, %531 : vector<8x128xf32>
    %605 = arith.mulf %585, %595 : vector<8x128xf32>
    %606 = arith.addf %604, %605 : vector<8x128xf32>
    %607 = math.tanh %606 : vector<8x128xf32>
    %608 = arith.mulf %603, %607 : vector<8x128xf32>
    %c8_i32_241 = arith.constant 8 : i32
    %c0_242 = arith.constant 0 : index
    %c0_243 = arith.constant 0 : index
    %609 = vector.load %arg7[%c0_242, %c0_243] : memref<128x128xf32, #tpu.memory_space<vmem>>, vector<128x128xf32>
    %cst_244 = arith.constant dense<0.000000e+00> : vector<8x128xf32>
    %610 = tpu.matmul %608, %609, %cst_244 {dimension_numbers = #tpu.dot_dimension_numbers<[1], [0], [0], [1], [0, 0, 1, 1], [], []>} : vector<8x128xf32>, vector<128x128xf32>, vector<8x128xf32> -> vector<8x128xf32>
    %c0_245 = arith.constant 0 : index
    %c0_246 = arith.constant 0 : index
    %611 = vector.load %arg8[%c0_245, %c0_246] : memref<1x128xf32, #tpu.memory_space<vmem>>, vector<1x128xf32>
    %612 = vector.broadcast %611 : vector<1x128xf32> to vector<8x128xf32>
    %613 = arith.addf %610, %612 : vector<8x128xf32>
    %c0_247 = arith.constant 0 : index
    %c0_248 = arith.constant 0 : index
    %614 = vector.load %arg9[%c0_247, %c0_248] : memref<8x128xf32, #tpu.memory_space<vmem>>, vector<8x128xf32>
    tpu.vector_store %arg9[%c0_247, %c0_248], %613 {strides = array<i32>} : memref<8x128xf32, #tpu.memory_space<vmem>>, vector<8x128xf32>,
    return
  }
}

</mosaic_0001>

<llo_original>
// kernel: tpu_custom_call.1
$region0: #{tpu_custom_call.1}
  #allocation0 [shape = 'u32[]', space=smem, size = 0x4, offset = 0x4, fixed_abs, tag = 'smem constant byte address 0x4 - core index']
  #allocation1 [shape = 'u32[72,128]{1,0:T(1,128)}', space=vmem, size = 0x9000, scoped, tag = 'internal scratch']
  #allocation2 [shape = 'f32[64,512]{1,0:T(8,128)}', space=vmem, size = 0x20000, scoped, tag = 'scratch operand']
  %s0 = inlined_call_operand.hbm [shape: f32[64,128], index: 0, kind: input, shape index: {}]
  %s1 = inlined_call_operand.hbm [shape: f32[128,512], index: 1, kind: input, shape index: {}]
  %s2 = inlined_call_operand.hbm [shape: f32[128,512], index: 2, kind: input, shape index: {}]
  %s3 = inlined_call_operand.hbm [shape: f32[1,512], index: 3, kind: input, shape index: {}]
  %s4 = inlined_call_operand.hbm [shape: f32[128,512], index: 4, kind: input, shape index: {}]
  %s5 = inlined_call_operand.hbm [shape: f32[128,512], index: 5, kind: input, shape index: {}]
  %s6 = inlined_call_operand.hbm [shape: f32[8,512], index: 6, kind: input, shape index: {}]
  %s7 = inlined_call_operand.hbm [shape: f32[128,128], index: 7, kind: input, shape index: {}]
  %s8 = inlined_call_operand.vmem [shape: f32[1,128], index: 8, kind: input, shape index: {}]
  %s9 = inlined_call_operand.hbm [shape: f32[8,128], index: 9, kind: output, shape index: {}]
  %s10 = sld [smem:[#allocation0]]
  $region78: #{tpu_custom_call.1} parent=0
    _
  %s12 = ssub.s32 1, %s10
  %s13 = scalar_select 0, %s12, %s10
  $region1: #{tpu_custom_call.1} parent=0
    #allocation3 [shape = 'u8[32768]{0}', space=vmem, size = 0x8000, scoped, tag = 'input window, operand 0, single buffered']
    #allocation4 [shape = 's32[1]{0}', space=sflag, size = 0x4, scoped, tag = 'scoped memory for tpu_custom_call.1']
    #allocation5 [shape = 's32[1]{0}', space=sflag, size = 0x4, scoped, tag = 'scoped memory for tpu_custom_call.1']
    #allocation6 [shape = 'u8[262144]{0}', space=vmem, size = 0x40000, scoped, tag = 'input window, operand 1, single buffered']
    #allocation7 [shape = 's32[1]{0}', space=sflag, size = 0x4, scoped, tag = 'scoped memory for tpu_custom_call.1']
    #allocation8 [shape = 'u8[262144]{0}', space=vmem, size = 0x40000, scoped, tag = 'input window, operand 2, single buffered']
    #allocation9 [shape = 'u8[2048]{0}', space=vmem, size = 0x800, scoped, tag = 'input window, operand 3, single buffered']
    #allocation10 [shape = 's32[1]{0}', space=sflag, size = 0x4, scoped, tag = 'scoped memory for tpu_custom_call.1']
    #allocation11 [shape = 'u8[262144]{0}', space=vmem, size = 0x40000, scoped, tag = 'input window, operand 4, single buffered']
    #allocation12 [shape = 'u8[262144]{0}', space=vmem, size = 0x40000, scoped, tag = 'input window, operand 5, single buffered']
    #allocation13 [shape = 's32[1]{0}', space=sflag, size = 0x4, scoped, tag = 'scoped memory for tpu_custom_call.1']
    #allocation14 [shape = 'u8[16384]{0}', space=vmem, size = 0x4000, scoped, tag = 'input window, operand 6, single buffered']
    #allocation15 [shape = 'u8[65536]{0}', space=vmem, size = 0x10000, scoped, tag = 'input window, operand 7, single buffered']
    #allocation16 [shape = 's32[1]{0}', space=sflag, size = 0x4, scoped, tag = 'scoped memory for tpu_custom_call.1']
    #allocation17 [shape = 'u8[4096]{0}', space=vmem, size = 0x1000, scoped, tag = 'output window, operand 0, single buffered']
    %14 = vsyncpa [#allocation4], 0
    %15 = vsyncpa [#allocation7], 0
    %16 = vsyncpa [#allocation10], 0
    %17 = vsyncpa [#allocation13], 0
    %18 = vsyncpa [#allocation16], 0
    %19 = vsyncpa [#allocation5], 0
    // Predicated region
    $region2: #{tpu_custom_call.1} parent=1 // pred_check
      _
    $region3: #{tpu_custom_call.1} parent=1 // pred_check_branch
      %21 = sbr.rel (0) target = $region5
    $region4: #{tpu_custom_call.1} parent=1 // pred_region
      %23 = vsyncadd [#allocation4], 0
      %s24 = sshll.u32 %s0, 4
      %s25 = int_to_ptr.hbm [resolvable:$true] %s24
      %s26 = sshll.u32 [#allocation3], 4
      %s27 = int_to_ptr.vmem [resolvable:$true] %s26
      %32 = dma.hbm_to_vmem [thread:$0]  %s25, 1024, %s27, [#allocation4], 128, 128, 8
    $region5: #{tpu_custom_call.1} parent=1 // pred_fallthru
      _
    // Predicated region
    $region6: #{tpu_custom_call.1} parent=1 // pred_check
      _
    $region7: #{tpu_custom_call.1} parent=1 // pred_check_branch
      %34 = sbr.rel (0) target = $region9
    $region8: #{tpu_custom_call.1} parent=1 // pred_region
      %36 = vsyncadd [#allocation7], 0
      %s37 = sshll.u32 %s1, 4
      %s38 = int_to_ptr.hbm [resolvable:$true] %s37
      %s39 = sshll.u32 [#allocation6], 4
      %s40 = int_to_ptr.vmem [resolvable:$true] %s39
      %45 = dma.hbm_to_vmem [thread:$0]  %s38, 8192, %s40, [#allocation7], 512, 512, 32
    $region9: #{tpu_custom_call.1} parent=1 // pred_fallthru
      _
    // Predicated region
    $region10: #{tpu_custom_call.1} parent=1 // pred_check
      _
    $region11: #{tpu_custom_call.1} parent=1 // pred_check_branch
      %47 = sbr.rel (0) target = $region13
    $region12: #{tpu_custom_call.1} parent=1 // pred_region
      %49 = vsyncadd [#allocation7], 0
      %s50 = sshll.u32 %s2, 4
      %s51 = int_to_ptr.hbm [resolvable:$true] %s50
      %s52 = sshll.u32 [#allocation8], 4
      %s53 = int_to_ptr.vmem [resolvable:$true] %s52
      %58 = dma.hbm_to_vmem [thread:$0]  %s51, 8192, %s53, [#allocation7], 512, 512, 32
    $region13: #{tpu_custom_call.1} parent=1 // pred_fallthru
      _
    // Predicated region
    $region14: #{tpu_custom_call.1} parent=1 // pred_check
      _
    $region15: #{tpu_custom_call.1} parent=1 // pred_check_branch
      %60 = sbr.rel (0) target = $region17
    $region16: #{tpu_custom_call.1} parent=1 // pred_region
      %62 = vsyncadd [#allocation10], 0
      %s64 = sshll.u32 %s3, 4
      %s65 = int_to_ptr.hbm [resolvable:$true] %s64
      %s66 = sshll.u32 [#allocation9], 4
      %s67 = int_to_ptr.vmem [resolvable:$true] %s66
      %69 = dma.hbm_to_vmem [thread:$0]  %s65, 64, %s67, [#allocation10]
    $region17: #{tpu_custom_call.1} parent=1 // pred_fallthru
      _
    // Predicated region
    $region18: #{tpu_custom_call.1} parent=1 // pred_check
      _
    $region19: #{tpu_custom_call.1} parent=1 // pred_check_branch
      %71 = sbr.rel (0) target = $region21
    $region20: #{tpu_custom_call.1} parent=1 // pred_region
      %73 = vsyncadd [#allocation10], 0
      %s74 = sshll.u32 %s4, 4
      %s75 = int_to_ptr.hbm [resolvable:$true] %s74
      %s76 = sshll.u32 [#allocation11], 4
      %s77 = int_to_ptr.vmem [resolvable:$true] %s76
      %82 = dma.hbm_to_vmem [thread:$0]  %s75, 8192, %s77, [#allocation10], 512, 512, 32
    $region21: #{tpu_custom_call.1} parent=1 // pred_fallthru
      _
    // Predicated region
    $region22: #{tpu_custom_call.1} parent=1 // pred_check
      _
    $region23: #{tpu_custom_call.1} parent=1 // pred_check_branch
      %84 = sbr.rel (0) target = $region25
    $region24: #{tpu_custom_call.1} parent=1 // pred_region
      %86 = vsyncadd [#allocation13], 0
      %s87 = sshll.u32 %s5, 4
      %s88 = int_to_ptr.hbm [resolvable:$true] %s87
      %s89 = sshll.u32 [#allocation12], 4
      %s90 = int_to_ptr.vmem [resolvable:$true] %s89
      %95 = dma.hbm_to_vmem [thread:$0]  %s88, 8192, %s90, [#allocation13], 512, 512, 32
    $region25: #{tpu_custom_call.1} parent=1 // pred_fallthru
      _
    // Predicated region
    $region26: #{tpu_custom_call.1} parent=1 // pred_check
      _
    $region27: #{tpu_custom_call.1} parent=1 // pred_check_branch
      %97 = sbr.rel (0) target = $region29
    $region28: #{tpu_custom_call.1} parent=1 // pred_region
      %99 = vsyncadd [#allocation13], 0
      %s101 = sshll.u32 %s6, 4
      %s102 = int_to_ptr.hbm [resolvable:$true] %s101
      %s103 = sshll.u32 [#allocation14], 4
      %s104 = int_to_ptr.vmem [resolvable:$true] %s103
      %106 = dma.hbm_to_vmem [thread:$0]  %s102, 512, %s104, [#allocation13]
    $region29: #{tpu_custom_call.1} parent=1 // pred_fallthru
      _
    // Predicated region
    $region30: #{tpu_custom_call.1} parent=1 // pred_check
      _
    $region31: #{tpu_custom_call.1} parent=1 // pred_check_branch
      %108 = sbr.rel (0) target = $region33
    $region32: #{tpu_custom_call.1} parent=1 // pred_region
      %110 = vsyncadd [#allocation16], 0
      %s111 = sshll.u32 %s7, 4
      %s112 = int_to_ptr.hbm [resolvable:$true] %s111
      %s113 = sshll.u32 [#allocation15], 4
      %s114 = int_to_ptr.vmem [resolvable:$true] %s113
      %119 = dma.hbm_to_vmem [thread:$0]  %s112, 2048, %s114, [#allocation16], 128, 128, 8
    $region33: #{tpu_custom_call.1} parent=1 // pred_fallthru
      _
    // Predicated region
    $region34: #{tpu_custom_call.1} parent=1 // pred_check
      _
    $region35: #{tpu_custom_call.1} parent=1 // pred_check_branch
      %121 = sbr.rel (0) target = $region37
    $region36: #{tpu_custom_call.1} parent=1 // pred_region
      _
    $region37: #{tpu_custom_call.1} parent=1 // pred_fallthru
      _
    // Predicated region
    $region38: #{tpu_custom_call.1} parent=1 // pred_check
      _
    $region39: #{tpu_custom_call.1} parent=1 // pred_check_branch
      %123 = sbr.rel (0) target = $region41
    $region40: #{tpu_custom_call.1} parent=1 // pred_region
      %125 = dma.done [#allocation4], 1024
    $region41: #{tpu_custom_call.1} parent=1 // pred_fallthru
      _
    // Predicated region
    $region42: #{tpu_custom_call.1} parent=1 // pred_check
      _
    $region43: #{tpu_custom_call.1} parent=1 // pred_check_branch
      %127 = sbr.rel (0) target = $region45
    $region44: #{tpu_custom_call.1} parent=1 // pred_region
      %129 = dma.done [#allocation7], 8192
    $region45: #{tpu_custom_call.1} parent=1 // pred_fallthru
      _
    // Predicated region
    $region46: #{tpu_custom_call.1} parent=1 // pred_check
      _
    $region47: #{tpu_custom_call.1} parent=1 // pred_check_branch
      %131 = sbr.rel (0) target = $region49
    $region48: #{tpu_custom_call.1} parent=1 // pred_region
      %133 = dma.done [#allocation7], 8192
    $region49: #{tpu_custom_call.1} parent=1 // pred_fallthru
      _
    // Predicated region
    $region50: #{tpu_custom_call.1} parent=1 // pred_check
      _
    $region51: #{tpu_custom_call.1} parent=1 // pred_check_branch
      %135 = sbr.rel (0) target = $region53
    $region52: #{tpu_custom_call.1} parent=1 // pred_region
      %137 = dma.done [#allocation10], 64
    $region53: #{tpu_custom_call.1} parent=1 // pred_fallthru
      _
    // Predicated region
    $region54: #{tpu_custom_call.1} parent=1 // pred_check
      _
    $region55: #{tpu_custom_call.1} parent=1 // pred_check_branch
      %139 = sbr.rel (0) target = $region57
    $region56: #{tpu_custom_call.1} parent=1 // pred_region
      %141 = dma.done [#allocation10], 8192
    $region57: #{tpu_custom_call.1} parent=1 // pred_fallthru
      _
    // Predicated region
    $region58: #{tpu_custom_call.1} parent=1 // pred_check
      _
    $region59: #{tpu_custom_call.1} parent=1 // pred_check_branch
      %143 = sbr.rel (0) target = $region61
    $region60: #{tpu_custom_call.1} parent=1 // pred_region
      %145 = dma.done [#allocation13], 8192
    $region61: #{tpu_custom_call.1} parent=1 // pred_fallthru
      _
    // Predicated region
    $region62: #{tpu_custom_call.1} parent=1 // pred_check
      _
    $region63: #{tpu_custom_call.1} parent=1 // pred_check_branch
      %147 = sbr.rel (0) target = $region65
    $region64: #{tpu_custom_call.1} parent=1 // pred_region
      %149 = dma.done [#allocation13], 512
    $region65: #{tpu_custom_call.1} parent=1 // pred_fallthru
      _
    // Predicated region
    $region66: #{tpu_custom_call.1} parent=1 // pred_check
      _
    $region67: #{tpu_custom_call.1} parent=1 // pred_check_branch
      %151 = sbr.rel (0) target = $region69
    $region68: #{tpu_custom_call.1} parent=1 // pred_region
      %153 = dma.done [#allocation16], 2048
    $region69: #{tpu_custom_call.1} parent=1 // pred_fallthru
      _
    %v154 = vld [vmem:[#allocation3] sm:$0xff]
    %v155 = vld [vmem:[#allocation3 + $0x8] sm:$0xff]
    %v156 = vld [vmem:[#allocation3 + $0x10] sm:$0xff]
    %v157 = vld [vmem:[#allocation3 + $0x18] sm:$0xff]
    %v158 = vld [vmem:[#allocation3 + $0x20] sm:$0xff]
    %v159 = vld [vmem:[#allocation3 + $0x28] sm:$0xff]
    %v160 = vld [vmem:[#allocation3 + $0x30] sm:$0xff]
    %v161 = vld [vmem:[#allocation3 + $0x38] sm:$0xff]
    %v162 = vld [vmem:[#allocation6] sm:$0xff]
    %v163 = vld [vmem:[#allocation6 + $0x8] sm:$0xff]
    %v164 = vld [vmem:[#allocation6 + $0x10] sm:$0xff]
    %v165 = vld [vmem:[#allocation6 + $0x18] sm:$0xff]
    %v166 = vld [vmem:[#allocation6 + $0x20] sm:$0xff]
    %v167 = vld [vmem:[#allocation6 + $0x28] sm:$0xff]
    %v168 = vld [vmem:[#allocation6 + $0x30] sm:$0xff]
    %v169 = vld [vmem:[#allocation6 + $0x38] sm:$0xff]
    %v170 = vld [vmem:[#allocation6 + $0x40] sm:$0xff]
    %v171 = vld [vmem:[#allocation6 + $0x48] sm:$0xff]
    %v172 = vld [vmem:[#allocation6 + $0x50] sm:$0xff]
    %v173 = vld [vmem:[#allocation6 + $0x58] sm:$0xff]
    %v174 = vld [vmem:[#allocation6 + $0x60] sm:$0xff]
    %v175 = vld [vmem:[#allocation6 + $0x68] sm:$0xff]
    %v176 = vld [vmem:[#allocation6 + $0x70] sm:$0xff]
    %v177 = vld [vmem:[#allocation6 + $0x78] sm:$0xff]
    %v178 = vld [vmem:[#allocation6 + $0x80] sm:$0xff]
    %v179 = vld [vmem:[#allocation6 + $0x88] sm:$0xff]
    %v180 = vld [vmem:[#allocation6 + $0x90] sm:$0xff]
    %v181 = vld [vmem:[#allocation6 + $0x98] sm:$0xff]
    %v182 = vld [vmem:[#allocation6 + $0xa0] sm:$0xff]
    %v183 = vld [vmem:[#allocation6 + $0xa8] sm:$0xff]
    %v184 = vld [vmem:[#allocation6 + $0xb0] sm:$0xff]
    %v185 = vld [vmem:[#allocation6 + $0xb8] sm:$0xff]
    %v186 = vld [vmem:[#allocation6 + $0xc0] sm:$0xff]
    %v187 = vld [vmem:[#allocation6 + $0xc8] sm:$0xff]
    %v188 = vld [vmem:[#allocation6 + $0xd0] sm:$0xff]
    %v189 = vld [vmem:[#allocation6 + $0xd8] sm:$0xff]
    %v190 = vld [vmem:[#allocation6 + $0xe0] sm:$0xff]
    %v191 = vld [vmem:[#allocation6 + $0xe8] sm:$0xff]
    %v192 = vld [vmem:[#allocation6 + $0xf0] sm:$0xff]
    %v193 = vld [vmem:[#allocation6 + $0xf8] sm:$0xff]
    %v194 = vld [vmem:[#allocation6 + $0x100] sm:$0xff]
    %v195 = vld [vmem:[#allocation6 + $0x108] sm:$0xff]
    %v196 = vld [vmem:[#allocation6 + $0x110] sm:$0xff]
    %v197 = vld [vmem:[#allocation6 + $0x118] sm:$0xff]
    %v198 = vld [vmem:[#allocation6 + $0x120] sm:$0xff]
    %v199 = vld [vmem:[#allocation6 + $0x128] sm:$0xff]
    %v200 = vld [vmem:[#allocation6 + $0x130] sm:$0xff]
    %v201 = vld [vmem:[#allocation6 + $0x138] sm:$0xff]
    %v202 = vld [vmem:[#allocation6 + $0x140] sm:$0xff]
    %v203 = vld [vmem:[#allocation6 + $0x148] sm:$0xff]
    %v204 = vld [vmem:[#allocation6 + $0x150] sm:$0xff]
    %v205 = vld [vmem:[#allocation6 + $0x158] sm:$0xff]
    %v206 = vld [vmem:[#allocation6 + $0x160] sm:$0xff]
    %v207 = vld [vmem:[#allocation6 + $0x168] sm:$0xff]
    %v208 = vld [vmem:[#allocation6 + $0x170] sm:$0xff]
    %v209 = vld [vmem:[#allocation6 + $0x178] sm:$0xff]
    %v210 = vld [vmem:[#allocation6 + $0x180] sm:$0xff]
    %v211 = vld [vmem:[#allocation6 + $0x188] sm:$0xff]
    %v212 = vld [vmem:[#allocation6 + $0x190] sm:$0xff]
    %v213 = vld [vmem:[#allocation6 + $0x198] sm:$0xff]
    %v214 = vld [vmem:[#allocation6 + $0x1a0] sm:$0xff]
    %v215 = vld [vmem:[#allocation6 + $0x1a8] sm:$0xff]
    %v216 = vld [vmem:[#allocation6 + $0x1b0] sm:$0xff]
    %v217 = vld [vmem:[#allocation6 + $0x1b8] sm:$0xff]
    %v218 = vld [vmem:[#allocation6 + $0x1c0] sm:$0xff]
    %v219 = vld [vmem:[#allocation6 + $0x1c8] sm:$0xff]
    %v220 = vld [vmem:[#allocation6 + $0x1d0] sm:$0xff]
    %v221 = vld [vmem:[#allocation6 + $0x1d8] sm:$0xff]
    %v222 = vld [vmem:[#allocation6 + $0x1e0] sm:$0xff]
    %v223 = vld [vmem:[#allocation6 + $0x1e8] sm:$0xff]
    %v224 = vld [vmem:[#allocation6 + $0x1f0] sm:$0xff]
    %v225 = vld [vmem:[#allocation6 + $0x1f8] sm:$0xff]
    %v226 = vld [vmem:[#allocation9] sm:$0xf]
    %v228 = vperm.slane %v226, 0
    %v229 = vperm.slane %v226, 1
    %v230 = vperm.slane %v226, 2
    %v231 = vperm.slane %v226, 3
    %236 = vmatpush.msra.mxu0 %v222
    %237 = vmatpush.msra.mxu0 %v218
    %238 = vmatpush.msra.mxu0 %v214
    %239 = vmatpush.msra.mxu0 %v210
    %240 = vmatpush.msra.mxu0 %v206
    %241 = vmatpush.msra.mxu0 %v202
    %242 = vmatpush.msra.mxu0 %v198
    %243 = vmatpush.msra.mxu0 %v194
    %244 = vmatpush.msra.mxu0 %v190
    %245 = vmatpush.msra.mxu0 %v186
    %246 = vmatpush.msra.mxu0 %v182
    %247 = vmatpush.msra.mxu0 %v178
    %248 = vmatpush.msra.mxu0 %v174
    %249 = vmatpush.msra.mxu0 %v170
    %250 = vmatpush.msra.mxu0 %v166
    %251 = vmatpush.msra.mxu0 %v162
    %252 = vmatmul.f32.gmra.mxu0 %v154
    %v253 = vpop.f32.mrf.mxu0
    %v254 = vadd.f32 %v228, %v253
    %255 = vmatmul.f32.gmra.mxu0 %v155
    %v256 = vpop.f32.mrf.mxu0
    %v257 = vadd.f32 %v228, %v256
    %258 = vmatmul.f32.gmra.mxu0 %v156
    %v259 = vpop.f32.mrf.mxu0
    %v260 = vadd.f32 %v228, %v259
    %261 = vmatmul.f32.gmra.mxu0 %v157
    %v262 = vpop.f32.mrf.mxu0
    %v263 = vadd.f32 %v228, %v262
    %264 = vmatmul.f32.gmra.mxu0 %v158
    %v265 = vpop.f32.mrf.mxu0
    %v266 = vadd.f32 %v228, %v265
    %267 = vmatmul.f32.gmra.mxu0 %v159
    %v268 = vpop.f32.mrf.mxu0
    %v269 = vadd.f32 %v228, %v268
    %270 = vmatmul.f32.gmra.mxu0 %v160
    %v271 = vpop.f32.mrf.mxu0
    %v272 = vadd.f32 %v228, %v271
    %273 = vmatmul.f32.gmra.mxu0 %v161
    %v274 = vpop.f32.mrf.mxu0
    %v275 = vadd.f32 %v228, %v274
    %276 = vdwg.mxu0
    %277 = vmatpush.msra.mxu0 %v223
    %278 = vmatpush.msra.mxu0 %v219
    %279 = vmatpush.msra.mxu0 %v215
    %280 = vmatpush.msra.mxu0 %v211
    %281 = vmatpush.msra.mxu0 %v207
    %282 = vmatpush.msra.mxu0 %v203
    %283 = vmatpush.msra.mxu0 %v199
    %284 = vmatpush.msra.mxu0 %v195
    %285 = vmatpush.msra.mxu0 %v191
    %286 = vmatpush.msra.mxu0 %v187
    %287 = vmatpush.msra.mxu0 %v183
    %288 = vmatpush.msra.mxu0 %v179
    %289 = vmatpush.msra.mxu0 %v175
    %290 = vmatpush.msra.mxu0 %v171
    %291 = vmatpush.msra.mxu0 %v167
    %292 = vmatpush.msra.mxu0 %v163
    %293 = vmatmul.f32.gmra.mxu0 %v154
    %v294 = vpop.f32.mrf.mxu0
    %v295 = vadd.f32 %v229, %v294
    %296 = vmatmul.f32.gmra.mxu0 %v155
    %v297 = vpop.f32.mrf.mxu0
    %v298 = vadd.f32 %v229, %v297
    %299 = vmatmul.f32.gmra.mxu0 %v156
    %v300 = vpop.f32.mrf.mxu0
    %v301 = vadd.f32 %v229, %v300
    %302 = vmatmul.f32.gmra.mxu0 %v157
    %v303 = vpop.f32.mrf.mxu0
    %v304 = vadd.f32 %v229, %v303
    %305 = vmatmul.f32.gmra.mxu0 %v158
    %v306 = vpop.f32.mrf.mxu0
    %v307 = vadd.f32 %v229, %v306
    %308 = vmatmul.f32.gmra.mxu0 %v159
    %v309 = vpop.f32.mrf.mxu0
    %v310 = vadd.f32 %v229, %v309
    %311 = vmatmul.f32.gmra.mxu0 %v160
    %v312 = vpop.f32.mrf.mxu0
    %v313 = vadd.f32 %v229, %v312
    %314 = vmatmul.f32.gmra.mxu0 %v161
    %v315 = vpop.f32.mrf.mxu0
    %v316 = vadd.f32 %v229, %v315
    %317 = vdwg.mxu0
    %318 = vmatpush.msra.mxu0 %v224
    %319 = vmatpush.msra.mxu0 %v220
    %320 = vmatpush.msra.mxu0 %v216
    %321 = vmatpush.msra.mxu0 %v212
    %322 = vmatpush.msra.mxu0 %v208
    %323 = vmatpush.msra.mxu0 %v204
    %324 = vmatpush.msra.mxu0 %v200
    %325 = vmatpush.msra.mxu0 %v196
    %326 = vmatpush.msra.mxu0 %v192
    %327 = vmatpush.msra.mxu0 %v188
    %328 = vmatpush.msra.mxu0 %v184
    %329 = vmatpush.msra.mxu0 %v180
    %330 = vmatpush.msra.mxu0 %v176
    %331 = vmatpush.msra.mxu0 %v172
    %332 = vmatpush.msra.mxu0 %v168
    %333 = vmatpush.msra.mxu0 %v164
    %334 = vmatmul.f32.gmra.mxu0 %v154
    %v335 = vpop.f32.mrf.mxu0
    %v336 = vadd.f32 %v230, %v335
    %337 = vmatmul.f32.gmra.mxu0 %v155
    %v338 = vpop.f32.mrf.mxu0
    %v339 = vadd.f32 %v230, %v338
    %340 = vmatmul.f32.gmra.mxu0 %v156
    %v341 = vpop.f32.mrf.mxu0
    %v342 = vadd.f32 %v230, %v341
    %343 = vmatmul.f32.gmra.mxu0 %v157
    %v344 = vpop.f32.mrf.mxu0
    %v345 = vadd.f32 %v230, %v344
    %346 = vmatmul.f32.gmra.mxu0 %v158
    %v347 = vpop.f32.mrf.mxu0
    %v348 = vadd.f32 %v230, %v347
    %349 = vmatmul.f32.gmra.mxu0 %v159
    %v350 = vpop.f32.mrf.mxu0
    %v351 = vadd.f32 %v230, %v350
    %352 = vmatmul.f32.gmra.mxu0 %v160
    %v353 = vpop.f32.mrf.mxu0
    %v354 = vadd.f32 %v230, %v353
    %355 = vmatmul.f32.gmra.mxu0 %v161
    %v356 = vpop.f32.mrf.mxu0
    %v357 = vadd.f32 %v230, %v356
    %358 = vdwg.mxu0
    %359 = vmatpush.msra.mxu0 %v225
    %360 = vmatpush.msra.mxu0 %v221
    %361 = vmatpush.msra.mxu0 %v217
    %362 = vmatpush.msra.mxu0 %v213
    %363 = vmatpush.msra.mxu0 %v209
    %364 = vmatpush.msra.mxu0 %v205
    %365 = vmatpush.msra.mxu0 %v201
    %366 = vmatpush.msra.mxu0 %v197
    %367 = vmatpush.msra.mxu0 %v193
    %368 = vmatpush.msra.mxu0 %v189
    %369 = vmatpush.msra.mxu0 %v185
    %370 = vmatpush.msra.mxu0 %v181
    %371 = vmatpush.msra.mxu0 %v177
    %372 = vmatpush.msra.mxu0 %v173
    %373 = vmatpush.msra.mxu0 %v169
    %374 = vmatpush.msra.mxu0 %v165
    %375 = vmatmul.f32.gmra.mxu0 %v154
    %v376 = vpop.f32.mrf.mxu0
    %v377 = vadd.f32 %v231, %v376
    %378 = vmatmul.f32.gmra.mxu0 %v155
    %v379 = vpop.f32.mrf.mxu0
    %v380 = vadd.f32 %v231, %v379
    %381 = vmatmul.f32.gmra.mxu0 %v156
    %v382 = vpop.f32.mrf.mxu0
    %v383 = vadd.f32 %v231, %v382
    %384 = vmatmul.f32.gmra.mxu0 %v157
    %v385 = vpop.f32.mrf.mxu0
    %v386 = vadd.f32 %v231, %v385
    %387 = vmatmul.f32.gmra.mxu0 %v158
    %v388 = vpop.f32.mrf.mxu0
    %v389 = vadd.f32 %v231, %v388
    %390 = vmatmul.f32.gmra.mxu0 %v159
    %v391 = vpop.f32.mrf.mxu0
    %v392 = vadd.f32 %v231, %v391
    %393 = vmatmul.f32.gmra.mxu0 %v160
    %v394 = vpop.f32.mrf.mxu0
    %v395 = vadd.f32 %v231, %v394
    %396 = vmatmul.f32.gmra.mxu0 %v161
    %v397 = vpop.f32.mrf.mxu0
    %v398 = vadd.f32 %v231, %v397
    %399 = vdwg.mxu0
    %400 = vst [vmem:[#allocation2] sm:$0xff] %v254
    %401 = vst [vmem:[#allocation2 + $0x8] sm:$0xff] %v295
    %402 = vst [vmem:[#allocation2 + $0x10] sm:$0xff] %v336
    %403 = vst [vmem:[#allocation2 + $0x18] sm:$0xff] %v377
    %404 = vst [vmem:[#allocation2 + $0x20] sm:$0xff] %v257
    %405 = vst [vmem:[#allocation2 + $0x28] sm:$0xff] %v298
    %406 = vst [vmem:[#allocation2 + $0x30] sm:$0xff] %v339
    %407 = vst [vmem:[#allocation2 + $0x38] sm:$0xff] %v380
    %408 = vst [vmem:[#allocation2 + $0x40] sm:$0xff] %v260
    %409 = vst [vmem:[#allocation2 + $0x48] sm:$0xff] %v301
    %410 = vst [vmem:[#allocation2 + $0x50] sm:$0xff] %v342
    %411 = vst [vmem:[#allocation2 + $0x58] sm:$0xff] %v383
    %412 = vst [vmem:[#allocation2 + $0x60] sm:$0xff] %v263
    %413 = vst [vmem:[#allocation2 + $0x68] sm:$0xff] %v304
    %414 = vst [vmem:[#allocation2 + $0x70] sm:$0xff] %v345
    %415 = vst [vmem:[#allocation2 + $0x78] sm:$0xff] %v386
    %416 = vst [vmem:[#allocation2 + $0x80] sm:$0xff] %v266
    %417 = vst [vmem:[#allocation2 + $0x88] sm:$0xff] %v307
    %418 = vst [vmem:[#allocation2 + $0x90] sm:$0xff] %v348
    %419 = vst [vmem:[#allocation2 + $0x98] sm:$0xff] %v389
    %420 = vst [vmem:[#allocation2 + $0xa0] sm:$0xff] %v269
    %421 = vst [vmem:[#allocation2 + $0xa8] sm:$0xff] %v310
    %422 = vst [vmem:[#allocation2 + $0xb0] sm:$0xff] %v351
    %423 = vst [vmem:[#allocation2 + $0xb8] sm:$0xff] %v392
    %424 = vst [vmem:[#allocation2 + $0xc0] sm:$0xff] %v272
    %425 = vst [vmem:[#allocation2 + $0xc8] sm:$0xff] %v313
    %426 = vst [vmem:[#allocation2 + $0xd0] sm:$0xff] %v354
    %427 = vst [vmem:[#allocation2 + $0xd8] sm:$0xff] %v395
    %428 = vst [vmem:[#allocation2 + $0xe0] sm:$0xff] %v275
    %429 = vst [vmem:[#allocation2 + $0xe8] sm:$0xff] %v316
    %430 = vst [vmem:[#allocation2 + $0xf0] sm:$0xff] %v357
    %431 = vst [vmem:[#allocation2 + $0xf8] sm:$0xff] %v398
    %v432 = vld [vmem:[#allocation14] sm:$0xff]
    %v433 = vld [vmem:[#allocation14 + $0x8] sm:$0xff]
    %v434 = vld [vmem:[#allocation14 + $0x10] sm:$0xff]
    %v435 = vld [vmem:[#allocation14 + $0x18] sm:$0xff]
    %v436 = vld [vmem:[#allocation12] sm:$0xff]
    %v437 = vld [vmem:[#allocation12 + $0x8] sm:$0xff]
    %v438 = vld [vmem:[#allocation12 + $0x10] sm:$0xff]
    %v439 = vld [vmem:[#allocation12 + $0x18] sm:$0xff]
    %v440 = vld [vmem:[#allocation12 + $0x20] sm:$0xff]
    %v441 = vld [vmem:[#allocation12 + $0x28] sm:$0xff]
    %v442 = vld [vmem:[#allocation12 + $0x30] sm:$0xff]
    %v443 = vld [vmem:[#allocation12 + $0x38] sm:$0xff]
    %v444 = vld [vmem:[#allocation12 + $0x40] sm:$0xff]
    %v445 = vld [vmem:[#allocation12 + $0x48] sm:$0xff]
    %v446 = vld [vmem:[#allocation12 + $0x50] sm:$0xff]
    %v447 = vld [vmem:[#allocation12 + $0x58] sm:$0xff]
    %v448 = vld [vmem:[#allocation12 + $0x60] sm:$0xff]
    %v449 = vld [vmem:[#allocation12 + $0x68] sm:$0xff]
    %v450 = vld [vmem:[#allocation12 + $0x70] sm:$0xff]
    %v451 = vld [vmem:[#allocation12 + $0x78] sm:$0xff]
    %v452 = vld [vmem:[#allocation12 + $0x80] sm:$0xff]
    %v453 = vld [vmem:[#allocation12 + $0x88] sm:$0xff]
    %v454 = vld [vmem:[#allocation12 + $0x90] sm:$0xff]
    %v455 = vld [vmem:[#allocation12 + $0x98] sm:$0xff]
    %v456 = vld [vmem:[#allocation12 + $0xa0] sm:$0xff]
    %v457 = vld [vmem:[#allocation12 + $0xa8] sm:$0xff]
    %v458 = vld [vmem:[#allocation12 + $0xb0] sm:$0xff]
    %v459 = vld [vmem:[#allocation12 + $0xb8] sm:$0xff]
    %v460 = vld [vmem:[#allocation12 + $0xc0] sm:$0xff]
    %v461 = vld [vmem:[#allocation12 + $0xc8] sm:$0xff]
    %v462 = vld [vmem:[#allocation12 + $0xd0] sm:$0xff]
    %v463 = vld [vmem:[#allocation12 + $0xd8] sm:$0xff]
    %v464 = vld [vmem:[#allocation12 + $0xe0] sm:$0xff]
    %v465 = vld [vmem:[#allocation12 + $0xe8] sm:$0xff]
    %v466 = vld [vmem:[#allocation12 + $0xf0] sm:$0xff]
    %v467 = vld [vmem:[#allocation12 + $0xf8] sm:$0xff]
    %v468 = vld [vmem:[#allocation12 + $0x100] sm:$0xff]
    %v469 = vld [vmem:[#allocation12 + $0x108] sm:$0xff]
    %v470 = vld [vmem:[#allocation12 + $0x110] sm:$0xff]
    %v471 = vld [vmem:[#allocation12 + $0x118] sm:$0xff]
    %v472 = vld [vmem:[#allocation12 + $0x120] sm:$0xff]
    %v473 = vld [vmem:[#allocation12 + $0x128] sm:$0xff]
    %v474 = vld [vmem:[#allocation12 + $0x130] sm:$0xff]
    %v475 = vld [vmem:[#allocation12 + $0x138] sm:$0xff]
    %v476 = vld [vmem:[#allocation12 + $0x140] sm:$0xff]
    %v477 = vld [vmem:[#allocation12 + $0x148] sm:$0xff]
    %v478 = vld [vmem:[#allocation12 + $0x150] sm:$0xff]
    %v479 = vld [vmem:[#allocation12 + $0x158] sm:$0xff]
    %v480 = vld [vmem:[#allocation12 + $0x160] sm:$0xff]
    %v481 = vld [vmem:[#allocation12 + $0x168] sm:$0xff]
    %v482 = vld [vmem:[#allocation12 + $0x170] sm:$0xff]
    %v483 = vld [vmem:[#allocation12 + $0x178] sm:$0xff]
    %v484 = vld [vmem:[#allocation12 + $0x180] sm:$0xff]
    %v485 = vld [vmem:[#allocation12 + $0x188] sm:$0xff]
    %v486 = vld [vmem:[#allocation12 + $0x190] sm:$0xff]
    %v487 = vld [vmem:[#allocation12 + $0x198] sm:$0xff]
    %v488 = vld [vmem:[#allocation12 + $0x1a0] sm:$0xff]
    %v489 = vld [vmem:[#allocation12 + $0x1a8] sm:$0xff]
    %v490 = vld [vmem:[#allocation12 + $0x1b0] sm:$0xff]
    %v491 = vld [vmem:[#allocation12 + $0x1b8] sm:$0xff]
    %v492 = vld [vmem:[#allocation12 + $0x1c0] sm:$0xff]
    %v493 = vld [vmem:[#allocation12 + $0x1c8] sm:$0xff]
    %v494 = vld [vmem:[#allocation12 + $0x1d0] sm:$0xff]
    %v495 = vld [vmem:[#allocation12 + $0x1d8] sm:$0xff]
    %v496 = vld [vmem:[#allocation12 + $0x1e0] sm:$0xff]
    %v497 = vld [vmem:[#allocation12 + $0x1e8] sm:$0xff]
    %v498 = vld [vmem:[#allocation12 + $0x1f0] sm:$0xff]
    %v499 = vld [vmem:[#allocation12 + $0x1f8] sm:$0xff]
    %500 = vmatpush.msra.mxu0 %v496
    %501 = vmatpush.msra.mxu0 %v492
    %502 = vmatpush.msra.mxu0 %v488
    %503 = vmatpush.msra.mxu0 %v484
    %504 = vmatpush.msra.mxu0 %v480
    %505 = vmatpush.msra.mxu0 %v476
    %506 = vmatpush.msra.mxu0 %v472
    %507 = vmatpush.msra.mxu0 %v468
    %508 = vmatpush.msra.mxu0 %v464
    %509 = vmatpush.msra.mxu0 %v460
    %510 = vmatpush.msra.mxu0 %v456
    %511 = vmatpush.msra.mxu0 %v452
    %512 = vmatpush.msra.mxu0 %v448
    %513 = vmatpush.msra.mxu0 %v444
    %514 = vmatpush.msra.mxu0 %v440
    %515 = vmatpush.msra.mxu0 %v436
    %516 = vmatmul.f32.gmra.mxu0 0.0
    %v517 = vpop.f32.mrf.mxu0
    %v518 = vadd.f32 0.0, %v517
    %519 = vdwg.mxu0
    %520 = vmatpush.msra.mxu0 %v497
    %521 = vmatpush.msra.mxu0 %v493
    %522 = vmatpush.msra.mxu0 %v489
    %523 = vmatpush.msra.mxu0 %v485
    %524 = vmatpush.msra.mxu0 %v481
    %525 = vmatpush.msra.mxu0 %v477
    %526 = vmatpush.msra.mxu0 %v473
    %527 = vmatpush.msra.mxu0 %v469
    %528 = vmatpush.msra.mxu0 %v465
    %529 = vmatpush.msra.mxu0 %v461
    %530 = vmatpush.msra.mxu0 %v457
    %531 = vmatpush.msra.mxu0 %v453
    %532 = vmatpush.msra.mxu0 %v449
    %533 = vmatpush.msra.mxu0 %v445
    %534 = vmatpush.msra.mxu0 %v441
    %535 = vmatpush.msra.mxu0 %v437
    %536 = vmatmul.f32.gmra.mxu0 0.0
    %v537 = vpop.f32.mrf.mxu0
    %v538 = vadd.f32 0.0, %v537
    %539 = vdwg.mxu0
    %540 = vmatpush.msra.mxu0 %v498
    %541 = vmatpush.msra.mxu0 %v494
    %542 = vmatpush.msra.mxu0 %v490
    %543 = vmatpush.msra.mxu0 %v486
    %544 = vmatpush.msra.mxu0 %v482
    %545 = vmatpush.msra.mxu0 %v478
    %546 = vmatpush.msra.mxu0 %v474
    %547 = vmatpush.msra.mxu0 %v470
    %548 = vmatpush.msra.mxu0 %v466
    %549 = vmatpush.msra.mxu0 %v462
    %550 = vmatpush.msra.mxu0 %v458
    %551 = vmatpush.msra.mxu0 %v454
    %552 = vmatpush.msra.mxu0 %v450
    %553 = vmatpush.msra.mxu0 %v446
    %554 = vmatpush.msra.mxu0 %v442
    %555 = vmatpush.msra.mxu0 %v438
    %556 = vmatmul.f32.gmra.mxu0 0.0
    %v557 = vpop.f32.mrf.mxu0
    %v558 = vadd.f32 0.0, %v557
    %559 = vdwg.mxu0
    %560 = vmatpush.msra.mxu0 %v499
    %561 = vmatpush.msra.mxu0 %v495
    %562 = vmatpush.msra.mxu0 %v491
    %563 = vmatpush.msra.mxu0 %v487
    %564 = vmatpush.msra.mxu0 %v483
    %565 = vmatpush.msra.mxu0 %v479
    %566 = vmatpush.msra.mxu0 %v475
    %567 = vmatpush.msra.mxu0 %v471
    %568 = vmatpush.msra.mxu0 %v467
    %569 = vmatpush.msra.mxu0 %v463
    %570 = vmatpush.msra.mxu0 %v459
    %571 = vmatpush.msra.mxu0 %v455
    %572 = vmatpush.msra.mxu0 %v451
    %573 = vmatpush.msra.mxu0 %v447
    %574 = vmatpush.msra.mxu0 %v443
    %575 = vmatpush.msra.mxu0 %v439
    %576 = vmatmul.f32.gmra.mxu0 0.0
    %v577 = vpop.f32.mrf.mxu0
    %v578 = vadd.f32 0.0, %v577
    %579 = vdwg.mxu0
    %v580 = vld [vmem:[#allocation8] sm:$0xff]
    %v581 = vld [vmem:[#allocation8 + $0x8] sm:$0xff]
    %v582 = vld [vmem:[#allocation8 + $0x10] sm:$0xff]
    %v583 = vld [vmem:[#allocation8 + $0x18] sm:$0xff]
    %v584 = vld [vmem:[#allocation8 + $0x20] sm:$0xff]
    %v585 = vld [vmem:[#allocation8 + $0x28] sm:$0xff]
    %v586 = vld [vmem:[#allocation8 + $0x30] sm:$0xff]
    %v587 = vld [vmem:[#allocation8 + $0x38] sm:$0xff]
    %v588 = vld [vmem:[#allocation8 + $0x40] sm:$0xff]
    %v589 = vld [vmem:[#allocation8 + $0x48] sm:$0xff]
    %v590 = vld [vmem:[#allocation8 + $0x50] sm:$0xff]
    %v591 = vld [vmem:[#allocation8 + $0x58] sm:$0xff]
    %v592 = vld [vmem:[#allocation8 + $0x60] sm:$0xff]
    %v593 = vld [vmem:[#allocation8 + $0x68] sm:$0xff]
    %v594 = vld [vmem:[#allocation8 + $0x70] sm:$0xff]
    %v595 = vld [vmem:[#allocation8 + $0x78] sm:$0xff]
    %v596 = vld [vmem:[#allocation8 + $0x80] sm:$0xff]
    %v597 = vld [vmem:[#allocation8 + $0x88] sm:$0xff]
    %v598 = vld [vmem:[#allocation8 + $0x90] sm:$0xff]
    %v599 = vld [vmem:[#allocation8 + $0x98] sm:$0xff]
    %v600 = vld [vmem:[#allocation8 + $0xa0] sm:$0xff]
    %v601 = vld [vmem:[#allocation8 + $0xa8] sm:$0xff]
    %v602 = vld [vmem:[#allocation8 + $0xb0] sm:$0xff]
    %v603 = vld [vmem:[#allocation8 + $0xb8] sm:$0xff]
    %v604 = vld [vmem:[#allocation8 + $0xc0] sm:$0xff]
    %v605 = vld [vmem:[#allocation8 + $0xc8] sm:$0xff]
    %v606 = vld [vmem:[#allocation8 + $0xd0] sm:$0xff]
    %v607 = vld [vmem:[#allocation8 + $0xd8] sm:$0xff]
    %v608 = vld [vmem:[#allocation8 + $0xe0] sm:$0xff]
    %v609 = vld [vmem:[#allocation8 + $0xe8] sm:$0xff]
    %v610 = vld [vmem:[#allocation8 + $0xf0] sm:$0xff]
    %v611 = vld [vmem:[#allocation8 + $0xf8] sm:$0xff]
    %v612 = vld [vmem:[#allocation8 + $0x100] sm:$0xff]
    %v613 = vld [vmem:[#allocation8 + $0x108] sm:$0xff]
    %v614 = vld [vmem:[#allocation8 + $0x110] sm:$0xff]
    %v615 = vld [vmem:[#allocation8 + $0x118] sm:$0xff]
    %v616 = vld [vmem:[#allocation8 + $0x120] sm:$0xff]
    %v617 = vld [vmem:[#allocation8 + $0x128] sm:$0xff]
    %v618 = vld [vmem:[#allocation8 + $0x130] sm:$0xff]
    %v619 = vld [vmem:[#allocation8 + $0x138] sm:$0xff]
    %v620 = vld [vmem:[#allocation8 + $0x140] sm:$0xff]
    %v621 = vld [vmem:[#allocation8 + $0x148] sm:$0xff]
    %v622 = vld [vmem:[#allocation8 + $0x150] sm:$0xff]
    %v623 = vld [vmem:[#allocation8 + $0x158] sm:$0xff]
    %v624 = vld [vmem:[#allocation8 + $0x160] sm:$0xff]
    %v625 = vld [vmem:[#allocation8 + $0x168] sm:$0xff]
    %v626 = vld [vmem:[#allocation8 + $0x170] sm:$0xff]
    %v627 = vld [vmem:[#allocation8 + $0x178] sm:$0xff]
    %v628 = vld [vmem:[#allocation8 + $0x180] sm:$0xff]
    %v629 = vld [vmem:[#allocation8 + $0x188] sm:$0xff]
    %v630 = vld [vmem:[#allocation8 + $0x190] sm:$0xff]
    %v631 = vld [vmem:[#allocation8 + $0x198] sm:$0xff]
    %v632 = vld [vmem:[#allocation8 + $0x1a0] sm:$0xff]
    %v633 = vld [vmem:[#allocation8 + $0x1a8] sm:$0xff]
    %v634 = vld [vmem:[#allocation8 + $0x1b0] sm:$0xff]
    %v635 = vld [vmem:[#allocation8 + $0x1b8] sm:$0xff]
    %v636 = vld [vmem:[#allocation8 + $0x1c0] sm:$0xff]
    %v637 = vld [vmem:[#allocation8 + $0x1c8] sm:$0xff]
    %v638 = vld [vmem:[#allocation8 + $0x1d0] sm:$0xff]
    %v639 = vld [vmem:[#allocation8 + $0x1d8] sm:$0xff]
    %v640 = vld [vmem:[#allocation8 + $0x1e0] sm:$0xff]
    %v641 = vld [vmem:[#allocation8 + $0x1e8] sm:$0xff]
    %v642 = vld [vmem:[#allocation8 + $0x1f0] sm:$0xff]
    %v643 = vld [vmem:[#allocation8 + $0x1f8] sm:$0xff]
    %644 = vmatpush.msra.mxu0 %v640
    %645 = vmatpush.msra.mxu0 %v636
    %646 = vmatpush.msra.mxu0 %v632
    %647 = vmatpush.msra.mxu0 %v628
    %648 = vmatpush.msra.mxu0 %v624
    %649 = vmatpush.msra.mxu0 %v620
    %650 = vmatpush.msra.mxu0 %v616
    %651 = vmatpush.msra.mxu0 %v612
    %652 = vmatpush.msra.mxu0 %v608
    %653 = vmatpush.msra.mxu0 %v604
    %654 = vmatpush.msra.mxu0 %v600
    %655 = vmatpush.msra.mxu0 %v596
    %656 = vmatpush.msra.mxu0 %v592
    %657 = vmatpush.msra.mxu0 %v588
    %658 = vmatpush.msra.mxu0 %v584
    %659 = vmatpush.msra.mxu0 %v580
    %660 = vmatmul.f32.gmra.mxu0 0.0
    %v661 = vpop.f32.mrf.mxu0
    %v662 = vadd.f32 0.0, %v661
    %663 = vdwg.mxu0
    %664 = vmatpush.msra.mxu0 %v641
    %665 = vmatpush.msra.mxu0 %v637
    %666 = vmatpush.msra.mxu0 %v633
    %667 = vmatpush.msra.mxu0 %v629
    %668 = vmatpush.msra.mxu0 %v625
    %669 = vmatpush.msra.mxu0 %v621
    %670 = vmatpush.msra.mxu0 %v617
    %671 = vmatpush.msra.mxu0 %v613
    %672 = vmatpush.msra.mxu0 %v609
    %673 = vmatpush.msra.mxu0 %v605
    %674 = vmatpush.msra.mxu0 %v601
    %675 = vmatpush.msra.mxu0 %v597
    %676 = vmatpush.msra.mxu0 %v593
    %677 = vmatpush.msra.mxu0 %v589
    %678 = vmatpush.msra.mxu0 %v585
    %679 = vmatpush.msra.mxu0 %v581
    %680 = vmatmul.f32.gmra.mxu0 0.0
    %v681 = vpop.f32.mrf.mxu0
    %v682 = vadd.f32 0.0, %v681
    %683 = vdwg.mxu0
    %684 = vmatpush.msra.mxu0 %v642
    %685 = vmatpush.msra.mxu0 %v638
    %686 = vmatpush.msra.mxu0 %v634
    %687 = vmatpush.msra.mxu0 %v630
    %688 = vmatpush.msra.mxu0 %v626
    %689 = vmatpush.msra.mxu0 %v622
    %690 = vmatpush.msra.mxu0 %v618
    %691 = vmatpush.msra.mxu0 %v614
    %692 = vmatpush.msra.mxu0 %v610
    %693 = vmatpush.msra.mxu0 %v606
    %694 = vmatpush.msra.mxu0 %v602
    %695 = vmatpush.msra.mxu0 %v598
    %696 = vmatpush.msra.mxu0 %v594
    %697 = vmatpush.msra.mxu0 %v590
    %698 = vmatpush.msra.mxu0 %v586
    %699 = vmatpush.msra.mxu0 %v582
    %700 = vmatmul.f32.gmra.mxu0 0.0
    %v701 = vpop.f32.mrf.mxu0
    %v702 = vadd.f32 0.0, %v701
    %703 = vdwg.mxu0
    %704 = vmatpush.msra.mxu0 %v643
    %705 = vmatpush.msra.mxu0 %v639
    %706 = vmatpush.msra.mxu0 %v635
    %707 = vmatpush.msra.mxu0 %v631
    %708 = vmatpush.msra.mxu0 %v627
    %709 = vmatpush.msra.mxu0 %v623
    %710 = vmatpush.msra.mxu0 %v619
    %711 = vmatpush.msra.mxu0 %v615
    %712 = vmatpush.msra.mxu0 %v611
    %713 = vmatpush.msra.mxu0 %v607
    %714 = vmatpush.msra.mxu0 %v603
    %715 = vmatpush.msra.mxu0 %v599
    %716 = vmatpush.msra.mxu0 %v595
    %717 = vmatpush.msra.mxu0 %v591
    %718 = vmatpush.msra.mxu0 %v587
    %719 = vmatpush.msra.mxu0 %v583
    %720 = vmatmul.f32.gmra.mxu0 0.0
    %v721 = vpop.f32.mrf.mxu0
    %v722 = vadd.f32 0.0, %v721
    %723 = vdwg.mxu0
    %s724 = smul.u32 0, 4
    %s725 = smul.addr %s724, 8
    %s726 = scalar_lea.vmem [#allocation2], %s725
    %v727 = vld [vmem:[%s726] sm:$0xff]
    %v728 = vld [vmem:[%s726 + $0x8] sm:$0xff]
    %v729 = vld [vmem:[%s726 + $0x10] sm:$0xff]
    %v730 = vld [vmem:[%s726 + $0x18] sm:$0xff]
    %v731 = vadd.f32 %v727, %v662
    %v732 = vadd.f32 %v728, %v682
    %v733 = vadd.f32 %v729, %v702
    %v734 = vadd.f32 %v730, %v722
    %v735 = vmul.f32 %v731, 0.5
    %v736 = vtanh.pop %v735
    %v737 = vmul.f32 %v736, 0.5
    %v738 = vadd.f32 %v737, 0.5
    %v739 = vmul.f32 %v732, 0.5
    %v740 = vtanh.pop %v739
    %v741 = vmul.f32 %v740, 0.5
    %v742 = vadd.f32 %v741, 0.5
    %v743 = vtanh.pop %v733
    %v744 = vmul.f32 %v734, 0.5
    %v745 = vtanh.pop %v744
    %v746 = vmul.f32 %v745, 0.5
    %v747 = vadd.f32 %v746, 0.5
    %v748 = vmul.f32 %v742, 0.0
    %v749 = vmul.f32 %v738, %v743
    %v750 = vadd.f32 %v748, %v749
    %v751 = vtanh.pop %v750
    %v752 = vmul.f32 %v747, %v751
    %v753 = vld [vmem:[#allocation11] sm:$0xff]
    %v754 = vld [vmem:[#allocation11 + $0x8] sm:$0xff]
    %v755 = vld [vmem:[#allocation11 + $0x10] sm:$0xff]
    %v756 = vld [vmem:[#allocation11 + $0x18] sm:$0xff]
    %v757 = vld [vmem:[#allocation11 + $0x20] sm:$0xff]
    %v758 = vld [vmem:[#allocation11 + $0x28] sm:$0xff]
    %v759 = vld [vmem:[#allocation11 + $0x30] sm:$0xff]
    %v760 = vld [vmem:[#allocation11 + $0x38] sm:$0xff]
    %v761 = vld [vmem:[#allocation11 + $0x40] sm:$0xff]
    %v762 = vld [vmem:[#allocation11 + $0x48] sm:$0xff]
    %v763 = vld [vmem:[#allocation11 + $0x50] sm:$0xff]
    %v764 = vld [vmem:[#allocation11 + $0x58] sm:$0xff]
    %v765 = vld [vmem:[#allocation11 + $0x60] sm:$0xff]
    %v766 = vld [vmem:[#allocation11 + $0x68] sm:$0xff]
    %v767 = vld [vmem:[#allocation11 + $0x70] sm:$0xff]
    %v768 = vld [vmem:[#allocation11 + $0x78] sm:$0xff]
    %v769 = vld [vmem:[#allocation11 + $0x80] sm:$0xff]
    %v770 = vld [vmem:[#allocation11 + $0x88] sm:$0xff]
    %v771 = vld [vmem:[#allocation11 + $0x90] sm:$0xff]
    %v772 = vld [vmem:[#allocation11 + $0x98] sm:$0xff]
    %v773 = vld [vmem:[#allocation11 + $0xa0] sm:$0xff]
    %v774 = vld [vmem:[#allocation11 + $0xa8] sm:$0xff]
    %v775 = vld [vmem:[#allocation11 + $0xb0] sm:$0xff]
    %v776 = vld [vmem:[#allocation11 + $0xb8] sm:$0xff]
    %v777 = vld [vmem:[#allocation11 + $0xc0] sm:$0xff]
    %v778 = vld [vmem:[#allocation11 + $0xc8] sm:$0xff]
    %v779 = vld [vmem:[#allocation11 + $0xd0] sm:$0xff]
    %v780 = vld [vmem:[#allocation11 + $0xd8] sm:$0xff]
    %v781 = vld [vmem:[#allocation11 + $0xe0] sm:$0xff]
    %v782 = vld [vmem:[#allocation11 + $0xe8] sm:$0xff]
    %v783 = vld [vmem:[#allocation11 + $0xf0] sm:$0xff]
    %v784 = vld [vmem:[#allocation11 + $0xf8] sm:$0xff]
    %v785 = vld [vmem:[#allocation11 + $0x100] sm:$0xff]
    %v786 = vld [vmem:[#allocation11 + $0x108] sm:$0xff]
    %v787 = vld [vmem:[#allocation11 + $0x110] sm:$0xff]
    %v788 = vld [vmem:[#allocation11 + $0x118] sm:$0xff]
    %v789 = vld [vmem:[#allocation11 + $0x120] sm:$0xff]
    %v790 = vld [vmem:[#allocation11 + $0x128] sm:$0xff]
    %v791 = vld [vmem:[#allocation11 + $0x130] sm:$0xff]
    %v792 = vld [vmem:[#allocation11 + $0x138] sm:$0xff]
    %v793 = vld [vmem:[#allocation11 + $0x140] sm:$0xff]
    %v794 = vld [vmem:[#allocation11 + $0x148] sm:$0xff]
    %v795 = vld [vmem:[#allocation11 + $0x150] sm:$0xff]
    %v796 = vld [vmem:[#allocation11 + $0x158] sm:$0xff]
    %v797 = vld [vmem:[#allocation11 + $0x160] sm:$0xff]
    %v798 = vld [vmem:[#allocation11 + $0x168] sm:$0xff]
    %v799 = vld [vmem:[#allocation11 + $0x170] sm:$0xff]
    %v800 = vld [vmem:[#allocation11 + $0x178] sm:$0xff]
    %v801 = vld [vmem:[#allocation11 + $0x180] sm:$0xff]
    %v802 = vld [vmem:[#allocation11 + $0x188] sm:$0xff]
    %v803 = vld [vmem:[#allocation11 + $0x190] sm:$0xff]
    %v804 = vld [vmem:[#allocation11 + $0x198] sm:$0xff]
    %v805 = vld [vmem:[#allocation11 + $0x1a0] sm:$0xff]
    %v806 = vld [vmem:[#allocation11 + $0x1a8] sm:$0xff]
    %v807 = vld [vmem:[#allocation11 + $0x1b0] sm:$0xff]
    %v808 = vld [vmem:[#allocation11 + $0x1b8] sm:$0xff]
    %v809 = vld [vmem:[#allocation11 + $0x1c0] sm:$0xff]
    %v810 = vld [vmem:[#allocation11 + $0x1c8] sm:$0xff]
    %v811 = vld [vmem:[#allocation11 + $0x1d0] sm:$0xff]
    %v812 = vld [vmem:[#allocation11 + $0x1d8] sm:$0xff]
    %v813 = vld [vmem:[#allocation11 + $0x1e0] sm:$0xff]
    %v814 = vld [vmem:[#allocation11 + $0x1e8] sm:$0xff]
    %v815 = vld [vmem:[#allocation11 + $0x1f0] sm:$0xff]
    %v816 = vld [vmem:[#allocation11 + $0x1f8] sm:$0xff]
    %817 = vmatpush.msra.mxu0 %v813
    %818 = vmatpush.msra.mxu0 %v809
    %819 = vmatpush.msra.mxu0 %v805
    %820 = vmatpush.msra.mxu0 %v801
    %821 = vmatpush.msra.mxu0 %v797
    %822 = vmatpush.msra.mxu0 %v793
    %823 = vmatpush.msra.mxu0 %v789
    %824 = vmatpush.msra.mxu0 %v785
    %825 = vmatpush.msra.mxu0 %v781
    %826 = vmatpush.msra.mxu0 %v777
    %827 = vmatpush.msra.mxu0 %v773
    %828 = vmatpush.msra.mxu0 %v769
    %829 = vmatpush.msra.mxu0 %v765
    %830 = vmatpush.msra.mxu0 %v761
    %831 = vmatpush.msra.mxu0 %v757
    %832 = vmatpush.msra.mxu0 %v753
    %833 = vmatmul.f32.gmra.mxu0 %v752
    %v834 = vpop.f32.mrf.mxu0
    %v835 = vadd.f32 %v518, %v834
    %836 = vdwg.mxu0
    %837 = vmatpush.msra.mxu0 %v814
    %838 = vmatpush.msra.mxu0 %v810
    %839 = vmatpush.msra.mxu0 %v806
    %840 = vmatpush.msra.mxu0 %v802
    %841 = vmatpush.msra.mxu0 %v798
    %842 = vmatpush.msra.mxu0 %v794
    %843 = vmatpush.msra.mxu0 %v790
    %844 = vmatpush.msra.mxu0 %v786
    %845 = vmatpush.msra.mxu0 %v782
    %846 = vmatpush.msra.mxu0 %v778
    %847 = vmatpush.msra.mxu0 %v774
    %848 = vmatpush.msra.mxu0 %v770
    %849 = vmatpush.msra.mxu0 %v766
    %850 = vmatpush.msra.mxu0 %v762
    %851 = vmatpush.msra.mxu0 %v758
    %852 = vmatpush.msra.mxu0 %v754
    %853 = vmatmul.f32.gmra.mxu0 %v752
    %v854 = vpop.f32.mrf.mxu0
    %v855 = vadd.f32 %v538, %v854
    %856 = vdwg.mxu0
    %857 = vmatpush.msra.mxu0 %v815
    %858 = vmatpush.msra.mxu0 %v811
    %859 = vmatpush.msra.mxu0 %v807
    %860 = vmatpush.msra.mxu0 %v803
    %861 = vmatpush.msra.mxu0 %v799
    %862 = vmatpush.msra.mxu0 %v795
    %863 = vmatpush.msra.mxu0 %v791
    %864 = vmatpush.msra.mxu0 %v787
    %865 = vmatpush.msra.mxu0 %v783
    %866 = vmatpush.msra.mxu0 %v779
    %867 = vmatpush.msra.mxu0 %v775
    %868 = vmatpush.msra.mxu0 %v771
    %869 = vmatpush.msra.mxu0 %v767
    %870 = vmatpush.msra.mxu0 %v763
    %871 = vmatpush.msra.mxu0 %v759
    %872 = vmatpush.msra.mxu0 %v755
    %873 = vmatmul.f32.gmra.mxu0 %v752
    %v874 = vpop.f32.mrf.mxu0
    %v875 = vadd.f32 %v558, %v874
    %876 = vdwg.mxu0
    %877 = vmatpush.msra.mxu0 %v816
    %878 = vmatpush.msra.mxu0 %v812
    %879 = vmatpush.msra.mxu0 %v808
    %880 = vmatpush.msra.mxu0 %v804
    %881 = vmatpush.msra.mxu0 %v800
    %882 = vmatpush.msra.mxu0 %v796
    %883 = vmatpush.msra.mxu0 %v792
    %884 = vmatpush.msra.mxu0 %v788
    %885 = vmatpush.msra.mxu0 %v784
    %886 = vmatpush.msra.mxu0 %v780
    %887 = vmatpush.msra.mxu0 %v776
    %888 = vmatpush.msra.mxu0 %v772
    %889 = vmatpush.msra.mxu0 %v768
    %890 = vmatpush.msra.mxu0 %v764
    %891 = vmatpush.msra.mxu0 %v760
    %892 = vmatpush.msra.mxu0 %v756
    %893 = vmatmul.f32.gmra.mxu0 %v752
    %v894 = vpop.f32.mrf.mxu0
    %v895 = vadd.f32 %v578, %v894
    %896 = vdwg.mxu0
    %v897 = vadd.f32 %v835, %v432
    %v898 = vadd.f32 %v855, %v433
    %v899 = vadd.f32 %v875, %v434
    %v900 = vadd.f32 %v895, %v435
    %v901 = vmul.f32 %v897, 0.5
    %v902 = vtanh.pop %v901
    %v903 = vmul.f32 %v902, 0.5
    %v904 = vadd.f32 %v903, 0.5
    %v905 = vmul.f32 %v898, 0.5
    %v906 = vtanh.pop %v905
    %v907 = vmul.f32 %v906, 0.5
    %v908 = vadd.f32 %v907, 0.5
    %v909 = vtanh.pop %v899
    %v910 = vmul.f32 %v900, 0.5
    %v911 = vtanh.pop %v910
    %v912 = vmul.f32 %v911, 0.5
    %v913 = vadd.f32 %v912, 0.5
    %v914 = vmul.f32 %v908, 0.0
    %v915 = vmul.f32 %v904, %v909
    %v916 = vadd.f32 %v914, %v915
    %v917 = vtanh.pop %v916
    %v918 = vmul.f32 %v913, %v917
    %919 = vmatpush.msra.mxu0 %v496
    %920 = vmatpush.msra.mxu0 %v492
    %921 = vmatpush.msra.mxu0 %v488
    %922 = vmatpush.msra.mxu0 %v484
    %923 = vmatpush.msra.mxu0 %v480
    %924 = vmatpush.msra.mxu0 %v476
    %925 = vmatpush.msra.mxu0 %v472
    %926 = vmatpush.msra.mxu0 %v468
    %927 = vmatpush.msra.mxu0 %v464
    %928 = vmatpush.msra.mxu0 %v460
    %929 = vmatpush.msra.mxu0 %v456
    %930 = vmatpush.msra.mxu0 %v452
    %931 = vmatpush.msra.mxu0 %v448
    %932 = vmatpush.msra.mxu0 %v444
    %933 = vmatpush.msra.mxu0 %v440
    %934 = vmatpush.msra.mxu0 %v436
    %935 = vmatmul.f32.gmra.mxu0 %v918
    %v936 = vpop.f32.mrf.mxu0
    %v937 = vadd.f32 0.0, %v936
    %938 = vdwg.mxu0
    %939 = vmatpush.msra.mxu0 %v497
    %940 = vmatpush.msra.mxu0 %v493
    %941 = vmatpush.msra.mxu0 %v489
    %942 = vmatpush.msra.mxu0 %v485
    %943 = vmatpush.msra.mxu0 %v481
    %944 = vmatpush.msra.mxu0 %v477
    %945 = vmatpush.msra.mxu0 %v473
    %946 = vmatpush.msra.mxu0 %v469
    %947 = vmatpush.msra.mxu0 %v465
    %948 = vmatpush.msra.mxu0 %v461
    %949 = vmatpush.msra.mxu0 %v457
    %950 = vmatpush.msra.mxu0 %v453
    %951 = vmatpush.msra.mxu0 %v449
    %952 = vmatpush.msra.mxu0 %v445
    %953 = vmatpush.msra.mxu0 %v441
    %954 = vmatpush.msra.mxu0 %v437
    %955 = vmatmul.f32.gmra.mxu0 %v918
    %v956 = vpop.f32.mrf.mxu0
    %v957 = vadd.f32 0.0, %v956
    %958 = vdwg.mxu0
    %959 = vmatpush.msra.mxu0 %v498
    %960 = vmatpush.msra.mxu0 %v494
    %961 = vmatpush.msra.mxu0 %v490
    %962 = vmatpush.msra.mxu0 %v486
    %963 = vmatpush.msra.mxu0 %v482
    %964 = vmatpush.msra.mxu0 %v478
    %965 = vmatpush.msra.mxu0 %v474
    %966 = vmatpush.msra.mxu0 %v470
    %967 = vmatpush.msra.mxu0 %v466
    %968 = vmatpush.msra.mxu0 %v462
    %969 = vmatpush.msra.mxu0 %v458
    %970 = vmatpush.msra.mxu0 %v454
    %971 = vmatpush.msra.mxu0 %v450
    %972 = vmatpush.msra.mxu0 %v446
    %973 = vmatpush.msra.mxu0 %v442
    %974 = vmatpush.msra.mxu0 %v438
    %975 = vmatmul.f32.gmra.mxu0 %v918
    %v976 = vpop.f32.mrf.mxu0
    %v977 = vadd.f32 0.0, %v976
    %978 = vdwg.mxu0
    %979 = vmatpush.msra.mxu0 %v499
    %980 = vmatpush.msra.mxu0 %v495
    %981 = vmatpush.msra.mxu0 %v491
    %982 = vmatpush.msra.mxu0 %v487
    %983 = vmatpush.msra.mxu0 %v483
    %984 = vmatpush.msra.mxu0 %v479
    %985 = vmatpush.msra.mxu0 %v475
    %986 = vmatpush.msra.mxu0 %v471
    %987 = vmatpush.msra.mxu0 %v467
    %988 = vmatpush.msra.mxu0 %v463
    %989 = vmatpush.msra.mxu0 %v459
    %990 = vmatpush.msra.mxu0 %v455
    %991 = vmatpush.msra.mxu0 %v451
    %992 = vmatpush.msra.mxu0 %v447
    %993 = vmatpush.msra.mxu0 %v443
    %994 = vmatpush.msra.mxu0 %v439
    %995 = vmatmul.f32.gmra.mxu0 %v918
    %v996 = vpop.f32.mrf.mxu0
    %v997 = vadd.f32 0.0, %v996
    %998 = vdwg.mxu0
    %999 = vmatpush.msra.mxu0 %v640
    %1000 = vmatpush.msra.mxu0 %v636
    %1001 = vmatpush.msra.mxu0 %v632
    %1002 = vmatpush.msra.mxu0 %v628
    %1003 = vmatpush.msra.mxu0 %v624
    %1004 = vmatpush.msra.mxu0 %v620
    %1005 = vmatpush.msra.mxu0 %v616
    %1006 = vmatpush.msra.mxu0 %v612
    %1007 = vmatpush.msra.mxu0 %v608
    %1008 = vmatpush.msra.mxu0 %v604
    %1009 = vmatpush.msra.mxu0 %v600
    %1010 = vmatpush.msra.mxu0 %v596
    %1011 = vmatpush.msra.mxu0 %v592
    %1012 = vmatpush.msra.mxu0 %v588
    %1013 = vmatpush.msra.mxu0 %v584
    %1014 = vmatpush.msra.mxu0 %v580
    %1015 = vmatmul.f32.gmra.mxu0 %v752
    %v1016 = vpop.f32.mrf.mxu0
    %v1017 = vadd.f32 0.0, %v1016
    %1018 = vdwg.mxu0
    %1019 = vmatpush.msra.mxu0 %v641
    %1020 = vmatpush.msra.mxu0 %v637
    %1021 = vmatpush.msra.mxu0 %v633
    %1022 = vmatpush.msra.mxu0 %v629
    %1023 = vmatpush.msra.mxu0 %v625
    %1024 = vmatpush.msra.mxu0 %v621
    %1025 = vmatpush.msra.mxu0 %v617
    %1026 = vmatpush.msra.mxu0 %v613
    %1027 = vmatpush.msra.mxu0 %v609
    %1028 = vmatpush.msra.mxu0 %v605
    %1029 = vmatpush.msra.mxu0 %v601
    %1030 = vmatpush.msra.mxu0 %v597
    %1031 = vmatpush.msra.mxu0 %v593
    %1032 = vmatpush.msra.mxu0 %v589
    %1033 = vmatpush.msra.mxu0 %v585
    %1034 = vmatpush.msra.mxu0 %v581
    %1035 = vmatmul.f32.gmra.mxu0 %v752
    %v1036 = vpop.f32.mrf.mxu0
    %v1037 = vadd.f32 0.0, %v1036
    %1038 = vdwg.mxu0
    %1039 = vmatpush.msra.mxu0 %v642
    %1040 = vmatpush.msra.mxu0 %v638
    %1041 = vmatpush.msra.mxu0 %v634
    %1042 = vmatpush.msra.mxu0 %v630
    %1043 = vmatpush.msra.mxu0 %v626
    %1044 = vmatpush.msra.mxu0 %v622
    %1045 = vmatpush.msra.mxu0 %v618
    %1046 = vmatpush.msra.mxu0 %v614
    %1047 = vmatpush.msra.mxu0 %v610
    %1048 = vmatpush.msra.mxu0 %v606
    %1049 = vmatpush.msra.mxu0 %v602
    %1050 = vmatpush.msra.mxu0 %v598
    %1051 = vmatpush.msra.mxu0 %v594
    %1052 = vmatpush.msra.mxu0 %v590
    %1053 = vmatpush.msra.mxu0 %v586
    %1054 = vmatpush.msra.mxu0 %v582
    %1055 = vmatmul.f32.gmra.mxu0 %v752
    %v1056 = vpop.f32.mrf.mxu0
    %v1057 = vadd.f32 0.0, %v1056
    %1058 = vdwg.mxu0
    %1059 = vmatpush.msra.mxu0 %v643
    %1060 = vmatpush.msra.mxu0 %v639
    %1061 = vmatpush.msra.mxu0 %v635
    %1062 = vmatpush.msra.mxu0 %v631
    %1063 = vmatpush.msra.mxu0 %v627
    %1064 = vmatpush.msra.mxu0 %v623
    %1065 = vmatpush.msra.mxu0 %v619
    %1066 = vmatpush.msra.mxu0 %v615
    %1067 = vmatpush.msra.mxu0 %v611
    %1068 = vmatpush.msra.mxu0 %v607
    %1069 = vmatpush.msra.mxu0 %v603
    %1070 = vmatpush.msra.mxu0 %v599
    %1071 = vmatpush.msra.mxu0 %v595
    %1072 = vmatpush.msra.mxu0 %v591
    %1073 = vmatpush.msra.mxu0 %v587
    %1074 = vmatpush.msra.mxu0 %v583
    %1075 = vmatmul.f32.gmra.mxu0 %v752
    %v1076 = vpop.f32.mrf.mxu0
    %v1077 = vadd.f32 0.0, %v1076
    %1078 = vdwg.mxu0
    %s1079 = smul.u32 1, 4
    %s1080 = smul.addr %s1079, 8
    %s1081 = scalar_lea.vmem [#allocation2], %s1080
    %v1082 = vld [vmem:[%s1081] sm:$0xff]
    %v1083 = vld [vmem:[%s1081 + $0x8] sm:$0xff]
    %v1084 = vld [vmem:[%s1081 + $0x10] sm:$0xff]
    %v1085 = vld [vmem:[%s1081 + $0x18] sm:$0xff]
    %v1086 = vadd.f32 %v1082, %v1017
    %v1087 = vadd.f32 %v1083, %v1037
    %v1088 = vadd.f32 %v1084, %v1057
    %v1089 = vadd.f32 %v1085, %v1077
    %v1090 = vmul.f32 %v1086, 0.5
    %v1091 = vtanh.pop %v1090
    %v1092 = vmul.f32 %v1091, 0.5
    %v1093 = vadd.f32 %v1092, 0.5
    %v1094 = vmul.f32 %v1087, 0.5
    %v1095 = vtanh.pop %v1094
    %v1096 = vmul.f32 %v1095, 0.5
    %v1097 = vadd.f32 %v1096, 0.5
    %v1098 = vtanh.pop %v1088
    %v1099 = vmul.f32 %v1089, 0.5
    %v1100 = vtanh.pop %v1099
    %v1101 = vmul.f32 %v1100, 0.5
    %v1102 = vadd.f32 %v1101, 0.5
    %v1103 = vmul.f32 %v1097, %v750
    %v1104 = vmul.f32 %v1093, %v1098
    %v1105 = vadd.f32 %v1103, %v1104
    %v1106 = vtanh.pop %v1105
    %v1107 = vmul.f32 %v1102, %v1106
    %1108 = vmatpush.msra.mxu0 %v813
    %1109 = vmatpush.msra.mxu0 %v809
    %1110 = vmatpush.msra.mxu0 %v805
    %1111 = vmatpush.msra.mxu0 %v801
    %1112 = vmatpush.msra.mxu0 %v797
    %1113 = vmatpush.msra.mxu0 %v793
    %1114 = vmatpush.msra.mxu0 %v789
    %1115 = vmatpush.msra.mxu0 %v785
    %1116 = vmatpush.msra.mxu0 %v781
    %1117 = vmatpush.msra.mxu0 %v777
    %1118 = vmatpush.msra.mxu0 %v773
    %1119 = vmatpush.msra.mxu0 %v769
    %1120 = vmatpush.msra.mxu0 %v765
    %1121 = vmatpush.msra.mxu0 %v761
    %1122 = vmatpush.msra.mxu0 %v757
    %1123 = vmatpush.msra.mxu0 %v753
    %1124 = vmatmul.f32.gmra.mxu0 %v1107
    %v1125 = vpop.f32.mrf.mxu0
    %v1126 = vadd.f32 %v937, %v1125
    %1127 = vdwg.mxu0
    %1128 = vmatpush.msra.mxu0 %v814
    %1129 = vmatpush.msra.mxu0 %v810
    %1130 = vmatpush.msra.mxu0 %v806
    %1131 = vmatpush.msra.mxu0 %v802
    %1132 = vmatpush.msra.mxu0 %v798
    %1133 = vmatpush.msra.mxu0 %v794
    %1134 = vmatpush.msra.mxu0 %v790
    %1135 = vmatpush.msra.mxu0 %v786
    %1136 = vmatpush.msra.mxu0 %v782
    %1137 = vmatpush.msra.mxu0 %v778
    %1138 = vmatpush.msra.mxu0 %v774
    %1139 = vmatpush.msra.mxu0 %v770
    %1140 = vmatpush.msra.mxu0 %v766
    %1141 = vmatpush.msra.mxu0 %v762
    %1142 = vmatpush.msra.mxu0 %v758
    %1143 = vmatpush.msra.mxu0 %v754
    %1144 = vmatmul.f32.gmra.mxu0 %v1107
    %v1145 = vpop.f32.mrf.mxu0
    %v1146 = vadd.f32 %v957, %v1145
    %1147 = vdwg.mxu0
    %1148 = vmatpush.msra.mxu0 %v815
    %1149 = vmatpush.msra.mxu0 %v811
    %1150 = vmatpush.msra.mxu0 %v807
    %1151 = vmatpush.msra.mxu0 %v803
    %1152 = vmatpush.msra.mxu0 %v799
    %1153 = vmatpush.msra.mxu0 %v795
    %1154 = vmatpush.msra.mxu0 %v791
    %1155 = vmatpush.msra.mxu0 %v787
    %1156 = vmatpush.msra.mxu0 %v783
    %1157 = vmatpush.msra.mxu0 %v779
    %1158 = vmatpush.msra.mxu0 %v775
    %1159 = vmatpush.msra.mxu0 %v771
    %1160 = vmatpush.msra.mxu0 %v767
    %1161 = vmatpush.msra.mxu0 %v763
    %1162 = vmatpush.msra.mxu0 %v759
    %1163 = vmatpush.msra.mxu0 %v755
    %1164 = vmatmul.f32.gmra.mxu0 %v1107
    %v1165 = vpop.f32.mrf.mxu0
    %v1166 = vadd.f32 %v977, %v1165
    %1167 = vdwg.mxu0
    %1168 = vmatpush.msra.mxu0 %v816
    %1169 = vmatpush.msra.mxu0 %v812
    %1170 = vmatpush.msra.mxu0 %v808
    %1171 = vmatpush.msra.mxu0 %v804
    %1172 = vmatpush.msra.mxu0 %v800
    %1173 = vmatpush.msra.mxu0 %v796
    %1174 = vmatpush.msra.mxu0 %v792
    %1175 = vmatpush.msra.mxu0 %v788
    %1176 = vmatpush.msra.mxu0 %v784
    %1177 = vmatpush.msra.mxu0 %v780
    %1178 = vmatpush.msra.mxu0 %v776
    %1179 = vmatpush.msra.mxu0 %v772
    %1180 = vmatpush.msra.mxu0 %v768
    %1181 = vmatpush.msra.mxu0 %v764
    %1182 = vmatpush.msra.mxu0 %v760
    %1183 = vmatpush.msra.mxu0 %v756
    %1184 = vmatmul.f32.gmra.mxu0 %v1107
    %v1185 = vpop.f32.mrf.mxu0
    %v1186 = vadd.f32 %v997, %v1185
    %1187 = vdwg.mxu0
    %v1188 = vadd.f32 %v1126, %v432
    %v1189 = vadd.f32 %v1146, %v433
    %v1190 = vadd.f32 %v1166, %v434
    %v1191 = vadd.f32 %v1186, %v435
    %v1192 = vmul.f32 %v1188, 0.5
    %v1193 = vtanh.pop %v1192
    %v1194 = vmul.f32 %v1193, 0.5
    %v1195 = vadd.f32 %v1194, 0.5
    %v1196 = vmul.f32 %v1189, 0.5
    %v1197 = vtanh.pop %v1196
    %v1198 = vmul.f32 %v1197, 0.5
    %v1199 = vadd.f32 %v1198, 0.5
    %v1200 = vtanh.pop %v1190
    %v1201 = vmul.f32 %v1191, 0.5
    %v1202 = vtanh.pop %v1201
    %v1203 = vmul.f32 %v1202, 0.5
    %v1204 = vadd.f32 %v1203, 0.5
    %v1205 = vmul.f32 %v1199, %v916
    %v1206 = vmul.f32 %v1195, %v1200
    %v1207 = vadd.f32 %v1205, %v1206
    %v1208 = vtanh.pop %v1207
    %v1209 = vmul.f32 %v1204, %v1208
    %1210 = vmatpush.msra.mxu0 %v496
    %1211 = vmatpush.msra.mxu0 %v492
    %1212 = vmatpush.msra.mxu0 %v488
    %1213 = vmatpush.msra.mxu0 %v484
    %1214 = vmatpush.msra.mxu0 %v480
    %1215 = vmatpush.msra.mxu0 %v476
    %1216 = vmatpush.msra.mxu0 %v472
    %1217 = vmatpush.msra.mxu0 %v468
    %1218 = vmatpush.msra.mxu0 %v464
    %1219 = vmatpush.msra.mxu0 %v460
    %1220 = vmatpush.msra.mxu0 %v456
    %1221 = vmatpush.msra.mxu0 %v452
    %1222 = vmatpush.msra.mxu0 %v448
    %1223 = vmatpush.msra.mxu0 %v444
    %1224 = vmatpush.msra.mxu0 %v440
    %1225 = vmatpush.msra.mxu0 %v436
    %1226 = vmatmul.f32.gmra.mxu0 %v1209
    %v1227 = vpop.f32.mrf.mxu0
    %v1228 = vadd.f32 0.0, %v1227
    %1229 = vdwg.mxu0
    %1230 = vmatpush.msra.mxu0 %v497
    %1231 = vmatpush.msra.mxu0 %v493
    %1232 = vmatpush.msra.mxu0 %v489
    %1233 = vmatpush.msra.mxu0 %v485
    %1234 = vmatpush.msra.mxu0 %v481
    %1235 = vmatpush.msra.mxu0 %v477
    %1236 = vmatpush.msra.mxu0 %v473
    %1237 = vmatpush.msra.mxu0 %v469
    %1238 = vmatpush.msra.mxu0 %v465
    %1239 = vmatpush.msra.mxu0 %v461
    %1240 = vmatpush.msra.mxu0 %v457
    %1241 = vmatpush.msra.mxu0 %v453
    %1242 = vmatpush.msra.mxu0 %v449
    %1243 = vmatpush.msra.mxu0 %v445
    %1244 = vmatpush.msra.mxu0 %v441
    %1245 = vmatpush.msra.mxu0 %v437
    %1246 = vmatmul.f32.gmra.mxu0 %v1209
    %v1247 = vpop.f32.mrf.mxu0
    %v1248 = vadd.f32 0.0, %v1247
    %1249 = vdwg.mxu0
    %1250 = vmatpush.msra.mxu0 %v498
    %1251 = vmatpush.msra.mxu0 %v494
    %1252 = vmatpush.msra.mxu0 %v490
    %1253 = vmatpush.msra.mxu0 %v486
    %1254 = vmatpush.msra.mxu0 %v482
    %1255 = vmatpush.msra.mxu0 %v478
    %1256 = vmatpush.msra.mxu0 %v474
    %1257 = vmatpush.msra.mxu0 %v470
    %1258 = vmatpush.msra.mxu0 %v466
    %1259 = vmatpush.msra.mxu0 %v462
    %1260 = vmatpush.msra.mxu0 %v458
    %1261 = vmatpush.msra.mxu0 %v454
    %1262 = vmatpush.msra.mxu0 %v450
    %1263 = vmatpush.msra.mxu0 %v446
    %1264 = vmatpush.msra.mxu0 %v442
    %1265 = vmatpush.msra.mxu0 %v438
    %1266 = vmatmul.f32.gmra.mxu0 %v1209
    %v1267 = vpop.f32.mrf.mxu0
    %v1268 = vadd.f32 0.0, %v1267
    %1269 = vdwg.mxu0
    %1270 = vmatpush.msra.mxu0 %v499
    %1271 = vmatpush.msra.mxu0 %v495
    %1272 = vmatpush.msra.mxu0 %v491
    %1273 = vmatpush.msra.mxu0 %v487
    %1274 = vmatpush.msra.mxu0 %v483
    %1275 = vmatpush.msra.mxu0 %v479
    %1276 = vmatpush.msra.mxu0 %v475
    %1277 = vmatpush.msra.mxu0 %v471
    %1278 = vmatpush.msra.mxu0 %v467
    %1279 = vmatpush.msra.mxu0 %v463
    %1280 = vmatpush.msra.mxu0 %v459
    %1281 = vmatpush.msra.mxu0 %v455
    %1282 = vmatpush.msra.mxu0 %v451
    %1283 = vmatpush.msra.mxu0 %v447
    %1284 = vmatpush.msra.mxu0 %v443
    %1285 = vmatpush.msra.mxu0 %v439
    %1286 = vmatmul.f32.gmra.mxu0 %v1209
    %v1287 = vpop.f32.mrf.mxu0
    %v1288 = vadd.f32 0.0, %v1287
    %1289 = vdwg.mxu0
    %1290 = vmatpush.msra.mxu0 %v640
    %1291 = vmatpush.msra.mxu0 %v636
    %1292 = vmatpush.msra.mxu0 %v632
    %1293 = vmatpush.msra.mxu0 %v628
    %1294 = vmatpush.msra.mxu0 %v624
    %1295 = vmatpush.msra.mxu0 %v620
    %1296 = vmatpush.msra.mxu0 %v616
    %1297 = vmatpush.msra.mxu0 %v612
    %1298 = vmatpush.msra.mxu0 %v608
    %1299 = vmatpush.msra.mxu0 %v604
    %1300 = vmatpush.msra.mxu0 %v600
    %1301 = vmatpush.msra.mxu0 %v596
    %1302 = vmatpush.msra.mxu0 %v592
    %1303 = vmatpush.msra.mxu0 %v588
    %1304 = vmatpush.msra.mxu0 %v584
    %1305 = vmatpush.msra.mxu0 %v580
    %1306 = vmatmul.f32.gmra.mxu0 %v1107
    %v1307 = vpop.f32.mrf.mxu0
    %v1308 = vadd.f32 0.0, %v1307
    %1309 = vdwg.mxu0
    %1310 = vmatpush.msra.mxu0 %v641
    %1311 = vmatpush.msra.mxu0 %v637
    %1312 = vmatpush.msra.mxu0 %v633
    %1313 = vmatpush.msra.mxu0 %v629
    %1314 = vmatpush.msra.mxu0 %v625
    %1315 = vmatpush.msra.mxu0 %v621
    %1316 = vmatpush.msra.mxu0 %v617
    %1317 = vmatpush.msra.mxu0 %v613
    %1318 = vmatpush.msra.mxu0 %v609
    %1319 = vmatpush.msra.mxu0 %v605
    %1320 = vmatpush.msra.mxu0 %v601
    %1321 = vmatpush.msra.mxu0 %v597
    %1322 = vmatpush.msra.mxu0 %v593
    %1323 = vmatpush.msra.mxu0 %v589
    %1324 = vmatpush.msra.mxu0 %v585
    %1325 = vmatpush.msra.mxu0 %v581
    %1326 = vmatmul.f32.gmra.mxu0 %v1107
    %v1327 = vpop.f32.mrf.mxu0
    %v1328 = vadd.f32 0.0, %v1327
    %1329 = vdwg.mxu0
    %1330 = vmatpush.msra.mxu0 %v642
    %1331 = vmatpush.msra.mxu0 %v638
    %1332 = vmatpush.msra.mxu0 %v634
    %1333 = vmatpush.msra.mxu0 %v630
    %1334 = vmatpush.msra.mxu0 %v626
    %1335 = vmatpush.msra.mxu0 %v622
    %1336 = vmatpush.msra.mxu0 %v618
    %1337 = vmatpush.msra.mxu0 %v614
    %1338 = vmatpush.msra.mxu0 %v610
    %1339 = vmatpush.msra.mxu0 %v606
    %1340 = vmatpush.msra.mxu0 %v602
    %1341 = vmatpush.msra.mxu0 %v598
    %1342 = vmatpush.msra.mxu0 %v594
    %1343 = vmatpush.msra.mxu0 %v590
    %1344 = vmatpush.msra.mxu0 %v586
    %1345 = vmatpush.msra.mxu0 %v582
    %1346 = vmatmul.f32.gmra.mxu0 %v1107
    %v1347 = vpop.f32.mrf.mxu0
    %v1348 = vadd.f32 0.0, %v1347
    %1349 = vdwg.mxu0
    %1350 = vmatpush.msra.mxu0 %v643
    %1351 = vmatpush.msra.mxu0 %v639
    %1352 = vmatpush.msra.mxu0 %v635
    %1353 = vmatpush.msra.mxu0 %v631
    %1354 = vmatpush.msra.mxu0 %v627
    %1355 = vmatpush.msra.mxu0 %v623
    %1356 = vmatpush.msra.mxu0 %v619
    %1357 = vmatpush.msra.mxu0 %v615
    %1358 = vmatpush.msra.mxu0 %v611
    %1359 = vmatpush.msra.mxu0 %v607
    %1360 = vmatpush.msra.mxu0 %v603
    %1361 = vmatpush.msra.mxu0 %v599
    %1362 = vmatpush.msra.mxu0 %v595
    %1363 = vmatpush.msra.mxu0 %v591
    %1364 = vmatpush.msra.mxu0 %v587
    %1365 = vmatpush.msra.mxu0 %v583
    %1366 = vmatmul.f32.gmra.mxu0 %v1107
    %v1367 = vpop.f32.mrf.mxu0
    %v1368 = vadd.f32 0.0, %v1367
    %1369 = vdwg.mxu0
    %s1370 = smul.u32 2, 4
    %s1371 = smul.addr %s1370, 8
    %s1372 = scalar_lea.vmem [#allocation2], %s1371
    %v1373 = vld [vmem:[%s1372] sm:$0xff]
    %v1374 = vld [vmem:[%s1372 + $0x8] sm:$0xff]
    %v1375 = vld [vmem:[%s1372 + $0x10] sm:$0xff]
    %v1376 = vld [vmem:[%s1372 + $0x18] sm:$0xff]
    %v1377 = vadd.f32 %v1373, %v1308
    %v1378 = vadd.f32 %v1374, %v1328
    %v1379 = vadd.f32 %v1375, %v1348
    %v1380 = vadd.f32 %v1376, %v1368
    %v1381 = vmul.f32 %v1377, 0.5
    %v1382 = vtanh.pop %v1381
    %v1383 = vmul.f32 %v1382, 0.5
    %v1384 = vadd.f32 %v1383, 0.5
    %v1385 = vmul.f32 %v1378, 0.5
    %v1386 = vtanh.pop %v1385
    %v1387 = vmul.f32 %v1386, 0.5
    %v1388 = vadd.f32 %v1387, 0.5
    %v1389 = vtanh.pop %v1379
    %v1390 = vmul.f32 %v1380, 0.5
    %v1391 = vtanh.pop %v1390
    %v1392 = vmul.f32 %v1391, 0.5
    %v1393 = vadd.f32 %v1392, 0.5
    %v1394 = vmul.f32 %v1388, %v1105
    %v1395 = vmul.f32 %v1384, %v1389
    %v1396 = vadd.f32 %v1394, %v1395
    %v1397 = vtanh.pop %v1396
    %v1398 = vmul.f32 %v1393, %v1397
    %1399 = vmatpush.msra.mxu0 %v813
    %1400 = vmatpush.msra.mxu0 %v809
    %1401 = vmatpush.msra.mxu0 %v805
    %1402 = vmatpush.msra.mxu0 %v801
    %1403 = vmatpush.msra.mxu0 %v797
    %1404 = vmatpush.msra.mxu0 %v793
    %1405 = vmatpush.msra.mxu0 %v789
    %1406 = vmatpush.msra.mxu0 %v785
    %1407 = vmatpush.msra.mxu0 %v781
    %1408 = vmatpush.msra.mxu0 %v777
    %1409 = vmatpush.msra.mxu0 %v773
    %1410 = vmatpush.msra.mxu0 %v769
    %1411 = vmatpush.msra.mxu0 %v765
    %1412 = vmatpush.msra.mxu0 %v761
    %1413 = vmatpush.msra.mxu0 %v757
    %1414 = vmatpush.msra.mxu0 %v753
    %1415 = vmatmul.f32.gmra.mxu0 %v1398
    %v1416 = vpop.f32.mrf.mxu0
    %v1417 = vadd.f32 %v1228, %v1416
    %1418 = vdwg.mxu0
    %1419 = vmatpush.msra.mxu0 %v814
    %1420 = vmatpush.msra.mxu0 %v810
    %1421 = vmatpush.msra.mxu0 %v806
    %1422 = vmatpush.msra.mxu0 %v802
    %1423 = vmatpush.msra.mxu0 %v798
    %1424 = vmatpush.msra.mxu0 %v794
    %1425 = vmatpush.msra.mxu0 %v790
    %1426 = vmatpush.msra.mxu0 %v786
    %1427 = vmatpush.msra.mxu0 %v782
    %1428 = vmatpush.msra.mxu0 %v778
    %1429 = vmatpush.msra.mxu0 %v774
    %1430 = vmatpush.msra.mxu0 %v770
    %1431 = vmatpush.msra.mxu0 %v766
    %1432 = vmatpush.msra.mxu0 %v762
    %1433 = vmatpush.msra.mxu0 %v758
    %1434 = vmatpush.msra.mxu0 %v754
    %1435 = vmatmul.f32.gmra.mxu0 %v1398
    %v1436 = vpop.f32.mrf.mxu0
    %v1437 = vadd.f32 %v1248, %v1436
    %1438 = vdwg.mxu0
    %1439 = vmatpush.msra.mxu0 %v815
    %1440 = vmatpush.msra.mxu0 %v811
    %1441 = vmatpush.msra.mxu0 %v807
    %1442 = vmatpush.msra.mxu0 %v803
    %1443 = vmatpush.msra.mxu0 %v799
    %1444 = vmatpush.msra.mxu0 %v795
    %1445 = vmatpush.msra.mxu0 %v791
    %1446 = vmatpush.msra.mxu0 %v787
    %1447 = vmatpush.msra.mxu0 %v783
    %1448 = vmatpush.msra.mxu0 %v779
    %1449 = vmatpush.msra.mxu0 %v775
    %1450 = vmatpush.msra.mxu0 %v771
    %1451 = vmatpush.msra.mxu0 %v767
    %1452 = vmatpush.msra.mxu0 %v763
    %1453 = vmatpush.msra.mxu0 %v759
    %1454 = vmatpush.msra.mxu0 %v755
    %1455 = vmatmul.f32.gmra.mxu0 %v1398
    %v1456 = vpop.f32.mrf.mxu0
    %v1457 = vadd.f32 %v1268, %v1456
    %1458 = vdwg.mxu0
    %1459 = vmatpush.msra.mxu0 %v816
    %1460 = vmatpush.msra.mxu0 %v812
    %1461 = vmatpush.msra.mxu0 %v808
    %1462 = vmatpush.msra.mxu0 %v804
    %1463 = vmatpush.msra.mxu0 %v800
    %1464 = vmatpush.msra.mxu0 %v796
    %1465 = vmatpush.msra.mxu0 %v792
    %1466 = vmatpush.msra.mxu0 %v788
    %1467 = vmatpush.msra.mxu0 %v784
    %1468 = vmatpush.msra.mxu0 %v780
    %1469 = vmatpush.msra.mxu0 %v776
    %1470 = vmatpush.msra.mxu0 %v772
    %1471 = vmatpush.msra.mxu0 %v768
    %1472 = vmatpush.msra.mxu0 %v764
    %1473 = vmatpush.msra.mxu0 %v760
    %1474 = vmatpush.msra.mxu0 %v756
    %1475 = vmatmul.f32.gmra.mxu0 %v1398
    %v1476 = vpop.f32.mrf.mxu0
    %v1477 = vadd.f32 %v1288, %v1476
    %1478 = vdwg.mxu0
    %v1479 = vadd.f32 %v1417, %v432
    %v1480 = vadd.f32 %v1437, %v433
    %v1481 = vadd.f32 %v1457, %v434
    %v1482 = vadd.f32 %v1477, %v435
    %v1483 = vmul.f32 %v1479, 0.5
    %v1484 = vtanh.pop %v1483
    %v1485 = vmul.f32 %v1484, 0.5
    %v1486 = vadd.f32 %v1485, 0.5
    %v1487 = vmul.f32 %v1480, 0.5
    %v1488 = vtanh.pop %v1487
    %v1489 = vmul.f32 %v1488, 0.5
    %v1490 = vadd.f32 %v1489, 0.5
    %v1491 = vtanh.pop %v1481
    %v1492 = vmul.f32 %v1482, 0.5
    %v1493 = vtanh.pop %v1492
    %v1494 = vmul.f32 %v1493, 0.5
    %v1495 = vadd.f32 %v1494, 0.5
    %v1496 = vmul.f32 %v1490, %v1207
    %v1497 = vmul.f32 %v1486, %v1491
    %v1498 = vadd.f32 %v1496, %v1497
    %v1499 = vtanh.pop %v1498
    %v1500 = vmul.f32 %v1495, %v1499
    %1501 = vmatpush.msra.mxu0 %v496
    %1502 = vmatpush.msra.mxu0 %v492
    %1503 = vmatpush.msra.mxu0 %v488
    %1504 = vmatpush.msra.mxu0 %v484
    %1505 = vmatpush.msra.mxu0 %v480
    %1506 = vmatpush.msra.mxu0 %v476
    %1507 = vmatpush.msra.mxu0 %v472
    %1508 = vmatpush.msra.mxu0 %v468
    %1509 = vmatpush.msra.mxu0 %v464
    %1510 = vmatpush.msra.mxu0 %v460
    %1511 = vmatpush.msra.mxu0 %v456
    %1512 = vmatpush.msra.mxu0 %v452
    %1513 = vmatpush.msra.mxu0 %v448
    %1514 = vmatpush.msra.mxu0 %v444
    %1515 = vmatpush.msra.mxu0 %v440
    %1516 = vmatpush.msra.mxu0 %v436
    %1517 = vmatmul.f32.gmra.mxu0 %v1500
    %v1518 = vpop.f32.mrf.mxu0
    %v1519 = vadd.f32 0.0, %v1518
    %1520 = vdwg.mxu0
    %1521 = vmatpush.msra.mxu0 %v497
    %1522 = vmatpush.msra.mxu0 %v493
    %1523 = vmatpush.msra.mxu0 %v489
    %1524 = vmatpush.msra.mxu0 %v485
    %1525 = vmatpush.msra.mxu0 %v481
    %1526 = vmatpush.msra.mxu0 %v477
    %1527 = vmatpush.msra.mxu0 %v473
    %1528 = vmatpush.msra.mxu0 %v469
    %1529 = vmatpush.msra.mxu0 %v465
    %1530 = vmatpush.msra.mxu0 %v461
    %1531 = vmatpush.msra.mxu0 %v457
    %1532 = vmatpush.msra.mxu0 %v453
    %1533 = vmatpush.msra.mxu0 %v449
    %1534 = vmatpush.msra.mxu0 %v445
    %1535 = vmatpush.msra.mxu0 %v441
    %1536 = vmatpush.msra.mxu0 %v437
    %1537 = vmatmul.f32.gmra.mxu0 %v1500
    %v1538 = vpop.f32.mrf.mxu0
    %v1539 = vadd.f32 0.0, %v1538
    %1540 = vdwg.mxu0
    %1541 = vmatpush.msra.mxu0 %v498
    %1542 = vmatpush.msra.mxu0 %v494
    %1543 = vmatpush.msra.mxu0 %v490
    %1544 = vmatpush.msra.mxu0 %v486
    %1545 = vmatpush.msra.mxu0 %v482
    %1546 = vmatpush.msra.mxu0 %v478
    %1547 = vmatpush.msra.mxu0 %v474
    %1548 = vmatpush.msra.mxu0 %v470
    %1549 = vmatpush.msra.mxu0 %v466
    %1550 = vmatpush.msra.mxu0 %v462
    %1551 = vmatpush.msra.mxu0 %v458
    %1552 = vmatpush.msra.mxu0 %v454
    %1553 = vmatpush.msra.mxu0 %v450
    %1554 = vmatpush.msra.mxu0 %v446
    %1555 = vmatpush.msra.mxu0 %v442
    %1556 = vmatpush.msra.mxu0 %v438
    %1557 = vmatmul.f32.gmra.mxu0 %v1500
    %v1558 = vpop.f32.mrf.mxu0
    %v1559 = vadd.f32 0.0, %v1558
    %1560 = vdwg.mxu0
    %1561 = vmatpush.msra.mxu0 %v499
    %1562 = vmatpush.msra.mxu0 %v495
    %1563 = vmatpush.msra.mxu0 %v491
    %1564 = vmatpush.msra.mxu0 %v487
    %1565 = vmatpush.msra.mxu0 %v483
    %1566 = vmatpush.msra.mxu0 %v479
    %1567 = vmatpush.msra.mxu0 %v475
    %1568 = vmatpush.msra.mxu0 %v471
    %1569 = vmatpush.msra.mxu0 %v467
    %1570 = vmatpush.msra.mxu0 %v463
    %1571 = vmatpush.msra.mxu0 %v459
    %1572 = vmatpush.msra.mxu0 %v455
    %1573 = vmatpush.msra.mxu0 %v451
    %1574 = vmatpush.msra.mxu0 %v447
    %1575 = vmatpush.msra.mxu0 %v443
    %1576 = vmatpush.msra.mxu0 %v439
    %1577 = vmatmul.f32.gmra.mxu0 %v1500
    %v1578 = vpop.f32.mrf.mxu0
    %v1579 = vadd.f32 0.0, %v1578
    %1580 = vdwg.mxu0
    %1581 = vmatpush.msra.mxu0 %v640
    %1582 = vmatpush.msra.mxu0 %v636
    %1583 = vmatpush.msra.mxu0 %v632
    %1584 = vmatpush.msra.mxu0 %v628
    %1585 = vmatpush.msra.mxu0 %v624
    %1586 = vmatpush.msra.mxu0 %v620
    %1587 = vmatpush.msra.mxu0 %v616
    %1588 = vmatpush.msra.mxu0 %v612
    %1589 = vmatpush.msra.mxu0 %v608
    %1590 = vmatpush.msra.mxu0 %v604
    %1591 = vmatpush.msra.mxu0 %v600
    %1592 = vmatpush.msra.mxu0 %v596
    %1593 = vmatpush.msra.mxu0 %v592
    %1594 = vmatpush.msra.mxu0 %v588
    %1595 = vmatpush.msra.mxu0 %v584
    %1596 = vmatpush.msra.mxu0 %v580
    %1597 = vmatmul.f32.gmra.mxu0 %v1398
    %v1598 = vpop.f32.mrf.mxu0
    %v1599 = vadd.f32 0.0, %v1598
    %1600 = vdwg.mxu0
    %1601 = vmatpush.msra.mxu0 %v641
    %1602 = vmatpush.msra.mxu0 %v637
    %1603 = vmatpush.msra.mxu0 %v633
    %1604 = vmatpush.msra.mxu0 %v629
    %1605 = vmatpush.msra.mxu0 %v625
    %1606 = vmatpush.msra.mxu0 %v621
    %1607 = vmatpush.msra.mxu0 %v617
    %1608 = vmatpush.msra.mxu0 %v613
    %1609 = vmatpush.msra.mxu0 %v609
    %1610 = vmatpush.msra.mxu0 %v605
    %1611 = vmatpush.msra.mxu0 %v601
    %1612 = vmatpush.msra.mxu0 %v597
    %1613 = vmatpush.msra.mxu0 %v593
    %1614 = vmatpush.msra.mxu0 %v589
    %1615 = vmatpush.msra.mxu0 %v585
    %1616 = vmatpush.msra.mxu0 %v581
    %1617 = vmatmul.f32.gmra.mxu0 %v1398
    %v1618 = vpop.f32.mrf.mxu0
    %v1619 = vadd.f32 0.0, %v1618
    %1620 = vdwg.mxu0
    %1621 = vmatpush.msra.mxu0 %v642
    %1622 = vmatpush.msra.mxu0 %v638
    %1623 = vmatpush.msra.mxu0 %v634
    %1624 = vmatpush.msra.mxu0 %v630
    %1625 = vmatpush.msra.mxu0 %v626
    %1626 = vmatpush.msra.mxu0 %v622
    %1627 = vmatpush.msra.mxu0 %v618
    %1628 = vmatpush.msra.mxu0 %v614
    %1629 = vmatpush.msra.mxu0 %v610
    %1630 = vmatpush.msra.mxu0 %v606
    %1631 = vmatpush.msra.mxu0 %v602
    %1632 = vmatpush.msra.mxu0 %v598
    %1633 = vmatpush.msra.mxu0 %v594
    %1634 = vmatpush.msra.mxu0 %v590
    %1635 = vmatpush.msra.mxu0 %v586
    %1636 = vmatpush.msra.mxu0 %v582
    %1637 = vmatmul.f32.gmra.mxu0 %v1398
    %v1638 = vpop.f32.mrf.mxu0
    %v1639 = vadd.f32 0.0, %v1638
    %1640 = vdwg.mxu0
    %1641 = vmatpush.msra.mxu0 %v643
    %1642 = vmatpush.msra.mxu0 %v639
    %1643 = vmatpush.msra.mxu0 %v635
    %1644 = vmatpush.msra.mxu0 %v631
    %1645 = vmatpush.msra.mxu0 %v627
    %1646 = vmatpush.msra.mxu0 %v623
    %1647 = vmatpush.msra.mxu0 %v619
    %1648 = vmatpush.msra.mxu0 %v615
    %1649 = vmatpush.msra.mxu0 %v611
    %1650 = vmatpush.msra.mxu0 %v607
    %1651 = vmatpush.msra.mxu0 %v603
    %1652 = vmatpush.msra.mxu0 %v599
    %1653 = vmatpush.msra.mxu0 %v595
    %1654 = vmatpush.msra.mxu0 %v591
    %1655 = vmatpush.msra.mxu0 %v587
    %1656 = vmatpush.msra.mxu0 %v583
    %1657 = vmatmul.f32.gmra.mxu0 %v1398
    %v1658 = vpop.f32.mrf.mxu0
    %v1659 = vadd.f32 0.0, %v1658
    %1660 = vdwg.mxu0
    %s1661 = smul.u32 3, 4
    %s1662 = smul.addr %s1661, 8
    %s1663 = scalar_lea.vmem [#allocation2], %s1662
    %v1664 = vld [vmem:[%s1663] sm:$0xff]
    %v1665 = vld [vmem:[%s1663 + $0x8] sm:$0xff]
    %v1666 = vld [vmem:[%s1663 + $0x10] sm:$0xff]
    %v1667 = vld [vmem:[%s1663 + $0x18] sm:$0xff]
    %v1668 = vadd.f32 %v1664, %v1599
    %v1669 = vadd.f32 %v1665, %v1619
    %v1670 = vadd.f32 %v1666, %v1639
    %v1671 = vadd.f32 %v1667, %v1659
    %v1672 = vmul.f32 %v1668, 0.5
    %v1673 = vtanh.pop %v1672
    %v1674 = vmul.f32 %v1673, 0.5
    %v1675 = vadd.f32 %v1674, 0.5
    %v1676 = vmul.f32 %v1669, 0.5
    %v1677 = vtanh.pop %v1676
    %v1678 = vmul.f32 %v1677, 0.5
    %v1679 = vadd.f32 %v1678, 0.5
    %v1680 = vtanh.pop %v1670
    %v1681 = vmul.f32 %v1671, 0.5
    %v1682 = vtanh.pop %v1681
    %v1683 = vmul.f32 %v1682, 0.5
    %v1684 = vadd.f32 %v1683, 0.5
    %v1685 = vmul.f32 %v1679, %v1396
    %v1686 = vmul.f32 %v1675, %v1680
    %v1687 = vadd.f32 %v1685, %v1686
    %v1688 = vtanh.pop %v1687
    %v1689 = vmul.f32 %v1684, %v1688
    %1690 = vmatpush.msra.mxu0 %v813
    %1691 = vmatpush.msra.mxu0 %v809
    %1692 = vmatpush.msra.mxu0 %v805
    %1693 = vmatpush.msra.mxu0 %v801
    %1694 = vmatpush.msra.mxu0 %v797
    %1695 = vmatpush.msra.mxu0 %v793
    %1696 = vmatpush.msra.mxu0 %v789
    %1697 = vmatpush.msra.mxu0 %v785
    %1698 = vmatpush.msra.mxu0 %v781
    %1699 = vmatpush.msra.mxu0 %v777
    %1700 = vmatpush.msra.mxu0 %v773
    %1701 = vmatpush.msra.mxu0 %v769
    %1702 = vmatpush.msra.mxu0 %v765
    %1703 = vmatpush.msra.mxu0 %v761
    %1704 = vmatpush.msra.mxu0 %v757
    %1705 = vmatpush.msra.mxu0 %v753
    %1706 = vmatmul.f32.gmra.mxu0 %v1689
    %v1707 = vpop.f32.mrf.mxu0
    %v1708 = vadd.f32 %v1519, %v1707
    %1709 = vdwg.mxu0
    %1710 = vmatpush.msra.mxu0 %v814
    %1711 = vmatpush.msra.mxu0 %v810
    %1712 = vmatpush.msra.mxu0 %v806
    %1713 = vmatpush.msra.mxu0 %v802
    %1714 = vmatpush.msra.mxu0 %v798
    %1715 = vmatpush.msra.mxu0 %v794
    %1716 = vmatpush.msra.mxu0 %v790
    %1717 = vmatpush.msra.mxu0 %v786
    %1718 = vmatpush.msra.mxu0 %v782
    %1719 = vmatpush.msra.mxu0 %v778
    %1720 = vmatpush.msra.mxu0 %v774
    %1721 = vmatpush.msra.mxu0 %v770
    %1722 = vmatpush.msra.mxu0 %v766
    %1723 = vmatpush.msra.mxu0 %v762
    %1724 = vmatpush.msra.mxu0 %v758
    %1725 = vmatpush.msra.mxu0 %v754
    %1726 = vmatmul.f32.gmra.mxu0 %v1689
    %v1727 = vpop.f32.mrf.mxu0
    %v1728 = vadd.f32 %v1539, %v1727
    %1729 = vdwg.mxu0
    %1730 = vmatpush.msra.mxu0 %v815
    %1731 = vmatpush.msra.mxu0 %v811
    %1732 = vmatpush.msra.mxu0 %v807
    %1733 = vmatpush.msra.mxu0 %v803
    %1734 = vmatpush.msra.mxu0 %v799
    %1735 = vmatpush.msra.mxu0 %v795
    %1736 = vmatpush.msra.mxu0 %v791
    %1737 = vmatpush.msra.mxu0 %v787
    %1738 = vmatpush.msra.mxu0 %v783
    %1739 = vmatpush.msra.mxu0 %v779
    %1740 = vmatpush.msra.mxu0 %v775
    %1741 = vmatpush.msra.mxu0 %v771
    %1742 = vmatpush.msra.mxu0 %v767
    %1743 = vmatpush.msra.mxu0 %v763
    %1744 = vmatpush.msra.mxu0 %v759
    %1745 = vmatpush.msra.mxu0 %v755
    %1746 = vmatmul.f32.gmra.mxu0 %v1689
    %v1747 = vpop.f32.mrf.mxu0
    %v1748 = vadd.f32 %v1559, %v1747
    %1749 = vdwg.mxu0
    %1750 = vmatpush.msra.mxu0 %v816
    %1751 = vmatpush.msra.mxu0 %v812
    %1752 = vmatpush.msra.mxu0 %v808
    %1753 = vmatpush.msra.mxu0 %v804
    %1754 = vmatpush.msra.mxu0 %v800
    %1755 = vmatpush.msra.mxu0 %v796
    %1756 = vmatpush.msra.mxu0 %v792
    %1757 = vmatpush.msra.mxu0 %v788
    %1758 = vmatpush.msra.mxu0 %v784
    %1759 = vmatpush.msra.mxu0 %v780
    %1760 = vmatpush.msra.mxu0 %v776
    %1761 = vmatpush.msra.mxu0 %v772
    %1762 = vmatpush.msra.mxu0 %v768
    %1763 = vmatpush.msra.mxu0 %v764
    %1764 = vmatpush.msra.mxu0 %v760
    %1765 = vmatpush.msra.mxu0 %v756
    %1766 = vmatmul.f32.gmra.mxu0 %v1689
    %v1767 = vpop.f32.mrf.mxu0
    %v1768 = vadd.f32 %v1579, %v1767
    %1769 = vdwg.mxu0
    %v1770 = vadd.f32 %v1708, %v432
    %v1771 = vadd.f32 %v1728, %v433
    %v1772 = vadd.f32 %v1748, %v434
    %v1773 = vadd.f32 %v1768, %v435
    %v1774 = vmul.f32 %v1770, 0.5
    %v1775 = vtanh.pop %v1774
    %v1776 = vmul.f32 %v1775, 0.5
    %v1777 = vadd.f32 %v1776, 0.5
    %v1778 = vmul.f32 %v1771, 0.5
    %v1779 = vtanh.pop %v1778
    %v1780 = vmul.f32 %v1779, 0.5
    %v1781 = vadd.f32 %v1780, 0.5
    %v1782 = vtanh.pop %v1772
    %v1783 = vmul.f32 %v1773, 0.5
    %v1784 = vtanh.pop %v1783
    %v1785 = vmul.f32 %v1784, 0.5
    %v1786 = vadd.f32 %v1785, 0.5
    %v1787 = vmul.f32 %v1781, %v1498
    %v1788 = vmul.f32 %v1777, %v1782
    %v1789 = vadd.f32 %v1787, %v1788
    %v1790 = vtanh.pop %v1789
    %v1791 = vmul.f32 %v1786, %v1790
    %1792 = vmatpush.msra.mxu0 %v496
    %1793 = vmatpush.msra.mxu0 %v492
    %1794 = vmatpush.msra.mxu0 %v488
    %1795 = vmatpush.msra.mxu0 %v484
    %1796 = vmatpush.msra.mxu0 %v480
    %1797 = vmatpush.msra.mxu0 %v476
    %1798 = vmatpush.msra.mxu0 %v472
    %1799 = vmatpush.msra.mxu0 %v468
    %1800 = vmatpush.msra.mxu0 %v464
    %1801 = vmatpush.msra.mxu0 %v460
    %1802 = vmatpush.msra.mxu0 %v456
    %1803 = vmatpush.msra.mxu0 %v452
    %1804 = vmatpush.msra.mxu0 %v448
    %1805 = vmatpush.msra.mxu0 %v444
    %1806 = vmatpush.msra.mxu0 %v440
    %1807 = vmatpush.msra.mxu0 %v436
    %1808 = vmatmul.f32.gmra.mxu0 %v1791
    %v1809 = vpop.f32.mrf.mxu0
    %v1810 = vadd.f32 0.0, %v1809
    %1811 = vdwg.mxu0
    %1812 = vmatpush.msra.mxu0 %v497
    %1813 = vmatpush.msra.mxu0 %v493
    %1814 = vmatpush.msra.mxu0 %v489
    %1815 = vmatpush.msra.mxu0 %v485
    %1816 = vmatpush.msra.mxu0 %v481
    %1817 = vmatpush.msra.mxu0 %v477
    %1818 = vmatpush.msra.mxu0 %v473
    %1819 = vmatpush.msra.mxu0 %v469
    %1820 = vmatpush.msra.mxu0 %v465
    %1821 = vmatpush.msra.mxu0 %v461
    %1822 = vmatpush.msra.mxu0 %v457
    %1823 = vmatpush.msra.mxu0 %v453
    %1824 = vmatpush.msra.mxu0 %v449
    %1825 = vmatpush.msra.mxu0 %v445
    %1826 = vmatpush.msra.mxu0 %v441
    %1827 = vmatpush.msra.mxu0 %v437
    %1828 = vmatmul.f32.gmra.mxu0 %v1791
    %v1829 = vpop.f32.mrf.mxu0
    %v1830 = vadd.f32 0.0, %v1829
    %1831 = vdwg.mxu0
    %1832 = vmatpush.msra.mxu0 %v498
    %1833 = vmatpush.msra.mxu0 %v494
    %1834 = vmatpush.msra.mxu0 %v490
    %1835 = vmatpush.msra.mxu0 %v486
    %1836 = vmatpush.msra.mxu0 %v482
    %1837 = vmatpush.msra.mxu0 %v478
    %1838 = vmatpush.msra.mxu0 %v474
    %1839 = vmatpush.msra.mxu0 %v470
    %1840 = vmatpush.msra.mxu0 %v466
    %1841 = vmatpush.msra.mxu0 %v462
    %1842 = vmatpush.msra.mxu0 %v458
    %1843 = vmatpush.msra.mxu0 %v454
    %1844 = vmatpush.msra.mxu0 %v450
    %1845 = vmatpush.msra.mxu0 %v446
    %1846 = vmatpush.msra.mxu0 %v442
    %1847 = vmatpush.msra.mxu0 %v438
    %1848 = vmatmul.f32.gmra.mxu0 %v1791
    %v1849 = vpop.f32.mrf.mxu0
    %v1850 = vadd.f32 0.0, %v1849
    %1851 = vdwg.mxu0
    %1852 = vmatpush.msra.mxu0 %v499
    %1853 = vmatpush.msra.mxu0 %v495
    %1854 = vmatpush.msra.mxu0 %v491
    %1855 = vmatpush.msra.mxu0 %v487
    %1856 = vmatpush.msra.mxu0 %v483
    %1857 = vmatpush.msra.mxu0 %v479
    %1858 = vmatpush.msra.mxu0 %v475
    %1859 = vmatpush.msra.mxu0 %v471
    %1860 = vmatpush.msra.mxu0 %v467
    %1861 = vmatpush.msra.mxu0 %v463
    %1862 = vmatpush.msra.mxu0 %v459
    %1863 = vmatpush.msra.mxu0 %v455
    %1864 = vmatpush.msra.mxu0 %v451
    %1865 = vmatpush.msra.mxu0 %v447
    %1866 = vmatpush.msra.mxu0 %v443
    %1867 = vmatpush.msra.mxu0 %v439
    %1868 = vmatmul.f32.gmra.mxu0 %v1791
    %v1869 = vpop.f32.mrf.mxu0
    %v1870 = vadd.f32 0.0, %v1869
    %1871 = vdwg.mxu0
    %1872 = vmatpush.msra.mxu0 %v640
    %1873 = vmatpush.msra.mxu0 %v636
    %1874 = vmatpush.msra.mxu0 %v632
    %1875 = vmatpush.msra.mxu0 %v628
    %1876 = vmatpush.msra.mxu0 %v624
    %1877 = vmatpush.msra.mxu0 %v620
    %1878 = vmatpush.msra.mxu0 %v616
    %1879 = vmatpush.msra.mxu0 %v612
    %1880 = vmatpush.msra.mxu0 %v608
    %1881 = vmatpush.msra.mxu0 %v604
    %1882 = vmatpush.msra.mxu0 %v600
    %1883 = vmatpush.msra.mxu0 %v596
    %1884 = vmatpush.msra.mxu0 %v592
    %1885 = vmatpush.msra.mxu0 %v588
    %1886 = vmatpush.msra.mxu0 %v584
    %1887 = vmatpush.msra.mxu0 %v580
    %1888 = vmatmul.f32.gmra.mxu0 %v1689
    %v1889 = vpop.f32.mrf.mxu0
    %v1890 = vadd.f32 0.0, %v1889
    %1891 = vdwg.mxu0
    %1892 = vmatpush.msra.mxu0 %v641
    %1893 = vmatpush.msra.mxu0 %v637
    %1894 = vmatpush.msra.mxu0 %v633
    %1895 = vmatpush.msra.mxu0 %v629
    %1896 = vmatpush.msra.mxu0 %v625
    %1897 = vmatpush.msra.mxu0 %v621
    %1898 = vmatpush.msra.mxu0 %v617
    %1899 = vmatpush.msra.mxu0 %v613
    %1900 = vmatpush.msra.mxu0 %v609
    %1901 = vmatpush.msra.mxu0 %v605
    %1902 = vmatpush.msra.mxu0 %v601
    %1903 = vmatpush.msra.mxu0 %v597
    %1904 = vmatpush.msra.mxu0 %v593
    %1905 = vmatpush.msra.mxu0 %v589
    %1906 = vmatpush.msra.mxu0 %v585
    %1907 = vmatpush.msra.mxu0 %v581
    %1908 = vmatmul.f32.gmra.mxu0 %v1689
    %v1909 = vpop.f32.mrf.mxu0
    %v1910 = vadd.f32 0.0, %v1909
    %1911 = vdwg.mxu0
    %1912 = vmatpush.msra.mxu0 %v642
    %1913 = vmatpush.msra.mxu0 %v638
    %1914 = vmatpush.msra.mxu0 %v634
    %1915 = vmatpush.msra.mxu0 %v630
    %1916 = vmatpush.msra.mxu0 %v626
    %1917 = vmatpush.msra.mxu0 %v622
    %1918 = vmatpush.msra.mxu0 %v618
    %1919 = vmatpush.msra.mxu0 %v614
    %1920 = vmatpush.msra.mxu0 %v610
    %1921 = vmatpush.msra.mxu0 %v606
    %1922 = vmatpush.msra.mxu0 %v602
    %1923 = vmatpush.msra.mxu0 %v598
    %1924 = vmatpush.msra.mxu0 %v594
    %1925 = vmatpush.msra.mxu0 %v590
    %1926 = vmatpush.msra.mxu0 %v586
    %1927 = vmatpush.msra.mxu0 %v582
    %1928 = vmatmul.f32.gmra.mxu0 %v1689
    %v1929 = vpop.f32.mrf.mxu0
    %v1930 = vadd.f32 0.0, %v1929
    %1931 = vdwg.mxu0
    %1932 = vmatpush.msra.mxu0 %v643
    %1933 = vmatpush.msra.mxu0 %v639
    %1934 = vmatpush.msra.mxu0 %v635
    %1935 = vmatpush.msra.mxu0 %v631
    %1936 = vmatpush.msra.mxu0 %v627
    %1937 = vmatpush.msra.mxu0 %v623
    %1938 = vmatpush.msra.mxu0 %v619
    %1939 = vmatpush.msra.mxu0 %v615
    %1940 = vmatpush.msra.mxu0 %v611
    %1941 = vmatpush.msra.mxu0 %v607
    %1942 = vmatpush.msra.mxu0 %v603
    %1943 = vmatpush.msra.mxu0 %v599
    %1944 = vmatpush.msra.mxu0 %v595
    %1945 = vmatpush.msra.mxu0 %v591
    %1946 = vmatpush.msra.mxu0 %v587
    %1947 = vmatpush.msra.mxu0 %v583
    %1948 = vmatmul.f32.gmra.mxu0 %v1689
    %v1949 = vpop.f32.mrf.mxu0
    %v1950 = vadd.f32 0.0, %v1949
    %1951 = vdwg.mxu0
    %s1952 = smul.u32 4, 4
    %s1953 = smul.addr %s1952, 8
    %s1954 = scalar_lea.vmem [#allocation2], %s1953
    %v1955 = vld [vmem:[%s1954] sm:$0xff]
    %v1956 = vld [vmem:[%s1954 + $0x8] sm:$0xff]
    %v1957 = vld [vmem:[%s1954 + $0x10] sm:$0xff]
    %v1958 = vld [vmem:[%s1954 + $0x18] sm:$0xff]
    %v1959 = vadd.f32 %v1955, %v1890
    %v1960 = vadd.f32 %v1956, %v1910
    %v1961 = vadd.f32 %v1957, %v1930
    %v1962 = vadd.f32 %v1958, %v1950
    %v1963 = vmul.f32 %v1959, 0.5
    %v1964 = vtanh.pop %v1963
    %v1965 = vmul.f32 %v1964, 0.5
    %v1966 = vadd.f32 %v1965, 0.5
    %v1967 = vmul.f32 %v1960, 0.5
    %v1968 = vtanh.pop %v1967
    %v1969 = vmul.f32 %v1968, 0.5
    %v1970 = vadd.f32 %v1969, 0.5
    %v1971 = vtanh.pop %v1961
    %v1972 = vmul.f32 %v1962, 0.5
    %v1973 = vtanh.pop %v1972
    %v1974 = vmul.f32 %v1973, 0.5
    %v1975 = vadd.f32 %v1974, 0.5
    %v1976 = vmul.f32 %v1970, %v1687
    %v1977 = vmul.f32 %v1966, %v1971
    %v1978 = vadd.f32 %v1976, %v1977
    %v1979 = vtanh.pop %v1978
    %v1980 = vmul.f32 %v1975, %v1979
    %1981 = vmatpush.msra.mxu0 %v813
    %1982 = vmatpush.msra.mxu0 %v809
    %1983 = vmatpush.msra.mxu0 %v805
    %1984 = vmatpush.msra.mxu0 %v801
    %1985 = vmatpush.msra.mxu0 %v797
    %1986 = vmatpush.msra.mxu0 %v793
    %1987 = vmatpush.msra.mxu0 %v789
    %1988 = vmatpush.msra.mxu0 %v785
    %1989 = vmatpush.msra.mxu0 %v781
    %1990 = vmatpush.msra.mxu0 %v777
    %1991 = vmatpush.msra.mxu0 %v773
    %1992 = vmatpush.msra.mxu0 %v769
    %1993 = vmatpush.msra.mxu0 %v765
    %1994 = vmatpush.msra.mxu0 %v761
    %1995 = vmatpush.msra.mxu0 %v757
    %1996 = vmatpush.msra.mxu0 %v753
    %1997 = vmatmul.f32.gmra.mxu0 %v1980
    %v1998 = vpop.f32.mrf.mxu0
    %v1999 = vadd.f32 %v1810, %v1998
    %2000 = vdwg.mxu0
    %2001 = vmatpush.msra.mxu0 %v814
    %2002 = vmatpush.msra.mxu0 %v810
    %2003 = vmatpush.msra.mxu0 %v806
    %2004 = vmatpush.msra.mxu0 %v802
    %2005 = vmatpush.msra.mxu0 %v798
    %2006 = vmatpush.msra.mxu0 %v794
    %2007 = vmatpush.msra.mxu0 %v790
    %2008 = vmatpush.msra.mxu0 %v786
    %2009 = vmatpush.msra.mxu0 %v782
    %2010 = vmatpush.msra.mxu0 %v778
    %2011 = vmatpush.msra.mxu0 %v774
    %2012 = vmatpush.msra.mxu0 %v770
    %2013 = vmatpush.msra.mxu0 %v766
    %2014 = vmatpush.msra.mxu0 %v762
    %2015 = vmatpush.msra.mxu0 %v758
    %2016 = vmatpush.msra.mxu0 %v754
    %2017 = vmatmul.f32.gmra.mxu0 %v1980
    %v2018 = vpop.f32.mrf.mxu0
    %v2019 = vadd.f32 %v1830, %v2018
    %2020 = vdwg.mxu0
    %2021 = vmatpush.msra.mxu0 %v815
    %2022 = vmatpush.msra.mxu0 %v811
    %2023 = vmatpush.msra.mxu0 %v807
    %2024 = vmatpush.msra.mxu0 %v803
    %2025 = vmatpush.msra.mxu0 %v799
    %2026 = vmatpush.msra.mxu0 %v795
    %2027 = vmatpush.msra.mxu0 %v791
    %2028 = vmatpush.msra.mxu0 %v787
    %2029 = vmatpush.msra.mxu0 %v783
    %2030 = vmatpush.msra.mxu0 %v779
    %2031 = vmatpush.msra.mxu0 %v775
    %2032 = vmatpush.msra.mxu0 %v771
    %2033 = vmatpush.msra.mxu0 %v767
    %2034 = vmatpush.msra.mxu0 %v763
    %2035 = vmatpush.msra.mxu0 %v759
    %2036 = vmatpush.msra.mxu0 %v755
    %2037 = vmatmul.f32.gmra.mxu0 %v1980
    %v2038 = vpop.f32.mrf.mxu0
    %v2039 = vadd.f32 %v1850, %v2038
    %2040 = vdwg.mxu0
    %2041 = vmatpush.msra.mxu0 %v816
    %2042 = vmatpush.msra.mxu0 %v812
    %2043 = vmatpush.msra.mxu0 %v808
    %2044 = vmatpush.msra.mxu0 %v804
    %2045 = vmatpush.msra.mxu0 %v800
    %2046 = vmatpush.msra.mxu0 %v796
    %2047 = vmatpush.msra.mxu0 %v792
    %2048 = vmatpush.msra.mxu0 %v788
    %2049 = vmatpush.msra.mxu0 %v784
    %2050 = vmatpush.msra.mxu0 %v780
    %2051 = vmatpush.msra.mxu0 %v776
    %2052 = vmatpush.msra.mxu0 %v772
    %2053 = vmatpush.msra.mxu0 %v768
    %2054 = vmatpush.msra.mxu0 %v764
    %2055 = vmatpush.msra.mxu0 %v760
    %2056 = vmatpush.msra.mxu0 %v756
    %2057 = vmatmul.f32.gmra.mxu0 %v1980
    %v2058 = vpop.f32.mrf.mxu0
    %v2059 = vadd.f32 %v1870, %v2058
    %2060 = vdwg.mxu0
    %v2061 = vadd.f32 %v1999, %v432
    %v2062 = vadd.f32 %v2019, %v433
    %v2063 = vadd.f32 %v2039, %v434
    %v2064 = vadd.f32 %v2059, %v435
    %v2065 = vmul.f32 %v2061, 0.5
    %v2066 = vtanh.pop %v2065
    %v2067 = vmul.f32 %v2066, 0.5
    %v2068 = vadd.f32 %v2067, 0.5
    %v2069 = vmul.f32 %v2062, 0.5
    %v2070 = vtanh.pop %v2069
    %v2071 = vmul.f32 %v2070, 0.5
    %v2072 = vadd.f32 %v2071, 0.5
    %v2073 = vtanh.pop %v2063
    %v2074 = vmul.f32 %v2064, 0.5
    %v2075 = vtanh.pop %v2074
    %v2076 = vmul.f32 %v2075, 0.5
    %v2077 = vadd.f32 %v2076, 0.5
    %v2078 = vmul.f32 %v2072, %v1789
    %v2079 = vmul.f32 %v2068, %v2073
    %v2080 = vadd.f32 %v2078, %v2079
    %v2081 = vtanh.pop %v2080
    %v2082 = vmul.f32 %v2077, %v2081
    %2083 = vmatpush.msra.mxu0 %v496
    %2084 = vmatpush.msra.mxu0 %v492
    %2085 = vmatpush.msra.mxu0 %v488
    %2086 = vmatpush.msra.mxu0 %v484
    %2087 = vmatpush.msra.mxu0 %v480
    %2088 = vmatpush.msra.mxu0 %v476
    %2089 = vmatpush.msra.mxu0 %v472
    %2090 = vmatpush.msra.mxu0 %v468
    %2091 = vmatpush.msra.mxu0 %v464
    %2092 = vmatpush.msra.mxu0 %v460
    %2093 = vmatpush.msra.mxu0 %v456
    %2094 = vmatpush.msra.mxu0 %v452
    %2095 = vmatpush.msra.mxu0 %v448
    %2096 = vmatpush.msra.mxu0 %v444
    %2097 = vmatpush.msra.mxu0 %v440
    %2098 = vmatpush.msra.mxu0 %v436
    %2099 = vmatmul.f32.gmra.mxu0 %v2082
    %v2100 = vpop.f32.mrf.mxu0
    %v2101 = vadd.f32 0.0, %v2100
    %2102 = vdwg.mxu0
    %2103 = vmatpush.msra.mxu0 %v497
    %2104 = vmatpush.msra.mxu0 %v493
    %2105 = vmatpush.msra.mxu0 %v489
    %2106 = vmatpush.msra.mxu0 %v485
    %2107 = vmatpush.msra.mxu0 %v481
    %2108 = vmatpush.msra.mxu0 %v477
    %2109 = vmatpush.msra.mxu0 %v473
    %2110 = vmatpush.msra.mxu0 %v469
    %2111 = vmatpush.msra.mxu0 %v465
    %2112 = vmatpush.msra.mxu0 %v461
    %2113 = vmatpush.msra.mxu0 %v457
    %2114 = vmatpush.msra.mxu0 %v453
    %2115 = vmatpush.msra.mxu0 %v449
    %2116 = vmatpush.msra.mxu0 %v445
    %2117 = vmatpush.msra.mxu0 %v441
    %2118 = vmatpush.msra.mxu0 %v437
    %2119 = vmatmul.f32.gmra.mxu0 %v2082
    %v2120 = vpop.f32.mrf.mxu0
    %v2121 = vadd.f32 0.0, %v2120
    %2122 = vdwg.mxu0
    %2123 = vmatpush.msra.mxu0 %v498
    %2124 = vmatpush.msra.mxu0 %v494
    %2125 = vmatpush.msra.mxu0 %v490
    %2126 = vmatpush.msra.mxu0 %v486
    %2127 = vmatpush.msra.mxu0 %v482
    %2128 = vmatpush.msra.mxu0 %v478
    %2129 = vmatpush.msra.mxu0 %v474
    %2130 = vmatpush.msra.mxu0 %v470
    %2131 = vmatpush.msra.mxu0 %v466
    %2132 = vmatpush.msra.mxu0 %v462
    %2133 = vmatpush.msra.mxu0 %v458
    %2134 = vmatpush.msra.mxu0 %v454
    %2135 = vmatpush.msra.mxu0 %v450
    %2136 = vmatpush.msra.mxu0 %v446
    %2137 = vmatpush.msra.mxu0 %v442
    %2138 = vmatpush.msra.mxu0 %v438
    %2139 = vmatmul.f32.gmra.mxu0 %v2082
    %v2140 = vpop.f32.mrf.mxu0
    %v2141 = vadd.f32 0.0, %v2140
    %2142 = vdwg.mxu0
    %2143 = vmatpush.msra.mxu0 %v499
    %2144 = vmatpush.msra.mxu0 %v495
    %2145 = vmatpush.msra.mxu0 %v491
    %2146 = vmatpush.msra.mxu0 %v487
    %2147 = vmatpush.msra.mxu0 %v483
    %2148 = vmatpush.msra.mxu0 %v479
    %2149 = vmatpush.msra.mxu0 %v475
    %2150 = vmatpush.msra.mxu0 %v471
    %2151 = vmatpush.msra.mxu0 %v467
    %2152 = vmatpush.msra.mxu0 %v463
    %2153 = vmatpush.msra.mxu0 %v459
    %2154 = vmatpush.msra.mxu0 %v455
    %2155 = vmatpush.msra.mxu0 %v451
    %2156 = vmatpush.msra.mxu0 %v447
    %2157 = vmatpush.msra.mxu0 %v443
    %2158 = vmatpush.msra.mxu0 %v439
    %2159 = vmatmul.f32.gmra.mxu0 %v2082
    %v2160 = vpop.f32.mrf.mxu0
    %v2161 = vadd.f32 0.0, %v2160
    %2162 = vdwg.mxu0
    %2163 = vmatpush.msra.mxu0 %v640
    %2164 = vmatpush.msra.mxu0 %v636
    %2165 = vmatpush.msra.mxu0 %v632
    %2166 = vmatpush.msra.mxu0 %v628
    %2167 = vmatpush.msra.mxu0 %v624
    %2168 = vmatpush.msra.mxu0 %v620
    %2169 = vmatpush.msra.mxu0 %v616
    %2170 = vmatpush.msra.mxu0 %v612
    %2171 = vmatpush.msra.mxu0 %v608
    %2172 = vmatpush.msra.mxu0 %v604
    %2173 = vmatpush.msra.mxu0 %v600
    %2174 = vmatpush.msra.mxu0 %v596
    %2175 = vmatpush.msra.mxu0 %v592
    %2176 = vmatpush.msra.mxu0 %v588
    %2177 = vmatpush.msra.mxu0 %v584
    %2178 = vmatpush.msra.mxu0 %v580
    %2179 = vmatmul.f32.gmra.mxu0 %v1980
    %v2180 = vpop.f32.mrf.mxu0
    %v2181 = vadd.f32 0.0, %v2180
    %2182 = vdwg.mxu0
    %2183 = vmatpush.msra.mxu0 %v641
    %2184 = vmatpush.msra.mxu0 %v637
    %2185 = vmatpush.msra.mxu0 %v633
    %2186 = vmatpush.msra.mxu0 %v629
    %2187 = vmatpush.msra.mxu0 %v625
    %2188 = vmatpush.msra.mxu0 %v621
    %2189 = vmatpush.msra.mxu0 %v617
    %2190 = vmatpush.msra.mxu0 %v613
    %2191 = vmatpush.msra.mxu0 %v609
    %2192 = vmatpush.msra.mxu0 %v605
    %2193 = vmatpush.msra.mxu0 %v601
    %2194 = vmatpush.msra.mxu0 %v597
    %2195 = vmatpush.msra.mxu0 %v593
    %2196 = vmatpush.msra.mxu0 %v589
    %2197 = vmatpush.msra.mxu0 %v585
    %2198 = vmatpush.msra.mxu0 %v581
    %2199 = vmatmul.f32.gmra.mxu0 %v1980
    %v2200 = vpop.f32.mrf.mxu0
    %v2201 = vadd.f32 0.0, %v2200
    %2202 = vdwg.mxu0
    %2203 = vmatpush.msra.mxu0 %v642
    %2204 = vmatpush.msra.mxu0 %v638
    %2205 = vmatpush.msra.mxu0 %v634
    %2206 = vmatpush.msra.mxu0 %v630
    %2207 = vmatpush.msra.mxu0 %v626
    %2208 = vmatpush.msra.mxu0 %v622
    %2209 = vmatpush.msra.mxu0 %v618
    %2210 = vmatpush.msra.mxu0 %v614
    %2211 = vmatpush.msra.mxu0 %v610
    %2212 = vmatpush.msra.mxu0 %v606
    %2213 = vmatpush.msra.mxu0 %v602
    %2214 = vmatpush.msra.mxu0 %v598
    %2215 = vmatpush.msra.mxu0 %v594
    %2216 = vmatpush.msra.mxu0 %v590
    %2217 = vmatpush.msra.mxu0 %v586
    %2218 = vmatpush.msra.mxu0 %v582
    %2219 = vmatmul.f32.gmra.mxu0 %v1980
    %v2220 = vpop.f32.mrf.mxu0
    %v2221 = vadd.f32 0.0, %v2220
    %2222 = vdwg.mxu0
    %2223 = vmatpush.msra.mxu0 %v643
    %2224 = vmatpush.msra.mxu0 %v639
    %2225 = vmatpush.msra.mxu0 %v635
    %2226 = vmatpush.msra.mxu0 %v631
    %2227 = vmatpush.msra.mxu0 %v627
    %2228 = vmatpush.msra.mxu0 %v623
    %2229 = vmatpush.msra.mxu0 %v619
    %2230 = vmatpush.msra.mxu0 %v615
    %2231 = vmatpush.msra.mxu0 %v611
    %2232 = vmatpush.msra.mxu0 %v607
    %2233 = vmatpush.msra.mxu0 %v603
    %2234 = vmatpush.msra.mxu0 %v599
    %2235 = vmatpush.msra.mxu0 %v595
    %2236 = vmatpush.msra.mxu0 %v591
    %2237 = vmatpush.msra.mxu0 %v587
    %2238 = vmatpush.msra.mxu0 %v583
    %2239 = vmatmul.f32.gmra.mxu0 %v1980
    %v2240 = vpop.f32.mrf.mxu0
    %v2241 = vadd.f32 0.0, %v2240
    %2242 = vdwg.mxu0
    %s2243 = smul.u32 5, 4
    %s2244 = smul.addr %s2243, 8
    %s2245 = scalar_lea.vmem [#allocation2], %s2244
    %v2246 = vld [vmem:[%s2245] sm:$0xff]
    %v2247 = vld [vmem:[%s2245 + $0x8] sm:$0xff]
    %v2248 = vld [vmem:[%s2245 + $0x10] sm:$0xff]
    %v2249 = vld [vmem:[%s2245 + $0x18] sm:$0xff]
    %v2250 = vadd.f32 %v2246, %v2181
    %v2251 = vadd.f32 %v2247, %v2201
    %v2252 = vadd.f32 %v2248, %v2221
    %v2253 = vadd.f32 %v2249, %v2241
    %v2254 = vmul.f32 %v2250, 0.5
    %v2255 = vtanh.pop %v2254
    %v2256 = vmul.f32 %v2255, 0.5
    %v2257 = vadd.f32 %v2256, 0.5
    %v2258 = vmul.f32 %v2251, 0.5
    %v2259 = vtanh.pop %v2258
    %v2260 = vmul.f32 %v2259, 0.5
    %v2261 = vadd.f32 %v2260, 0.5
    %v2262 = vtanh.pop %v2252
    %v2263 = vmul.f32 %v2253, 0.5
    %v2264 = vtanh.pop %v2263
    %v2265 = vmul.f32 %v2264, 0.5
    %v2266 = vadd.f32 %v2265, 0.5
    %v2267 = vmul.f32 %v2261, %v1978
    %v2268 = vmul.f32 %v2257, %v2262
    %v2269 = vadd.f32 %v2267, %v2268
    %v2270 = vtanh.pop %v2269
    %v2271 = vmul.f32 %v2266, %v2270
    %2272 = vmatpush.msra.mxu0 %v813
    %2273 = vmatpush.msra.mxu0 %v809
    %2274 = vmatpush.msra.mxu0 %v805
    %2275 = vmatpush.msra.mxu0 %v801
    %2276 = vmatpush.msra.mxu0 %v797
    %2277 = vmatpush.msra.mxu0 %v793
    %2278 = vmatpush.msra.mxu0 %v789
    %2279 = vmatpush.msra.mxu0 %v785
    %2280 = vmatpush.msra.mxu0 %v781
    %2281 = vmatpush.msra.mxu0 %v777
    %2282 = vmatpush.msra.mxu0 %v773
    %2283 = vmatpush.msra.mxu0 %v769
    %2284 = vmatpush.msra.mxu0 %v765
    %2285 = vmatpush.msra.mxu0 %v761
    %2286 = vmatpush.msra.mxu0 %v757
    %2287 = vmatpush.msra.mxu0 %v753
    %2288 = vmatmul.f32.gmra.mxu0 %v2271
    %v2289 = vpop.f32.mrf.mxu0
    %v2290 = vadd.f32 %v2101, %v2289
    %2291 = vdwg.mxu0
    %2292 = vmatpush.msra.mxu0 %v814
    %2293 = vmatpush.msra.mxu0 %v810
    %2294 = vmatpush.msra.mxu0 %v806
    %2295 = vmatpush.msra.mxu0 %v802
    %2296 = vmatpush.msra.mxu0 %v798
    %2297 = vmatpush.msra.mxu0 %v794
    %2298 = vmatpush.msra.mxu0 %v790
    %2299 = vmatpush.msra.mxu0 %v786
    %2300 = vmatpush.msra.mxu0 %v782
    %2301 = vmatpush.msra.mxu0 %v778
    %2302 = vmatpush.msra.mxu0 %v774
    %2303 = vmatpush.msra.mxu0 %v770
    %2304 = vmatpush.msra.mxu0 %v766
    %2305 = vmatpush.msra.mxu0 %v762
    %2306 = vmatpush.msra.mxu0 %v758
    %2307 = vmatpush.msra.mxu0 %v754
    %2308 = vmatmul.f32.gmra.mxu0 %v2271
    %v2309 = vpop.f32.mrf.mxu0
    %v2310 = vadd.f32 %v2121, %v2309
    %2311 = vdwg.mxu0
    %2312 = vmatpush.msra.mxu0 %v815
    %2313 = vmatpush.msra.mxu0 %v811
    %2314 = vmatpush.msra.mxu0 %v807
    %2315 = vmatpush.msra.mxu0 %v803
    %2316 = vmatpush.msra.mxu0 %v799
    %2317 = vmatpush.msra.mxu0 %v795
    %2318 = vmatpush.msra.mxu0 %v791
    %2319 = vmatpush.msra.mxu0 %v787
    %2320 = vmatpush.msra.mxu0 %v783
    %2321 = vmatpush.msra.mxu0 %v779
    %2322 = vmatpush.msra.mxu0 %v775
    %2323 = vmatpush.msra.mxu0 %v771
    %2324 = vmatpush.msra.mxu0 %v767
    %2325 = vmatpush.msra.mxu0 %v763
    %2326 = vmatpush.msra.mxu0 %v759
    %2327 = vmatpush.msra.mxu0 %v755
    %2328 = vmatmul.f32.gmra.mxu0 %v2271
    %v2329 = vpop.f32.mrf.mxu0
    %v2330 = vadd.f32 %v2141, %v2329
    %2331 = vdwg.mxu0
    %2332 = vmatpush.msra.mxu0 %v816
    %2333 = vmatpush.msra.mxu0 %v812
    %2334 = vmatpush.msra.mxu0 %v808
    %2335 = vmatpush.msra.mxu0 %v804
    %2336 = vmatpush.msra.mxu0 %v800
    %2337 = vmatpush.msra.mxu0 %v796
    %2338 = vmatpush.msra.mxu0 %v792
    %2339 = vmatpush.msra.mxu0 %v788
    %2340 = vmatpush.msra.mxu0 %v784
    %2341 = vmatpush.msra.mxu0 %v780
    %2342 = vmatpush.msra.mxu0 %v776
    %2343 = vmatpush.msra.mxu0 %v772
    %2344 = vmatpush.msra.mxu0 %v768
    %2345 = vmatpush.msra.mxu0 %v764
    %2346 = vmatpush.msra.mxu0 %v760
    %2347 = vmatpush.msra.mxu0 %v756
    %2348 = vmatmul.f32.gmra.mxu0 %v2271
    %v2349 = vpop.f32.mrf.mxu0
    %v2350 = vadd.f32 %v2161, %v2349
    %2351 = vdwg.mxu0
    %v2352 = vadd.f32 %v2290, %v432
    %v2353 = vadd.f32 %v2310, %v433
    %v2354 = vadd.f32 %v2330, %v434
    %v2355 = vadd.f32 %v2350, %v435
    %v2356 = vmul.f32 %v2352, 0.5
    %v2357 = vtanh.pop %v2356
    %v2358 = vmul.f32 %v2357, 0.5
    %v2359 = vadd.f32 %v2358, 0.5
    %v2360 = vmul.f32 %v2353, 0.5
    %v2361 = vtanh.pop %v2360
    %v2362 = vmul.f32 %v2361, 0.5
    %v2363 = vadd.f32 %v2362, 0.5
    %v2364 = vtanh.pop %v2354
    %v2365 = vmul.f32 %v2355, 0.5
    %v2366 = vtanh.pop %v2365
    %v2367 = vmul.f32 %v2366, 0.5
    %v2368 = vadd.f32 %v2367, 0.5
    %v2369 = vmul.f32 %v2363, %v2080
    %v2370 = vmul.f32 %v2359, %v2364
    %v2371 = vadd.f32 %v2369, %v2370
    %v2372 = vtanh.pop %v2371
    %v2373 = vmul.f32 %v2368, %v2372
    %2374 = vmatpush.msra.mxu0 %v496
    %2375 = vmatpush.msra.mxu0 %v492
    %2376 = vmatpush.msra.mxu0 %v488
    %2377 = vmatpush.msra.mxu0 %v484
    %2378 = vmatpush.msra.mxu0 %v480
    %2379 = vmatpush.msra.mxu0 %v476
    %2380 = vmatpush.msra.mxu0 %v472
    %2381 = vmatpush.msra.mxu0 %v468
    %2382 = vmatpush.msra.mxu0 %v464
    %2383 = vmatpush.msra.mxu0 %v460
    %2384 = vmatpush.msra.mxu0 %v456
    %2385 = vmatpush.msra.mxu0 %v452
    %2386 = vmatpush.msra.mxu0 %v448
    %2387 = vmatpush.msra.mxu0 %v444
    %2388 = vmatpush.msra.mxu0 %v440
    %2389 = vmatpush.msra.mxu0 %v436
    %2390 = vmatmul.f32.gmra.mxu0 %v2373
    %v2391 = vpop.f32.mrf.mxu0
    %v2392 = vadd.f32 0.0, %v2391
    %2393 = vdwg.mxu0
    %2394 = vmatpush.msra.mxu0 %v497
    %2395 = vmatpush.msra.mxu0 %v493
    %2396 = vmatpush.msra.mxu0 %v489
    %2397 = vmatpush.msra.mxu0 %v485
    %2398 = vmatpush.msra.mxu0 %v481
    %2399 = vmatpush.msra.mxu0 %v477
    %2400 = vmatpush.msra.mxu0 %v473
    %2401 = vmatpush.msra.mxu0 %v469
    %2402 = vmatpush.msra.mxu0 %v465
    %2403 = vmatpush.msra.mxu0 %v461
    %2404 = vmatpush.msra.mxu0 %v457
    %2405 = vmatpush.msra.mxu0 %v453
    %2406 = vmatpush.msra.mxu0 %v449
    %2407 = vmatpush.msra.mxu0 %v445
    %2408 = vmatpush.msra.mxu0 %v441
    %2409 = vmatpush.msra.mxu0 %v437
    %2410 = vmatmul.f32.gmra.mxu0 %v2373
    %v2411 = vpop.f32.mrf.mxu0
    %v2412 = vadd.f32 0.0, %v2411
    %2413 = vdwg.mxu0
    %2414 = vmatpush.msra.mxu0 %v498
    %2415 = vmatpush.msra.mxu0 %v494
    %2416 = vmatpush.msra.mxu0 %v490
    %2417 = vmatpush.msra.mxu0 %v486
    %2418 = vmatpush.msra.mxu0 %v482
    %2419 = vmatpush.msra.mxu0 %v478
    %2420 = vmatpush.msra.mxu0 %v474
    %2421 = vmatpush.msra.mxu0 %v470
    %2422 = vmatpush.msra.mxu0 %v466
    %2423 = vmatpush.msra.mxu0 %v462
    %2424 = vmatpush.msra.mxu0 %v458
    %2425 = vmatpush.msra.mxu0 %v454
    %2426 = vmatpush.msra.mxu0 %v450
    %2427 = vmatpush.msra.mxu0 %v446
    %2428 = vmatpush.msra.mxu0 %v442
    %2429 = vmatpush.msra.mxu0 %v438
    %2430 = vmatmul.f32.gmra.mxu0 %v2373
    %v2431 = vpop.f32.mrf.mxu0
    %v2432 = vadd.f32 0.0, %v2431
    %2433 = vdwg.mxu0
    %2434 = vmatpush.msra.mxu0 %v499
    %2435 = vmatpush.msra.mxu0 %v495
    %2436 = vmatpush.msra.mxu0 %v491
    %2437 = vmatpush.msra.mxu0 %v487
    %2438 = vmatpush.msra.mxu0 %v483
    %2439 = vmatpush.msra.mxu0 %v479
    %2440 = vmatpush.msra.mxu0 %v475
    %2441 = vmatpush.msra.mxu0 %v471
    %2442 = vmatpush.msra.mxu0 %v467
    %2443 = vmatpush.msra.mxu0 %v463
    %2444 = vmatpush.msra.mxu0 %v459
    %2445 = vmatpush.msra.mxu0 %v455
    %2446 = vmatpush.msra.mxu0 %v451
    %2447 = vmatpush.msra.mxu0 %v447
    %2448 = vmatpush.msra.mxu0 %v443
    %2449 = vmatpush.msra.mxu0 %v439
    %2450 = vmatmul.f32.gmra.mxu0 %v2373
    %v2451 = vpop.f32.mrf.mxu0
    %v2452 = vadd.f32 0.0, %v2451
    %2453 = vdwg.mxu0
    %2454 = vmatpush.msra.mxu0 %v640
    %2455 = vmatpush.msra.mxu0 %v636
    %2456 = vmatpush.msra.mxu0 %v632
    %2457 = vmatpush.msra.mxu0 %v628
    %2458 = vmatpush.msra.mxu0 %v624
    %2459 = vmatpush.msra.mxu0 %v620
    %2460 = vmatpush.msra.mxu0 %v616
    %2461 = vmatpush.msra.mxu0 %v612
    %2462 = vmatpush.msra.mxu0 %v608
    %2463 = vmatpush.msra.mxu0 %v604
    %2464 = vmatpush.msra.mxu0 %v600
    %2465 = vmatpush.msra.mxu0 %v596
    %2466 = vmatpush.msra.mxu0 %v592
    %2467 = vmatpush.msra.mxu0 %v588
    %2468 = vmatpush.msra.mxu0 %v584
    %2469 = vmatpush.msra.mxu0 %v580
    %2470 = vmatmul.f32.gmra.mxu0 %v2271
    %v2471 = vpop.f32.mrf.mxu0
    %v2472 = vadd.f32 0.0, %v2471
    %2473 = vdwg.mxu0
    %2474 = vmatpush.msra.mxu0 %v641
    %2475 = vmatpush.msra.mxu0 %v637
    %2476 = vmatpush.msra.mxu0 %v633
    %2477 = vmatpush.msra.mxu0 %v629
    %2478 = vmatpush.msra.mxu0 %v625
    %2479 = vmatpush.msra.mxu0 %v621
    %2480 = vmatpush.msra.mxu0 %v617
    %2481 = vmatpush.msra.mxu0 %v613
    %2482 = vmatpush.msra.mxu0 %v609
    %2483 = vmatpush.msra.mxu0 %v605
    %2484 = vmatpush.msra.mxu0 %v601
    %2485 = vmatpush.msra.mxu0 %v597
    %2486 = vmatpush.msra.mxu0 %v593
    %2487 = vmatpush.msra.mxu0 %v589
    %2488 = vmatpush.msra.mxu0 %v585
    %2489 = vmatpush.msra.mxu0 %v581
    %2490 = vmatmul.f32.gmra.mxu0 %v2271
    %v2491 = vpop.f32.mrf.mxu0
    %v2492 = vadd.f32 0.0, %v2491
    %2493 = vdwg.mxu0
    %2494 = vmatpush.msra.mxu0 %v642
    %2495 = vmatpush.msra.mxu0 %v638
    %2496 = vmatpush.msra.mxu0 %v634
    %2497 = vmatpush.msra.mxu0 %v630
    %2498 = vmatpush.msra.mxu0 %v626
    %2499 = vmatpush.msra.mxu0 %v622
    %2500 = vmatpush.msra.mxu0 %v618
    %2501 = vmatpush.msra.mxu0 %v614
    %2502 = vmatpush.msra.mxu0 %v610
    %2503 = vmatpush.msra.mxu0 %v606
    %2504 = vmatpush.msra.mxu0 %v602
    %2505 = vmatpush.msra.mxu0 %v598
    %2506 = vmatpush.msra.mxu0 %v594
    %2507 = vmatpush.msra.mxu0 %v590
    %2508 = vmatpush.msra.mxu0 %v586
    %2509 = vmatpush.msra.mxu0 %v582
    %2510 = vmatmul.f32.gmra.mxu0 %v2271
    %v2511 = vpop.f32.mrf.mxu0
    %v2512 = vadd.f32 0.0, %v2511
    %2513 = vdwg.mxu0
    %2514 = vmatpush.msra.mxu0 %v643
    %2515 = vmatpush.msra.mxu0 %v639
    %2516 = vmatpush.msra.mxu0 %v635
    %2517 = vmatpush.msra.mxu0 %v631
    %2518 = vmatpush.msra.mxu0 %v627
    %2519 = vmatpush.msra.mxu0 %v623
    %2520 = vmatpush.msra.mxu0 %v619
    %2521 = vmatpush.msra.mxu0 %v615
    %2522 = vmatpush.msra.mxu0 %v611
    %2523 = vmatpush.msra.mxu0 %v607
    %2524 = vmatpush.msra.mxu0 %v603
    %2525 = vmatpush.msra.mxu0 %v599
    %2526 = vmatpush.msra.mxu0 %v595
    %2527 = vmatpush.msra.mxu0 %v591
    %2528 = vmatpush.msra.mxu0 %v587
    %2529 = vmatpush.msra.mxu0 %v583
    %2530 = vmatmul.f32.gmra.mxu0 %v2271
    %v2531 = vpop.f32.mrf.mxu0
    %v2532 = vadd.f32 0.0, %v2531
    %2533 = vdwg.mxu0
    %s2534 = smul.u32 6, 4
    %s2535 = smul.addr %s2534, 8
    %s2536 = scalar_lea.vmem [#allocation2], %s2535
    %v2537 = vld [vmem:[%s2536] sm:$0xff]
    %v2538 = vld [vmem:[%s2536 + $0x8] sm:$0xff]
    %v2539 = vld [vmem:[%s2536 + $0x10] sm:$0xff]
    %v2540 = vld [vmem:[%s2536 + $0x18] sm:$0xff]
    %v2541 = vadd.f32 %v2537, %v2472
    %v2542 = vadd.f32 %v2538, %v2492
    %v2543 = vadd.f32 %v2539, %v2512
    %v2544 = vadd.f32 %v2540, %v2532
    %v2545 = vmul.f32 %v2541, 0.5
    %v2546 = vtanh.pop %v2545
    %v2547 = vmul.f32 %v2546, 0.5
    %v2548 = vadd.f32 %v2547, 0.5
    %v2549 = vmul.f32 %v2542, 0.5
    %v2550 = vtanh.pop %v2549
    %v2551 = vmul.f32 %v2550, 0.5
    %v2552 = vadd.f32 %v2551, 0.5
    %v2553 = vtanh.pop %v2543
    %v2554 = vmul.f32 %v2544, 0.5
    %v2555 = vtanh.pop %v2554
    %v2556 = vmul.f32 %v2555, 0.5
    %v2557 = vadd.f32 %v2556, 0.5
    %v2558 = vmul.f32 %v2552, %v2269
    %v2559 = vmul.f32 %v2548, %v2553
    %v2560 = vadd.f32 %v2558, %v2559
    %v2561 = vtanh.pop %v2560
    %v2562 = vmul.f32 %v2557, %v2561
    %2563 = vmatpush.msra.mxu0 %v813
    %2564 = vmatpush.msra.mxu0 %v809
    %2565 = vmatpush.msra.mxu0 %v805
    %2566 = vmatpush.msra.mxu0 %v801
    %2567 = vmatpush.msra.mxu0 %v797
    %2568 = vmatpush.msra.mxu0 %v793
    %2569 = vmatpush.msra.mxu0 %v789
    %2570 = vmatpush.msra.mxu0 %v785
    %2571 = vmatpush.msra.mxu0 %v781
    %2572 = vmatpush.msra.mxu0 %v777
    %2573 = vmatpush.msra.mxu0 %v773
    %2574 = vmatpush.msra.mxu0 %v769
    %2575 = vmatpush.msra.mxu0 %v765
    %2576 = vmatpush.msra.mxu0 %v761
    %2577 = vmatpush.msra.mxu0 %v757
    %2578 = vmatpush.msra.mxu0 %v753
    %2579 = vmatmul.f32.gmra.mxu0 %v2562
    %v2580 = vpop.f32.mrf.mxu0
    %v2581 = vadd.f32 %v2392, %v2580
    %2582 = vdwg.mxu0
    %2583 = vmatpush.msra.mxu0 %v814
    %2584 = vmatpush.msra.mxu0 %v810
    %2585 = vmatpush.msra.mxu0 %v806
    %2586 = vmatpush.msra.mxu0 %v802
    %2587 = vmatpush.msra.mxu0 %v798
    %2588 = vmatpush.msra.mxu0 %v794
    %2589 = vmatpush.msra.mxu0 %v790
    %2590 = vmatpush.msra.mxu0 %v786
    %2591 = vmatpush.msra.mxu0 %v782
    %2592 = vmatpush.msra.mxu0 %v778
    %2593 = vmatpush.msra.mxu0 %v774
    %2594 = vmatpush.msra.mxu0 %v770
    %2595 = vmatpush.msra.mxu0 %v766
    %2596 = vmatpush.msra.mxu0 %v762
    %2597 = vmatpush.msra.mxu0 %v758
    %2598 = vmatpush.msra.mxu0 %v754
    %2599 = vmatmul.f32.gmra.mxu0 %v2562
    %v2600 = vpop.f32.mrf.mxu0
    %v2601 = vadd.f32 %v2412, %v2600
    %2602 = vdwg.mxu0
    %2603 = vmatpush.msra.mxu0 %v815
    %2604 = vmatpush.msra.mxu0 %v811
    %2605 = vmatpush.msra.mxu0 %v807
    %2606 = vmatpush.msra.mxu0 %v803
    %2607 = vmatpush.msra.mxu0 %v799
    %2608 = vmatpush.msra.mxu0 %v795
    %2609 = vmatpush.msra.mxu0 %v791
    %2610 = vmatpush.msra.mxu0 %v787
    %2611 = vmatpush.msra.mxu0 %v783
    %2612 = vmatpush.msra.mxu0 %v779
    %2613 = vmatpush.msra.mxu0 %v775
    %2614 = vmatpush.msra.mxu0 %v771
    %2615 = vmatpush.msra.mxu0 %v767
    %2616 = vmatpush.msra.mxu0 %v763
    %2617 = vmatpush.msra.mxu0 %v759
    %2618 = vmatpush.msra.mxu0 %v755
    %2619 = vmatmul.f32.gmra.mxu0 %v2562
    %v2620 = vpop.f32.mrf.mxu0
    %v2621 = vadd.f32 %v2432, %v2620
    %2622 = vdwg.mxu0
    %2623 = vmatpush.msra.mxu0 %v816
    %2624 = vmatpush.msra.mxu0 %v812
    %2625 = vmatpush.msra.mxu0 %v808
    %2626 = vmatpush.msra.mxu0 %v804
    %2627 = vmatpush.msra.mxu0 %v800
    %2628 = vmatpush.msra.mxu0 %v796
    %2629 = vmatpush.msra.mxu0 %v792
    %2630 = vmatpush.msra.mxu0 %v788
    %2631 = vmatpush.msra.mxu0 %v784
    %2632 = vmatpush.msra.mxu0 %v780
    %2633 = vmatpush.msra.mxu0 %v776
    %2634 = vmatpush.msra.mxu0 %v772
    %2635 = vmatpush.msra.mxu0 %v768
    %2636 = vmatpush.msra.mxu0 %v764
    %2637 = vmatpush.msra.mxu0 %v760
    %2638 = vmatpush.msra.mxu0 %v756
    %2639 = vmatmul.f32.gmra.mxu0 %v2562
    %v2640 = vpop.f32.mrf.mxu0
    %v2641 = vadd.f32 %v2452, %v2640
    %2642 = vdwg.mxu0
    %v2643 = vadd.f32 %v2581, %v432
    %v2644 = vadd.f32 %v2601, %v433
    %v2645 = vadd.f32 %v2621, %v434
    %v2646 = vadd.f32 %v2641, %v435
    %v2647 = vmul.f32 %v2643, 0.5
    %v2648 = vtanh.pop %v2647
    %v2649 = vmul.f32 %v2648, 0.5
    %v2650 = vadd.f32 %v2649, 0.5
    %v2651 = vmul.f32 %v2644, 0.5
    %v2652 = vtanh.pop %v2651
    %v2653 = vmul.f32 %v2652, 0.5
    %v2654 = vadd.f32 %v2653, 0.5
    %v2655 = vtanh.pop %v2645
    %v2656 = vmul.f32 %v2646, 0.5
    %v2657 = vtanh.pop %v2656
    %v2658 = vmul.f32 %v2657, 0.5
    %v2659 = vadd.f32 %v2658, 0.5
    %v2660 = vmul.f32 %v2654, %v2371
    %v2661 = vmul.f32 %v2650, %v2655
    %v2662 = vadd.f32 %v2660, %v2661
    %v2663 = vtanh.pop %v2662
    %v2664 = vmul.f32 %v2659, %v2663
    %2665 = vmatpush.msra.mxu0 %v496
    %2666 = vmatpush.msra.mxu0 %v492
    %2667 = vmatpush.msra.mxu0 %v488
    %2668 = vmatpush.msra.mxu0 %v484
    %2669 = vmatpush.msra.mxu0 %v480
    %2670 = vmatpush.msra.mxu0 %v476
    %2671 = vmatpush.msra.mxu0 %v472
    %2672 = vmatpush.msra.mxu0 %v468
    %2673 = vmatpush.msra.mxu0 %v464
    %2674 = vmatpush.msra.mxu0 %v460
    %2675 = vmatpush.msra.mxu0 %v456
    %2676 = vmatpush.msra.mxu0 %v452
    %2677 = vmatpush.msra.mxu0 %v448
    %2678 = vmatpush.msra.mxu0 %v444
    %2679 = vmatpush.msra.mxu0 %v440
    %2680 = vmatpush.msra.mxu0 %v436
    %2681 = vmatmul.f32.gmra.mxu0 %v2664
    %v2682 = vpop.f32.mrf.mxu0
    %v2683 = vadd.f32 0.0, %v2682
    %2684 = vdwg.mxu0
    %2685 = vmatpush.msra.mxu0 %v497
    %2686 = vmatpush.msra.mxu0 %v493
    %2687 = vmatpush.msra.mxu0 %v489
    %2688 = vmatpush.msra.mxu0 %v485
    %2689 = vmatpush.msra.mxu0 %v481
    %2690 = vmatpush.msra.mxu0 %v477
    %2691 = vmatpush.msra.mxu0 %v473
    %2692 = vmatpush.msra.mxu0 %v469
    %2693 = vmatpush.msra.mxu0 %v465
    %2694 = vmatpush.msra.mxu0 %v461
    %2695 = vmatpush.msra.mxu0 %v457
    %2696 = vmatpush.msra.mxu0 %v453
    %2697 = vmatpush.msra.mxu0 %v449
    %2698 = vmatpush.msra.mxu0 %v445
    %2699 = vmatpush.msra.mxu0 %v441
    %2700 = vmatpush.msra.mxu0 %v437
    %2701 = vmatmul.f32.gmra.mxu0 %v2664
    %v2702 = vpop.f32.mrf.mxu0
    %v2703 = vadd.f32 0.0, %v2702
    %2704 = vdwg.mxu0
    %2705 = vmatpush.msra.mxu0 %v498
    %2706 = vmatpush.msra.mxu0 %v494
    %2707 = vmatpush.msra.mxu0 %v490
    %2708 = vmatpush.msra.mxu0 %v486
    %2709 = vmatpush.msra.mxu0 %v482
    %2710 = vmatpush.msra.mxu0 %v478
    %2711 = vmatpush.msra.mxu0 %v474
    %2712 = vmatpush.msra.mxu0 %v470
    %2713 = vmatpush.msra.mxu0 %v466
    %2714 = vmatpush.msra.mxu0 %v462
    %2715 = vmatpush.msra.mxu0 %v458
    %2716 = vmatpush.msra.mxu0 %v454
    %2717 = vmatpush.msra.mxu0 %v450
    %2718 = vmatpush.msra.mxu0 %v446
    %2719 = vmatpush.msra.mxu0 %v442
    %2720 = vmatpush.msra.mxu0 %v438
    %2721 = vmatmul.f32.gmra.mxu0 %v2664
    %v2722 = vpop.f32.mrf.mxu0
    %v2723 = vadd.f32 0.0, %v2722
    %2724 = vdwg.mxu0
    %2725 = vmatpush.msra.mxu0 %v499
    %2726 = vmatpush.msra.mxu0 %v495
    %2727 = vmatpush.msra.mxu0 %v491
    %2728 = vmatpush.msra.mxu0 %v487
    %2729 = vmatpush.msra.mxu0 %v483
    %2730 = vmatpush.msra.mxu0 %v479
    %2731 = vmatpush.msra.mxu0 %v475
    %2732 = vmatpush.msra.mxu0 %v471
    %2733 = vmatpush.msra.mxu0 %v467
    %2734 = vmatpush.msra.mxu0 %v463
    %2735 = vmatpush.msra.mxu0 %v459
    %2736 = vmatpush.msra.mxu0 %v455
    %2737 = vmatpush.msra.mxu0 %v451
    %2738 = vmatpush.msra.mxu0 %v447
    %2739 = vmatpush.msra.mxu0 %v443
    %2740 = vmatpush.msra.mxu0 %v439
    %2741 = vmatmul.f32.gmra.mxu0 %v2664
    %v2742 = vpop.f32.mrf.mxu0
    %v2743 = vadd.f32 0.0, %v2742
    %2744 = vdwg.mxu0
    %2745 = vmatpush.msra.mxu0 %v640
    %2746 = vmatpush.msra.mxu0 %v636
    %2747 = vmatpush.msra.mxu0 %v632
    %2748 = vmatpush.msra.mxu0 %v628
    %2749 = vmatpush.msra.mxu0 %v624
    %2750 = vmatpush.msra.mxu0 %v620
    %2751 = vmatpush.msra.mxu0 %v616
    %2752 = vmatpush.msra.mxu0 %v612
    %2753 = vmatpush.msra.mxu0 %v608
    %2754 = vmatpush.msra.mxu0 %v604
    %2755 = vmatpush.msra.mxu0 %v600
    %2756 = vmatpush.msra.mxu0 %v596
    %2757 = vmatpush.msra.mxu0 %v592
    %2758 = vmatpush.msra.mxu0 %v588
    %2759 = vmatpush.msra.mxu0 %v584
    %2760 = vmatpush.msra.mxu0 %v580
    %2761 = vmatmul.f32.gmra.mxu0 %v2562
    %v2762 = vpop.f32.mrf.mxu0
    %v2763 = vadd.f32 0.0, %v2762
    %2764 = vdwg.mxu0
    %2765 = vmatpush.msra.mxu0 %v641
    %2766 = vmatpush.msra.mxu0 %v637
    %2767 = vmatpush.msra.mxu0 %v633
    %2768 = vmatpush.msra.mxu0 %v629
    %2769 = vmatpush.msra.mxu0 %v625
    %2770 = vmatpush.msra.mxu0 %v621
    %2771 = vmatpush.msra.mxu0 %v617
    %2772 = vmatpush.msra.mxu0 %v613
    %2773 = vmatpush.msra.mxu0 %v609
    %2774 = vmatpush.msra.mxu0 %v605
    %2775 = vmatpush.msra.mxu0 %v601
    %2776 = vmatpush.msra.mxu0 %v597
    %2777 = vmatpush.msra.mxu0 %v593
    %2778 = vmatpush.msra.mxu0 %v589
    %2779 = vmatpush.msra.mxu0 %v585
    %2780 = vmatpush.msra.mxu0 %v581
    %2781 = vmatmul.f32.gmra.mxu0 %v2562
    %v2782 = vpop.f32.mrf.mxu0
    %v2783 = vadd.f32 0.0, %v2782
    %2784 = vdwg.mxu0
    %2785 = vmatpush.msra.mxu0 %v642
    %2786 = vmatpush.msra.mxu0 %v638
    %2787 = vmatpush.msra.mxu0 %v634
    %2788 = vmatpush.msra.mxu0 %v630
    %2789 = vmatpush.msra.mxu0 %v626
    %2790 = vmatpush.msra.mxu0 %v622
    %2791 = vmatpush.msra.mxu0 %v618
    %2792 = vmatpush.msra.mxu0 %v614
    %2793 = vmatpush.msra.mxu0 %v610
    %2794 = vmatpush.msra.mxu0 %v606
    %2795 = vmatpush.msra.mxu0 %v602
    %2796 = vmatpush.msra.mxu0 %v598
    %2797 = vmatpush.msra.mxu0 %v594
    %2798 = vmatpush.msra.mxu0 %v590
    %2799 = vmatpush.msra.mxu0 %v586
    %2800 = vmatpush.msra.mxu0 %v582
    %2801 = vmatmul.f32.gmra.mxu0 %v2562
    %v2802 = vpop.f32.mrf.mxu0
    %v2803 = vadd.f32 0.0, %v2802
    %2804 = vdwg.mxu0
    %2805 = vmatpush.msra.mxu0 %v643
    %2806 = vmatpush.msra.mxu0 %v639
    %2807 = vmatpush.msra.mxu0 %v635
    %2808 = vmatpush.msra.mxu0 %v631
    %2809 = vmatpush.msra.mxu0 %v627
    %2810 = vmatpush.msra.mxu0 %v623
    %2811 = vmatpush.msra.mxu0 %v619
    %2812 = vmatpush.msra.mxu0 %v615
    %2813 = vmatpush.msra.mxu0 %v611
    %2814 = vmatpush.msra.mxu0 %v607
    %2815 = vmatpush.msra.mxu0 %v603
    %2816 = vmatpush.msra.mxu0 %v599
    %2817 = vmatpush.msra.mxu0 %v595
    %2818 = vmatpush.msra.mxu0 %v591
    %2819 = vmatpush.msra.mxu0 %v587
    %2820 = vmatpush.msra.mxu0 %v583
    %2821 = vmatmul.f32.gmra.mxu0 %v2562
    %v2822 = vpop.f32.mrf.mxu0
    %v2823 = vadd.f32 0.0, %v2822
    %2824 = vdwg.mxu0
    %s2825 = smul.u32 7, 4
    %s2826 = smul.addr %s2825, 8
    %s2827 = scalar_lea.vmem [#allocation2], %s2826
    %v2828 = vld [vmem:[%s2827] sm:$0xff]
    %v2829 = vld [vmem:[%s2827 + $0x8] sm:$0xff]
    %v2830 = vld [vmem:[%s2827 + $0x10] sm:$0xff]
    %v2831 = vld [vmem:[%s2827 + $0x18] sm:$0xff]
    %v2832 = vadd.f32 %v2828, %v2763
    %v2833 = vadd.f32 %v2829, %v2783
    %v2834 = vadd.f32 %v2830, %v2803
    %v2835 = vadd.f32 %v2831, %v2823
    %v2836 = vmul.f32 %v2832, 0.5
    %v2837 = vtanh.pop %v2836
    %v2838 = vmul.f32 %v2837, 0.5
    %v2839 = vadd.f32 %v2838, 0.5
    %v2840 = vmul.f32 %v2833, 0.5
    %v2841 = vtanh.pop %v2840
    %v2842 = vmul.f32 %v2841, 0.5
    %v2843 = vadd.f32 %v2842, 0.5
    %v2844 = vtanh.pop %v2834
    %v2845 = vmul.f32 %v2835, 0.5
    %v2846 = vtanh.pop %v2845
    %v2847 = vmul.f32 %v2846, 0.5
    %v2848 = vadd.f32 %v2847, 0.5
    %v2849 = vmul.f32 %v2843, %v2560
    %v2850 = vmul.f32 %v2839, %v2844
    %v2851 = vadd.f32 %v2849, %v2850
    %v2852 = vtanh.pop %v2851
    %v2853 = vmul.f32 %v2848, %v2852
    %2854 = vmatpush.msra.mxu0 %v813
    %2855 = vmatpush.msra.mxu0 %v809
    %2856 = vmatpush.msra.mxu0 %v805
    %2857 = vmatpush.msra.mxu0 %v801
    %2858 = vmatpush.msra.mxu0 %v797
    %2859 = vmatpush.msra.mxu0 %v793
    %2860 = vmatpush.msra.mxu0 %v789
    %2861 = vmatpush.msra.mxu0 %v785
    %2862 = vmatpush.msra.mxu0 %v781
    %2863 = vmatpush.msra.mxu0 %v777
    %2864 = vmatpush.msra.mxu0 %v773
    %2865 = vmatpush.msra.mxu0 %v769
    %2866 = vmatpush.msra.mxu0 %v765
    %2867 = vmatpush.msra.mxu0 %v761
    %2868 = vmatpush.msra.mxu0 %v757
    %2869 = vmatpush.msra.mxu0 %v753
    %2870 = vmatmul.f32.gmra.mxu0 %v2853
    %v2871 = vpop.f32.mrf.mxu0
    %v2872 = vadd.f32 %v2683, %v2871
    %2873 = vdwg.mxu0
    %2874 = vmatpush.msra.mxu0 %v814
    %2875 = vmatpush.msra.mxu0 %v810
    %2876 = vmatpush.msra.mxu0 %v806
    %2877 = vmatpush.msra.mxu0 %v802
    %2878 = vmatpush.msra.mxu0 %v798
    %2879 = vmatpush.msra.mxu0 %v794
    %2880 = vmatpush.msra.mxu0 %v790
    %2881 = vmatpush.msra.mxu0 %v786
    %2882 = vmatpush.msra.mxu0 %v782
    %2883 = vmatpush.msra.mxu0 %v778
    %2884 = vmatpush.msra.mxu0 %v774
    %2885 = vmatpush.msra.mxu0 %v770
    %2886 = vmatpush.msra.mxu0 %v766
    %2887 = vmatpush.msra.mxu0 %v762
    %2888 = vmatpush.msra.mxu0 %v758
    %2889 = vmatpush.msra.mxu0 %v754
    %2890 = vmatmul.f32.gmra.mxu0 %v2853
    %v2891 = vpop.f32.mrf.mxu0
    %v2892 = vadd.f32 %v2703, %v2891
    %2893 = vdwg.mxu0
    %2894 = vmatpush.msra.mxu0 %v815
    %2895 = vmatpush.msra.mxu0 %v811
    %2896 = vmatpush.msra.mxu0 %v807
    %2897 = vmatpush.msra.mxu0 %v803
    %2898 = vmatpush.msra.mxu0 %v799
    %2899 = vmatpush.msra.mxu0 %v795
    %2900 = vmatpush.msra.mxu0 %v791
    %2901 = vmatpush.msra.mxu0 %v787
    %2902 = vmatpush.msra.mxu0 %v783
    %2903 = vmatpush.msra.mxu0 %v779
    %2904 = vmatpush.msra.mxu0 %v775
    %2905 = vmatpush.msra.mxu0 %v771
    %2906 = vmatpush.msra.mxu0 %v767
    %2907 = vmatpush.msra.mxu0 %v763
    %2908 = vmatpush.msra.mxu0 %v759
    %2909 = vmatpush.msra.mxu0 %v755
    %2910 = vmatmul.f32.gmra.mxu0 %v2853
    %v2911 = vpop.f32.mrf.mxu0
    %v2912 = vadd.f32 %v2723, %v2911
    %2913 = vdwg.mxu0
    %2914 = vmatpush.msra.mxu0 %v816
    %2915 = vmatpush.msra.mxu0 %v812
    %2916 = vmatpush.msra.mxu0 %v808
    %2917 = vmatpush.msra.mxu0 %v804
    %2918 = vmatpush.msra.mxu0 %v800
    %2919 = vmatpush.msra.mxu0 %v796
    %2920 = vmatpush.msra.mxu0 %v792
    %2921 = vmatpush.msra.mxu0 %v788
    %2922 = vmatpush.msra.mxu0 %v784
    %2923 = vmatpush.msra.mxu0 %v780
    %2924 = vmatpush.msra.mxu0 %v776
    %2925 = vmatpush.msra.mxu0 %v772
    %2926 = vmatpush.msra.mxu0 %v768
    %2927 = vmatpush.msra.mxu0 %v764
    %2928 = vmatpush.msra.mxu0 %v760
    %2929 = vmatpush.msra.mxu0 %v756
    %2930 = vmatmul.f32.gmra.mxu0 %v2853
    %v2931 = vpop.f32.mrf.mxu0
    %v2932 = vadd.f32 %v2743, %v2931
    %2933 = vdwg.mxu0
    %v2934 = vadd.f32 %v2872, %v432
    %v2935 = vadd.f32 %v2892, %v433
    %v2936 = vadd.f32 %v2912, %v434
    %v2937 = vadd.f32 %v2932, %v435
    %v2938 = vmul.f32 %v2934, 0.5
    %v2939 = vtanh.pop %v2938
    %v2940 = vmul.f32 %v2939, 0.5
    %v2941 = vadd.f32 %v2940, 0.5
    %v2942 = vmul.f32 %v2935, 0.5
    %v2943 = vtanh.pop %v2942
    %v2944 = vmul.f32 %v2943, 0.5
    %v2945 = vadd.f32 %v2944, 0.5
    %v2946 = vtanh.pop %v2936
    %v2947 = vmul.f32 %v2937, 0.5
    %v2948 = vtanh.pop %v2947
    %v2949 = vmul.f32 %v2948, 0.5
    %v2950 = vadd.f32 %v2949, 0.5
    %v2951 = vmul.f32 %v2945, %v2662
    %v2952 = vmul.f32 %v2941, %v2946
    %v2953 = vadd.f32 %v2951, %v2952
    %v2954 = vtanh.pop %v2953
    %v2955 = vmul.f32 %v2950, %v2954
    %v2956 = vld [vmem:[#allocation15] sm:$0xff]
    %v2957 = vld [vmem:[#allocation15 + $0x8] sm:$0xff]
    %v2958 = vld [vmem:[#allocation15 + $0x10] sm:$0xff]
    %v2959 = vld [vmem:[#allocation15 + $0x18] sm:$0xff]
    %v2960 = vld [vmem:[#allocation15 + $0x20] sm:$0xff]
    %v2961 = vld [vmem:[#allocation15 + $0x28] sm:$0xff]
    %v2962 = vld [vmem:[#allocation15 + $0x30] sm:$0xff]
    %v2963 = vld [vmem:[#allocation15 + $0x38] sm:$0xff]
    %v2964 = vld [vmem:[#allocation15 + $0x40] sm:$0xff]
    %v2965 = vld [vmem:[#allocation15 + $0x48] sm:$0xff]
    %v2966 = vld [vmem:[#allocation15 + $0x50] sm:$0xff]
    %v2967 = vld [vmem:[#allocation15 + $0x58] sm:$0xff]
    %v2968 = vld [vmem:[#allocation15 + $0x60] sm:$0xff]
    %v2969 = vld [vmem:[#allocation15 + $0x68] sm:$0xff]
    %v2970 = vld [vmem:[#allocation15 + $0x70] sm:$0xff]
    %v2971 = vld [vmem:[#allocation15 + $0x78] sm:$0xff]
    %v2972 = vld [vmem:[%s8] sm:$0x1]
    %v2974 = vperm.slane %v2972, 0
    %2976 = vmatpush.msra.mxu0 %v2971
    %2977 = vmatpush.msra.mxu0 %v2970
    %2978 = vmatpush.msra.mxu0 %v2969
    %2979 = vmatpush.msra.mxu0 %v2968
    %2980 = vmatpush.msra.mxu0 %v2967
    %2981 = vmatpush.msra.mxu0 %v2966
    %2982 = vmatpush.msra.mxu0 %v2965
    %2983 = vmatpush.msra.mxu0 %v2964
    %2984 = vmatpush.msra.mxu0 %v2963
    %2985 = vmatpush.msra.mxu0 %v2962
    %2986 = vmatpush.msra.mxu0 %v2961
    %2987 = vmatpush.msra.mxu0 %v2960
    %2988 = vmatpush.msra.mxu0 %v2959
    %2989 = vmatpush.msra.mxu0 %v2958
    %2990 = vmatpush.msra.mxu0 %v2957
    %2991 = vmatpush.msra.mxu0 %v2956
    %2992 = vmatmul.f32.gmra.mxu0 %v2955
    %v2993 = vpop.f32.mrf.mxu0
    %v2994 = vadd.f32 %v2974, %v2993
    %2995 = vdwg.mxu0
    %2996 = vst [vmem:[#allocation17] sm:$0xff] %v2994
    // Predicated region
    $region70: #{tpu_custom_call.1} parent=1 // pred_check
      _
    $region71: #{tpu_custom_call.1} parent=1 // pred_check_branch
      %2998 = sbr.rel (0) target = $region73
    $region72: #{tpu_custom_call.1} parent=1 // pred_region
      %3000 = vsyncadd [#allocation5], 0
      %s3002 = sshll.u32 [#allocation17], 4
      %s3003 = int_to_ptr.vmem [resolvable:$true] %s3002
      %s3004 = sshll.u32 %s9, 4
      %s3005 = int_to_ptr.hbm [resolvable:$true] %s3004
      %3007 = dma.vmem_to_hbm [thread:$0]  %s3003, 128, %s3005, [#allocation5]
    $region73: #{tpu_custom_call.1} parent=1 // pred_fallthru
      _
    // Predicated region
    $region74: #{tpu_custom_call.1} parent=1 // pred_check
      _
    $region75: #{tpu_custom_call.1} parent=1 // pred_check_branch
      %3009 = sbr.rel (0) target = $region77
    $region76: #{tpu_custom_call.1} parent=1 // pred_region
      %3011 = dma.done [#allocation5], 128
    $region77: #{tpu_custom_call.1} parent=1 // pred_fallthru
      _
    %3012 = vsyncpa [#allocation4], 1
    %3013 = vsyncpa [#allocation7], 1
    %3014 = vsyncpa [#allocation10], 1
    %3015 = vsyncpa [#allocation13], 1
    %3016 = vsyncpa [#allocation16], 1
    %3017 = vsyncpa [#allocation5], 1

</llo_original>
